<compile_context>
chip_gen: v7x
topology: tpu7x:2x2x1
jax: 0.10.0
libtpu: 0.0.40
codegen_flags: <defaults>
</compile_context>

<pallas_src>
import functools

import jax
import jax.numpy as jnp
from jax.experimental import pallas as pl
from jax.experimental.pallas import tpu as pltpu

EPS = 1e-10
_N_BRANCH = 3  # forward / backward / adaptive diffusion branches


# ---------------------------------------------------------------------------
# Fused kernel: adaptive-adjacency softmax (unnormalized) + K-hop diffusion
# propagation + one fused weight contraction + bias + relu.  Single program,
# no grid (whole problem fits VMEM comfortably on every TPU generation).
# ---------------------------------------------------------------------------
def _dlgnn_fused_kernel(adj_ref, adjt_ref, rinvf_ref, rinvb_ref,
                        e2_ref, e1t_ref, xt_ref, wcat_ref, bias_ref,
                        out_ref, xcat_ref, *, K, BF, PAD):
    # Zero the packed-activation scratch once so the sublane-alignment padding
    # rows multiply the zero columns of W_cat as finite zeros (scratch VMEM is
    # otherwise uninitialized).
    xcat_ref[...] = jnp.zeros_like(xcat_ref)

    adj = adj_ref[...]        # (N, N)
    adjt = adjt_ref[...]      # (N, N) = adj^T
    rinv_f = rinvf_ref[...]   # (1, N)  precomputed 1/(rowsum(adj)+eps)
    rinv_b = rinvb_ref[...]   # (1, N)  precomputed 1/(colsum(adj)+eps)

    # Adaptive adjacency, transposed and UNNORMALIZED:
    #   A_adp^T = column-softmax of relu(E2 @ E1^T)
    # Only the exp'ed numerator (ex) and the per-column reciprocal are kept;
    # the normalized (N,N) matrix is never built (scaling commutes below).
    mt = jnp.maximum(
        jnp.dot(e2_ref[...], e1t_ref[...], preferred_element_type=jnp.float32),
        0.0)                                                     # (N, N)
    ex = jnp.exp(mt - jnp.max(mt, axis=0, keepdims=True))        # (N, N)
    rinv_a = 1.0 / jnp.sum(ex, axis=0, keepdims=True)            # (1, N) exact

    xt = xt_ref[...]                                             # (BF, N)
    xf = xt
    xb = xt
    xa = xt
    for k in range(K + 1):                                       # static unroll
        base = _N_BRANCH * k * PAD
        xcat_ref[pl.ds(base + 0 * PAD, BF), :] = xf
        xcat_ref[pl.ds(base + 1 * PAD, BF), :] = xb
        xcat_ref[pl.ds(base + 2 * PAD, BF), :] = xa
        if k < K:
            # Propagate against the raw (transposed) adjacency / ex and
            # post-scale the small (BF, N) result -> normalized P^T matrices
            # are never materialized.
            xf = jnp.dot(xf, adjt, preferred_element_type=jnp.float32) * rinv_f
            xb = jnp.dot(xb, adj, preferred_element_type=jnp.float32) * rinv_b
            xa = jnp.dot(xa, ex, preferred_element_type=jnp.float32) * rinv_a

    # One deep contraction applies all 3*(K+1) weight blocks at once.
    acc = jnp.dot(wcat_ref[...], xcat_ref[...],
                  preferred_element_type=jnp.float32)            # (B*O, N)
    out_ref[...] = jnp.maximum(acc + bias_ref[...], 0.0)


# ---------------------------------------------------------------------------
# One-time prep (hoisted out of the per-call / per-timestep path).
# Everything here depends only on the adjacency buffer and the parameters.
# ---------------------------------------------------------------------------
def _block_diag_wT(w, batch):
    """w: (F, O) -> block-diagonal of w.T over the batch: (batch*O, batch*F)."""
    f, o = w.shape
    eye = jnp.eye(batch, dtype=w.dtype)
    return jnp.einsum("bc,fo->bocf", eye, w).reshape(batch * o, batch * f)


def prepare_dlgnn(adj, params, *, batch_size, num_gru_units, output_dim, K):
    B = batch_size
    F = num_gru_units + 1
    O = output_dim
    BF = B * F
    PAD = -(-BF // 8) * 8  # round up to a sublane multiple

    adj = adj.astype(jnp.float32)
    adjt = adj.T
    # P_f^T / P_b^T column normalizers (exact reciprocals, computed once).
    rinv_f = 1.0 / (jnp.sum(adjt, axis=0, keepdims=True) + EPS)   # (1, N)
    rinv_b = 1.0 / (jnp.sum(adj, axis=0, keepdims=True) + EPS)    # (1, N)

    def pad_cols(m):
        return jnp.pad(m, ((0, 0), (0, PAD - m.shape[1])))

    blocks = []
    for k in range(K + 1):
        blocks.append(pad_cols(
            _block_diag_wT(params["weights_f"][k].astype(jnp.float32), B)))
        blocks.append(pad_cols(
            _block_diag_wT(params["weights_b"][k].astype(jnp.float32), B)))
        blocks.append(pad_cols(
            _block_diag_wT(params["weights_adp"].astype(jnp.float32), B)))
    wcat = jnp.concatenate(blocks, axis=1)         # (B*O, 3*(K+1)*PAD)

    bias = jnp.tile(params["biases"].astype(jnp.float32), B).reshape(B * O, 1)

    return {
        "adj": adj, "adjt": adjt,
        "rinv_f": rinv_f, "rinv_b": rinv_b,
        "e2": params["E2"].astype(jnp.float32),
        "e1t": params["E1"].astype(jnp.float32).T,
        "wcat": wcat, "bias": bias,
        "PAD": PAD,
    }


# ---------------------------------------------------------------------------
# Per-call wrapper (only input-dependent layout plumbing + the kernel launch).
# ---------------------------------------------------------------------------
def dlgnn_graph_convolution(inputs, hidden_state, prepared, *,
                            num_gru_units, output_dim, K):
    B, N = inputs.shape
    F = num_gru_units + 1
    O = output_dim
    BF = B * F
    PAD = prepared["PAD"]
    rows = _N_BRANCH * (K + 1) * PAD

    conc = jnp.concatenate(
        [inputs[..., None], hidden_state.reshape(B, N, num_gru_units)],
        axis=2).astype(jnp.float32)                              # (B, N, F)
    xt = jnp.transpose(conc, (0, 2, 1)).reshape(BF, N)           # (B*F, N)

    flops = int(2 * _N_BRANCH * K * BF * N * N          # propagation dots
                + 2 * N * prepared["e2"].shape[1] * N   # E2 @ E1^T
                + 2 * (B * O) * rows * N)               # fused weight dot
    bytes_accessed = int(4 * (2 * N * N + 2 * N * prepared["e2"].shape[1]
                              + BF * N + (B * O) * rows + B * O * N))

    kernel = functools.partial(_dlgnn_fused_kernel, K=K, BF=BF, PAD=PAD)
    out_t = pl.pallas_call(
        kernel,
        out_shape=jax.ShapeDtypeStruct((B * O, N), jnp.float32),
        scratch_shapes=[pltpu.VMEM((rows, N), jnp.float32)],
        compiler_params=pltpu.CompilerParams(
            vmem_limit_bytes=32 * 1024 * 1024),
        cost_estimate=pl.CostEstimate(
            flops=flops,
            transcendentals=N * N,
            bytes_accessed=bytes_accessed),
    )(prepared["adj"], prepared["adjt"], prepared["rinv_f"], prepared["rinv_b"],
      prepared["e2"], prepared["e1t"], xt, prepared["wcat"], prepared["bias"])

    out = jnp.transpose(out_t.reshape(B, O, N), (0, 2, 1))       # (B, N, O)
    return out.reshape(B, N * O)


# ---------------------------------------------------------------------------
# Pure-JAX reference (mirrors the torch forward exactly, incl. matrix_power).
# ---------------------------------------------------------------------------
def reference_forward(inputs, hidden_state, adj, params, *,
                      num_gru_units, output_dim, K):
    B, N = inputs.shape
    conc = jnp.concatenate(
        [inputs[..., None], hidden_state.reshape(B, N, num_gru_units)], axis=2)
    rowsum = adj.sum(axis=1)
    P_f = adj / (rowsum[:, None] + EPS)
    rowsum_t = adj.T.sum(axis=1)
    P_b = adj.T / (rowsum_t[:, None] + EPS)
    E = jnp.maximum(params["E1"] @ params["E2"].T, 0.0)
    A_adp = jax.nn.softmax(E, axis=1)
    out = jnp.zeros((B, N, output_dim), jnp.float32)
    for k in range(K + 1):
        Tf = jnp.linalg.matrix_power(P_f, k)
        Tb = jnp.linalg.matrix_power(P_b, k)
        Ta = jnp.linalg.matrix_power(A_adp, k)
        out += jnp.einsum("ij,bjf,fo->bio", Tf, conc, params["weights_f"][k])
        out += jnp.einsum("ij,bjf,fo->bio", Tb, conc, params["weights_b"][k])
        out += jnp.einsum("ij,bjf,fo->bio", Ta, conc, params["weights_adp"])
    out = jnp.maximum(out + params["biases"], 0.0)
    return out.reshape(B, N * output_dim)


def _xavier_uniform(key, shape):
    fan_in, fan_out = shape[-2], shape[-1]
    limit = (6.0 / (fan_in + fan_out)) ** 0.5
    return jax.random.uniform(key, shape, jnp.float32, -limit, limit)


if __name__ == "__main__":
    # Shapes consistent with the module (E1/E2 force num_nodes = 358).
    B = 2
    N = 358
    num_gru_units = 8
    output_dim = 4
    K = 2
    F = num_gru_units + 1

    root = jax.random.PRNGKey(0)
    keys = jax.random.split(root, 8)

    params = {
        "E1": _xavier_uniform(keys[0], (N, 10)),
        "E2": _xavier_uniform(keys[1], (N, 10)),
        "weights_f": _xavier_uniform(keys[2], (K + 1, F, output_dim)),
        "weights_b": _xavier_uniform(keys[3], (K + 1, F, output_dim)),
        "weights_adp": _xavier_uniform(keys[4], (F, output_dim)),
        "biases": jnp.zeros((output_dim,), jnp.float32),  # bias_init_value = 0.0
    }

    adj = jax.random.uniform(keys[5], (N, N), jnp.float32)      # non-negative adjacency
    inputs = jax.random.normal(keys[6], (B, N), jnp.float32)
    hidden_state = jax.random.normal(keys[7], (B, N * num_gru_units), jnp.float32)

    # One-time prep — would live outside the GRU time-step scan in real use.
    prepared = prepare_dlgnn(adj, params, batch_size=B,
                             num_gru_units=num_gru_units,
                             output_dim=output_dim, K=K)

    out = dlgnn_graph_convolution(
        inputs, hidden_state, prepared,
        num_gru_units=num_gru_units, output_dim=output_dim, K=K)
    out = jax.block_until_ready(out)

    ref = reference_forward(
        inputs, hidden_state, adj, params,
        num_gru_units=num_gru_units, output_dim=output_dim, K=K)
    ref = jax.block_until_ready(ref)

    assert out.shape == (B, N * output_dim), out.shape
    if not jnp.allclose(out, ref, atol=5e-2, rtol=2e-2):
        raise AssertionError("Pallas output does not match reference")

    print("KERNEL_OK")
</pallas_src>

<mosaic_0001>
module attributes {stable_mosaic.version = 11 : i64} {
  func.func @_dlgnn_fused_kernel(%arg0: memref<358x358xf32, #tpu.memory_space<vmem>>, %arg1: memref<358x358xf32, #tpu.memory_space<vmem>>, %arg2: memref<1x358xf32, #tpu.memory_space<vmem>>, %arg3: memref<1x358xf32, #tpu.memory_space<vmem>>, %arg4: memref<358x10xf32, #tpu.memory_space<vmem>>, %arg5: memref<10x358xf32, #tpu.memory_space<vmem>>, %arg6: memref<18x358xf32, #tpu.memory_space<vmem>>, %arg7: memref<8x216xf32, #tpu.memory_space<vmem>>, %arg8: memref<8x1xf32, #tpu.memory_space<vmem>>, %arg9: memref<8x358xf32, #tpu.memory_space<vmem>>, %arg10: memref<216x358xf32, #tpu.memory_space<vmem>>) attributes {dimension_semantics = [], scalar_prefetch = 0 : i64, scratch_operands = 1 : i64, tpu.core_type = #tpu.core_type<tc>} {
    %cst = arith.constant 0.000000e+00 : f32
    %0 = vector.broadcast %cst : f32 to vector<216x358xf32>
    %c0 = arith.constant 0 : index
    %c0_0 = arith.constant 0 : index
    %1 = vector.load %arg10[%c0, %c0_0] : memref<216x358xf32, #tpu.memory_space<vmem>>, vector<216x358xf32>
    tpu.vector_store %arg10[%c0, %c0_0], %0 {strides = array<i32>} : memref<216x358xf32, #tpu.memory_space<vmem>>, vector<216x358xf32>,
    %c0_1 = arith.constant 0 : index
    %c0_2 = arith.constant 0 : index
    %2 = vector.load %arg0[%c0_1, %c0_2] : memref<358x358xf32, #tpu.memory_space<vmem>>, vector<358x358xf32>
    %c0_3 = arith.constant 0 : index
    %c0_4 = arith.constant 0 : index
    %3 = vector.load %arg1[%c0_3, %c0_4] : memref<358x358xf32, #tpu.memory_space<vmem>>, vector<358x358xf32>
    %c0_5 = arith.constant 0 : index
    %c0_6 = arith.constant 0 : index
    %4 = vector.load %arg2[%c0_5, %c0_6] : memref<1x358xf32, #tpu.memory_space<vmem>>, vector<1x358xf32>
    %c0_7 = arith.constant 0 : index
    %c0_8 = arith.constant 0 : index
    %5 = vector.load %arg3[%c0_7, %c0_8] : memref<1x358xf32, #tpu.memory_space<vmem>>, vector<1x358xf32>
    %c0_9 = arith.constant 0 : index
    %c0_10 = arith.constant 0 : index
    %6 = vector.load %arg4[%c0_9, %c0_10] : memref<358x10xf32, #tpu.memory_space<vmem>>, vector<358x10xf32>
    %c0_11 = arith.constant 0 : index
    %c0_12 = arith.constant 0 : index
    %7 = vector.load %arg5[%c0_11, %c0_12] : memref<10x358xf32, #tpu.memory_space<vmem>>, vector<10x358xf32>
    %cst_13 = arith.constant dense<0.000000e+00> : vector<358x358xf32>
    %8 = tpu.matmul %6, %7, %cst_13 {dimension_numbers = #tpu.dot_dimension_numbers<[1], [0], [0], [1], [0, 0, 1, 1], [], []>} : vector<358x10xf32>, vector<10x358xf32>, vector<358x358xf32> -> vector<358x358xf32>
    %cst_14 = arith.constant 0.000000e+00 : f32
    %9 = vector.broadcast %cst_14 : f32 to vector<358x358xf32>
    %10 = arith.maximumf %8, %9 : vector<358x358xf32>
    %cst_15 = arith.constant dense<0xFF800000> : vector<358xf32>
    %11 = vector.multi_reduction <maximumf>, %10, %cst_15 [0] : vector<358x358xf32> to vector<358xf32>
    %12 = vector.shape_cast %11 : vector<358xf32> to vector<1x358xf32>
    %13 = vector.broadcast %12 : vector<1x358xf32> to vector<358x358xf32>
    %14 = arith.subf %10, %13 : vector<358x358xf32>
    %15 = math.exp %14 : vector<358x358xf32>
    %cst_16 = arith.constant dense<0.000000e+00> : vector<358xf32>
    %16 = vector.multi_reduction <add>, %15, %cst_16 [0] : vector<358x358xf32> to vector<358xf32>
    %17 = vector.shape_cast %16 : vector<358xf32> to vector<1x358xf32>
    %cst_17 = arith.constant 1.000000e+00 : f32
    %18 = vector.broadcast %cst_17 : f32 to vector<1x358xf32>
    %19 = arith.divf %18, %17 : vector<1x358xf32>
    %c0_18 = arith.constant 0 : index
    %c0_19 = arith.constant 0 : index
    %20 = vector.load %arg6[%c0_18, %c0_19] : memref<18x358xf32, #tpu.memory_space<vmem>>, vector<18x358xf32>
    %c0_20 = arith.constant 0 : index
    %c0_21 = arith.constant 0 : index
    %21 = vector.load %arg10[%c0_20, %c0_21] : memref<216x358xf32, #tpu.memory_space<vmem>>, vector<18x358xf32>
    tpu.vector_store %arg10[%c0_20, %c0_21], %20 {strides = array<i32>} : memref<216x358xf32, #tpu.memory_space<vmem>>, vector<18x358xf32>,
    %c24 = arith.constant 24 : index
    %c0_22 = arith.constant 0 : index
    %22 = vector.load %arg10[%c24, %c0_22] : memref<216x358xf32, #tpu.memory_space<vmem>>, vector<18x358xf32>
    tpu.vector_store %arg10[%c24, %c0_22], %20 {strides = array<i32>} : memref<216x358xf32, #tpu.memory_space<vmem>>, vector<18x358xf32>,
    %c48 = arith.constant 48 : index
    %c0_23 = arith.constant 0 : index
    %23 = vector.load %arg10[%c48, %c0_23] : memref<216x358xf32, #tpu.memory_space<vmem>>, vector<18x358xf32>
    tpu.vector_store %arg10[%c48, %c0_23], %20 {strides = array<i32>} : memref<216x358xf32, #tpu.memory_space<vmem>>, vector<18x358xf32>,
    %cst_24 = arith.constant dense<0.000000e+00> : vector<18x358xf32>
    %24 = tpu.matmul %20, %3, %cst_24 {dimension_numbers = #tpu.dot_dimension_numbers<[1], [0], [0], [1], [0, 0, 1, 1], [], []>} : vector<18x358xf32>, vector<358x358xf32>, vector<18x358xf32> -> vector<18x358xf32>
    %25 = vector.broadcast %4 : vector<1x358xf32> to vector<18x358xf32>
    %26 = arith.mulf %24, %25 : vector<18x358xf32>
    %cst_25 = arith.constant dense<0.000000e+00> : vector<18x358xf32>
    %27 = tpu.matmul %20, %2, %cst_25 {dimension_numbers = #tpu.dot_dimension_numbers<[1], [0], [0], [1], [0, 0, 1, 1], [], []>} : vector<18x358xf32>, vector<358x358xf32>, vector<18x358xf32> -> vector<18x358xf32>
    %28 = vector.broadcast %5 : vector<1x358xf32> to vector<18x358xf32>
    %29 = arith.mulf %27, %28 : vector<18x358xf32>
    %cst_26 = arith.constant dense<0.000000e+00> : vector<18x358xf32>
    %30 = tpu.matmul %20, %15, %cst_26 {dimension_numbers = #tpu.dot_dimension_numbers<[1], [0], [0], [1], [0, 0, 1, 1], [], []>} : vector<18x358xf32>, vector<358x358xf32>, vector<18x358xf32> -> vector<18x358xf32>
    %31 = vector.broadcast %19 : vector<1x358xf32> to vector<18x358xf32>
    %32 = arith.mulf %30, %31 : vector<18x358xf32>
    %c72 = arith.constant 72 : index
    %c0_27 = arith.constant 0 : index
    %33 = vector.load %arg10[%c72, %c0_27] : memref<216x358xf32, #tpu.memory_space<vmem>>, vector<18x358xf32>
    tpu.vector_store %arg10[%c72, %c0_27], %26 {strides = array<i32>} : memref<216x358xf32, #tpu.memory_space<vmem>>, vector<18x358xf32>,
    %c96 = arith.constant 96 : index
    %c0_28 = arith.constant 0 : index
    %34 = vector.load %arg10[%c96, %c0_28] : memref<216x358xf32, #tpu.memory_space<vmem>>, vector<18x358xf32>
    tpu.vector_store %arg10[%c96, %c0_28], %29 {strides = array<i32>} : memref<216x358xf32, #tpu.memory_space<vmem>>, vector<18x358xf32>,
    %c120 = arith.constant 120 : index
    %c0_29 = arith.constant 0 : index
    %35 = vector.load %arg10[%c120, %c0_29] : memref<216x358xf32, #tpu.memory_space<vmem>>, vector<18x358xf32>
    tpu.vector_store %arg10[%c120, %c0_29], %32 {strides = array<i32>} : memref<216x358xf32, #tpu.memory_space<vmem>>, vector<18x358xf32>,
    %cst_30 = arith.constant dense<0.000000e+00> : vector<18x358xf32>
    %36 = tpu.matmul %26, %3, %cst_30 {dimension_numbers = #tpu.dot_dimension_numbers<[1], [0], [0], [1], [0, 0, 1, 1], [], []>} : vector<18x358xf32>, vector<358x358xf32>, vector<18x358xf32> -> vector<18x358xf32>
    %37 = vector.broadcast %4 : vector<1x358xf32> to vector<18x358xf32>
    %38 = arith.mulf %36, %37 : vector<18x358xf32>
    %cst_31 = arith.constant dense<0.000000e+00> : vector<18x358xf32>
    %39 = tpu.matmul %29, %2, %cst_31 {dimension_numbers = #tpu.dot_dimension_numbers<[1], [0], [0], [1], [0, 0, 1, 1], [], []>} : vector<18x358xf32>, vector<358x358xf32>, vector<18x358xf32> -> vector<18x358xf32>
    %40 = vector.broadcast %5 : vector<1x358xf32> to vector<18x358xf32>
    %41 = arith.mulf %39, %40 : vector<18x358xf32>
    %cst_32 = arith.constant dense<0.000000e+00> : vector<18x358xf32>
    %42 = tpu.matmul %32, %15, %cst_32 {dimension_numbers = #tpu.dot_dimension_numbers<[1], [0], [0], [1], [0, 0, 1, 1], [], []>} : vector<18x358xf32>, vector<358x358xf32>, vector<18x358xf32> -> vector<18x358xf32>
    %43 = vector.broadcast %19 : vector<1x358xf32> to vector<18x358xf32>
    %44 = arith.mulf %42, %43 : vector<18x358xf32>
    %c144 = arith.constant 144 : index
    %c0_33 = arith.constant 0 : index
    %45 = vector.load %arg10[%c144, %c0_33] : memref<216x358xf32, #tpu.memory_space<vmem>>, vector<18x358xf32>
    tpu.vector_store %arg10[%c144, %c0_33], %38 {strides = array<i32>} : memref<216x358xf32, #tpu.memory_space<vmem>>, vector<18x358xf32>,
    %c168 = arith.constant 168 : index
    %c0_34 = arith.constant 0 : index
    %46 = vector.load %arg10[%c168, %c0_34] : memref<216x358xf32, #tpu.memory_space<vmem>>, vector<18x358xf32>
    tpu.vector_store %arg10[%c168, %c0_34], %41 {strides = array<i32>} : memref<216x358xf32, #tpu.memory_space<vmem>>, vector<18x358xf32>,
    %c192 = arith.constant 192 : index
    %c0_35 = arith.constant 0 : index
    %47 = vector.load %arg10[%c192, %c0_35] : memref<216x358xf32, #tpu.memory_space<vmem>>, vector<18x358xf32>
    tpu.vector_store %arg10[%c192, %c0_35], %44 {strides = array<i32>} : memref<216x358xf32, #tpu.memory_space<vmem>>, vector<18x358xf32>,
    %c0_36 = arith.constant 0 : index
    %c0_37 = arith.constant 0 : index
    %48 = vector.load %arg7[%c0_36, %c0_37] : memref<8x216xf32, #tpu.memory_space<vmem>>, vector<8x216xf32>
    %c0_38 = arith.constant 0 : index
    %c0_39 = arith.constant 0 : index
    %49 = vector.load %arg10[%c0_38, %c0_39] : memref<216x358xf32, #tpu.memory_space<vmem>>, vector<216x358xf32>
    %cst_40 = arith.constant dense<0.000000e+00> : vector<8x358xf32>
    %50 = tpu.matmul %48, %49, %cst_40 {dimension_numbers = #tpu.dot_dimension_numbers<[1], [0], [0], [1], [0, 0, 1, 1], [], []>} : vector<8x216xf32>, vector<216x358xf32>, vector<8x358xf32> -> vector<8x358xf32>
    %c0_41 = arith.constant 0 : index
    %c0_42 = arith.constant 0 : index
    %51 = vector.load %arg8[%c0_41, %c0_42] : memref<8x1xf32, #tpu.memory_space<vmem>>, vector<8x1xf32>
    %52 = vector.broadcast %51 : vector<8x1xf32> to vector<8x358xf32>
    %53 = arith.addf %50, %52 : vector<8x358xf32>
    %cst_43 = arith.constant 0.000000e+00 : f32
    %54 = vector.broadcast %cst_43 : f32 to vector<8x358xf32>
    %55 = arith.maximumf %53, %54 : vector<8x358xf32>
    %c0_44 = arith.constant 0 : index
    %c0_45 = arith.constant 0 : index
    %56 = vector.load %arg9[%c0_44, %c0_45] : memref<8x358xf32, #tpu.memory_space<vmem>>, vector<8x358xf32>
    tpu.vector_store %arg9[%c0_44, %c0_45], %55 {strides = array<i32>} : memref<8x358xf32, #tpu.memory_space<vmem>>, vector<8x358xf32>,
    return
  }
}

</mosaic_0001>

<llo_original>
// kernel: tpu_custom_call.1
$region0: #{tpu_custom_call.1}
  #allocation0 [shape = 'u32[]', space=smem, size = 0x4, offset = 0x4, fixed_abs, tag = 'smem constant byte address 0x4 - core index']
  #allocation1 [shape = 'u32[144,128]{1,0:T(1,128)}', space=vmem, size = 0x12000, scoped, tag = 'internal scratch']
  #allocation2 [shape = 'f32[216,358]{1,0:T(8,128)}', space=vmem, size = 0x51000, scoped, tag = 'scratch operand']
  %s0 = inlined_call_operand.hbm [shape: f32[358,358], index: 0, kind: input, shape index: {}]
  %s1 = inlined_call_operand.hbm [shape: f32[358,358], index: 1, kind: input, shape index: {}]
  %s2 = inlined_call_operand.vmem [shape: f32[1,358], index: 2, kind: input, shape index: {}]
  %s3 = inlined_call_operand.vmem [shape: f32[1,358], index: 3, kind: input, shape index: {}]
  %s4 = inlined_call_operand.vmem [shape: f32[358,10], index: 4, kind: input, shape index: {}]
  %s5 = inlined_call_operand.vmem [shape: f32[10,358], index: 5, kind: input, shape index: {}]
  %s6 = inlined_call_operand.vmem [shape: f32[18,358], index: 6, kind: input, shape index: {}]
  %s7 = inlined_call_operand.vmem [shape: f32[8,216], index: 7, kind: input, shape index: {}]
  %s8 = inlined_call_operand.vmem [shape: f32[8,1], index: 8, kind: input, shape index: {}]
  %s9 = inlined_call_operand.hbm [shape: f32[8,358], index: 9, kind: output, shape index: {}]
  %s10 = sld [smem:[#allocation0]]
  $region54: #{tpu_custom_call.1} parent=0
    _
  %s12 = ssub.s32 1, %s10
  %s13 = scalar_select 0, %s12, %s10
  $region1: #{tpu_custom_call.1} parent=0
    #allocation3 [shape = 'u8[552960]{0}', space=vmem, size = 0x87000, scoped, tag = 'input window, operand 0, single buffered']
    #allocation4 [shape = 's32[1]{0}', space=sflag, size = 0x4, scoped, tag = 'scoped memory for tpu_custom_call.1']
    #allocation5 [shape = 's32[1]{0}', space=sflag, size = 0x4, scoped, tag = 'scoped memory for tpu_custom_call.1']
    #allocation6 [shape = 'u8[552960]{0}', space=vmem, size = 0x87000, scoped, tag = 'input window, operand 1, single buffered']
    #allocation7 [shape = 's32[1]{0}', space=sflag, size = 0x4, scoped, tag = 'scoped memory for tpu_custom_call.1']
    #allocation8 [shape = 'u8[12288]{0}', space=vmem, size = 0x3000, scoped, tag = 'output window, operand 0, single buffered']
    %14 = vsyncpa [#allocation4], 0
    %15 = vsyncpa [#allocation7], 0
    %16 = vsyncpa [#allocation5], 0
    // Predicated region
    $region2: #{tpu_custom_call.1} parent=1 // pred_check
      _
    $region3: #{tpu_custom_call.1} parent=1 // pred_check_branch
      %18 = sbr.rel (0) target = $region5
    $region4: #{tpu_custom_call.1} parent=1 // pred_region
      %s20 = ssub.s32 17280, 17280
      %21 = vsyncadd [#allocation4], %s20
      %s22 = sshll.u32 [#allocation3], 4
      %s23 = int_to_ptr.vmem [resolvable:$true] %s22
      %28 = dma.hbm_to_vmem [thread:$0]  %s0, 17280, %s23, [#allocation4], 384, 384, 24
    $region5: #{tpu_custom_call.1} parent=1 // pred_fallthru
      _
    // Predicated region
    $region6: #{tpu_custom_call.1} parent=1 // pred_check
      _
    $region7: #{tpu_custom_call.1} parent=1 // pred_check_branch
      %30 = sbr.rel (0) target = $region9
    $region8: #{tpu_custom_call.1} parent=1 // pred_region
      %s32 = ssub.s32 17280, 17280
      %33 = vsyncadd [#allocation7], %s32
      %s34 = sshll.u32 [#allocation6], 4
      %s35 = int_to_ptr.vmem [resolvable:$true] %s34
      %40 = dma.hbm_to_vmem [thread:$0]  %s1, 17280, %s35, [#allocation7], 384, 384, 24
    $region9: #{tpu_custom_call.1} parent=1 // pred_fallthru
      _
    // Predicated region
    $region10: #{tpu_custom_call.1} parent=1 // pred_check
      _
    $region11: #{tpu_custom_call.1} parent=1 // pred_check_branch
      %42 = sbr.rel (0) target = $region13
    $region12: #{tpu_custom_call.1} parent=1 // pred_region
      _
    $region13: #{tpu_custom_call.1} parent=1 // pred_fallthru
      _
    // Predicated region
    $region14: #{tpu_custom_call.1} parent=1 // pred_check
      _
    $region15: #{tpu_custom_call.1} parent=1 // pred_check_branch
      %44 = sbr.rel (0) target = $region17
    $region16: #{tpu_custom_call.1} parent=1 // pred_region
      _
    $region17: #{tpu_custom_call.1} parent=1 // pred_fallthru
      _
    // Predicated region
    $region18: #{tpu_custom_call.1} parent=1 // pred_check
      _
    $region19: #{tpu_custom_call.1} parent=1 // pred_check_branch
      %46 = sbr.rel (0) target = $region21
    $region20: #{tpu_custom_call.1} parent=1 // pred_region
      _
    $region21: #{tpu_custom_call.1} parent=1 // pred_fallthru
      _
    // Predicated region
    $region22: #{tpu_custom_call.1} parent=1 // pred_check
      _
    $region23: #{tpu_custom_call.1} parent=1 // pred_check_branch
      %48 = sbr.rel (0) target = $region25
    $region24: #{tpu_custom_call.1} parent=1 // pred_region
      _
    $region25: #{tpu_custom_call.1} parent=1 // pred_fallthru
      _
    // Predicated region
    $region26: #{tpu_custom_call.1} parent=1 // pred_check
      _
    $region27: #{tpu_custom_call.1} parent=1 // pred_check_branch
      %50 = sbr.rel (0) target = $region29
    $region28: #{tpu_custom_call.1} parent=1 // pred_region
      _
    $region29: #{tpu_custom_call.1} parent=1 // pred_fallthru
      _
    // Predicated region
    $region30: #{tpu_custom_call.1} parent=1 // pred_check
      _
    $region31: #{tpu_custom_call.1} parent=1 // pred_check_branch
      %52 = sbr.rel (0) target = $region33
    $region32: #{tpu_custom_call.1} parent=1 // pred_region
      _
    $region33: #{tpu_custom_call.1} parent=1 // pred_fallthru
      _
    // Predicated region
    $region34: #{tpu_custom_call.1} parent=1 // pred_check
      _
    $region35: #{tpu_custom_call.1} parent=1 // pred_check_branch
      %54 = sbr.rel (0) target = $region37
    $region36: #{tpu_custom_call.1} parent=1 // pred_region
      _
    $region37: #{tpu_custom_call.1} parent=1 // pred_fallthru
      _
    // Predicated region
    $region38: #{tpu_custom_call.1} parent=1 // pred_check
      _
    $region39: #{tpu_custom_call.1} parent=1 // pred_check_branch
      %56 = sbr.rel (0) target = $region41
    $region40: #{tpu_custom_call.1} parent=1 // pred_region
      %57 = dma.done [#allocation4], 17280
    $region41: #{tpu_custom_call.1} parent=1 // pred_fallthru
      _
    // Predicated region
    $region42: #{tpu_custom_call.1} parent=1 // pred_check
      _
    $region43: #{tpu_custom_call.1} parent=1 // pred_check_branch
      %59 = sbr.rel (0) target = $region45
    $region44: #{tpu_custom_call.1} parent=1 // pred_region
      %60 = dma.done [#allocation7], 17280
    $region45: #{tpu_custom_call.1} parent=1 // pred_fallthru
      _
    %61 = vst [vmem:[#allocation2] sm:$0xff] 0.0
    %62 = vst [vmem:[#allocation2 + $0x8] sm:$0xff] 0.0
    %vm63 = vcmask 834560
    %64 = vst.msk [vmem:[#allocation2 + $0x10] sm:$0xff] %vm63, 0.0
    %65 = vst [vmem:[#allocation2 + $0x18] sm:$0xff] 0.0
    %66 = vst [vmem:[#allocation2 + $0x20] sm:$0xff] 0.0
    %67 = vst.msk [vmem:[#allocation2 + $0x28] sm:$0xff] %vm63, 0.0
    %68 = vst [vmem:[#allocation2 + $0x30] sm:$0xff] 0.0
    %69 = vst [vmem:[#allocation2 + $0x38] sm:$0xff] 0.0
    %70 = vst.msk [vmem:[#allocation2 + $0x40] sm:$0xff] %vm63, 0.0
    %71 = vst [vmem:[#allocation2 + $0x48] sm:$0xff] 0.0
    %72 = vst [vmem:[#allocation2 + $0x50] sm:$0xff] 0.0
    %73 = vst.msk [vmem:[#allocation2 + $0x58] sm:$0xff] %vm63, 0.0
    %74 = vst [vmem:[#allocation2 + $0x60] sm:$0xff] 0.0
    %75 = vst [vmem:[#allocation2 + $0x68] sm:$0xff] 0.0
    %76 = vst.msk [vmem:[#allocation2 + $0x70] sm:$0xff] %vm63, 0.0
    %77 = vst [vmem:[#allocation2 + $0x78] sm:$0xff] 0.0
    %78 = vst [vmem:[#allocation2 + $0x80] sm:$0xff] 0.0
    %79 = vst.msk [vmem:[#allocation2 + $0x88] sm:$0xff] %vm63, 0.0
    %80 = vst [vmem:[#allocation2 + $0x90] sm:$0xff] 0.0
    %81 = vst [vmem:[#allocation2 + $0x98] sm:$0xff] 0.0
    %82 = vst.msk [vmem:[#allocation2 + $0xa0] sm:$0xff] %vm63, 0.0
    %83 = vst [vmem:[#allocation2 + $0xa8] sm:$0xff] 0.0
    %84 = vst [vmem:[#allocation2 + $0xb0] sm:$0xff] 0.0
    %85 = vst.msk [vmem:[#allocation2 + $0xb8] sm:$0xff] %vm63, 0.0
    %86 = vst [vmem:[#allocation2 + $0xc0] sm:$0xff] 0.0
    %87 = vst [vmem:[#allocation2 + $0xc8] sm:$0xff] 0.0
    %88 = vst.msk [vmem:[#allocation2 + $0xd0] sm:$0xff] %vm63, 0.0
    %89 = vst [vmem:[#allocation2 + $0xd8] sm:$0xff] 0.0
    %90 = vst [vmem:[#allocation2 + $0xe0] sm:$0xff] 0.0
    %91 = vst.msk [vmem:[#allocation2 + $0xe8] sm:$0xff] %vm63, 0.0
    %92 = vst [vmem:[#allocation2 + $0xf0] sm:$0xff] 0.0
    %93 = vst [vmem:[#allocation2 + $0xf8] sm:$0xff] 0.0
    %94 = vst.msk [vmem:[#allocation2 + $0x100] sm:$0xff] %vm63, 0.0
    %95 = vst [vmem:[#allocation2 + $0x108] sm:$0xff] 0.0
    %96 = vst [vmem:[#allocation2 + $0x110] sm:$0xff] 0.0
    %97 = vst.msk [vmem:[#allocation2 + $0x118] sm:$0xff] %vm63, 0.0
    %98 = vst [vmem:[#allocation2 + $0x120] sm:$0xff] 0.0
    %99 = vst [vmem:[#allocation2 + $0x128] sm:$0xff] 0.0
    %100 = vst.msk [vmem:[#allocation2 + $0x130] sm:$0xff] %vm63, 0.0
    %101 = vst [vmem:[#allocation2 + $0x138] sm:$0xff] 0.0
    %102 = vst [vmem:[#allocation2 + $0x140] sm:$0xff] 0.0
    %103 = vst.msk [vmem:[#allocation2 + $0x148] sm:$0xff] %vm63, 0.0
    %104 = vst [vmem:[#allocation2 + $0x150] sm:$0xff] 0.0
    %105 = vst [vmem:[#allocation2 + $0x158] sm:$0xff] 0.0
    %106 = vst.msk [vmem:[#allocation2 + $0x160] sm:$0xff] %vm63, 0.0
    %107 = vst [vmem:[#allocation2 + $0x168] sm:$0xff] 0.0
    %108 = vst [vmem:[#allocation2 + $0x170] sm:$0xff] 0.0
    %109 = vst.msk [vmem:[#allocation2 + $0x178] sm:$0xff] %vm63, 0.0
    %110 = vst [vmem:[#allocation2 + $0x180] sm:$0xff] 0.0
    %111 = vst [vmem:[#allocation2 + $0x188] sm:$0xff] 0.0
    %112 = vst.msk [vmem:[#allocation2 + $0x190] sm:$0xff] %vm63, 0.0
    %113 = vst [vmem:[#allocation2 + $0x198] sm:$0xff] 0.0
    %114 = vst [vmem:[#allocation2 + $0x1a0] sm:$0xff] 0.0
    %115 = vst.msk [vmem:[#allocation2 + $0x1a8] sm:$0xff] %vm63, 0.0
    %116 = vst [vmem:[#allocation2 + $0x1b0] sm:$0xff] 0.0
    %117 = vst [vmem:[#allocation2 + $0x1b8] sm:$0xff] 0.0
    %118 = vst.msk [vmem:[#allocation2 + $0x1c0] sm:$0xff] %vm63, 0.0
    %119 = vst [vmem:[#allocation2 + $0x1c8] sm:$0xff] 0.0
    %120 = vst [vmem:[#allocation2 + $0x1d0] sm:$0xff] 0.0
    %121 = vst.msk [vmem:[#allocation2 + $0x1d8] sm:$0xff] %vm63, 0.0
    %122 = vst [vmem:[#allocation2 + $0x1e0] sm:$0xff] 0.0
    %123 = vst [vmem:[#allocation2 + $0x1e8] sm:$0xff] 0.0
    %124 = vst.msk [vmem:[#allocation2 + $0x1f0] sm:$0xff] %vm63, 0.0
    %125 = vst [vmem:[#allocation2 + $0x1f8] sm:$0xff] 0.0
    %126 = vst [vmem:[#allocation2 + $0x200] sm:$0xff] 0.0
    %127 = vst.msk [vmem:[#allocation2 + $0x208] sm:$0xff] %vm63, 0.0
    %128 = vst [vmem:[#allocation2 + $0x210] sm:$0xff] 0.0
    %129 = vst [vmem:[#allocation2 + $0x218] sm:$0xff] 0.0
    %130 = vst.msk [vmem:[#allocation2 + $0x220] sm:$0xff] %vm63, 0.0
    %131 = vst [vmem:[#allocation2 + $0x228] sm:$0xff] 0.0
    %132 = vst [vmem:[#allocation2 + $0x230] sm:$0xff] 0.0
    %133 = vst.msk [vmem:[#allocation2 + $0x238] sm:$0xff] %vm63, 0.0
    %134 = vst [vmem:[#allocation2 + $0x240] sm:$0xff] 0.0
    %135 = vst [vmem:[#allocation2 + $0x248] sm:$0xff] 0.0
    %136 = vst.msk [vmem:[#allocation2 + $0x250] sm:$0xff] %vm63, 0.0
    %137 = vst [vmem:[#allocation2 + $0x258] sm:$0xff] 0.0
    %138 = vst [vmem:[#allocation2 + $0x260] sm:$0xff] 0.0
    %139 = vst.msk [vmem:[#allocation2 + $0x268] sm:$0xff] %vm63, 0.0
    %140 = vst [vmem:[#allocation2 + $0x270] sm:$0xff] 0.0
    %141 = vst [vmem:[#allocation2 + $0x278] sm:$0xff] 0.0
    %142 = vst.msk [vmem:[#allocation2 + $0x280] sm:$0xff] %vm63, 0.0
    %v143 = vld [vmem:[#allocation3] sm:$0xff]
    %v144 = vld [vmem:[#allocation3 + $0x8] sm:$0xff]
    %v145 = vld [vmem:[#allocation3 + $0x10] sm:$0xff]
    %v146 = vld [vmem:[#allocation3 + $0x18] sm:$0xff]
    %v147 = vld [vmem:[#allocation3 + $0x20] sm:$0xff]
    %v148 = vld [vmem:[#allocation3 + $0x28] sm:$0xff]
    %v149 = vld [vmem:[#allocation3 + $0x30] sm:$0xff]
    %v150 = vld [vmem:[#allocation3 + $0x38] sm:$0xff]
    %v151 = vld [vmem:[#allocation3 + $0x40] sm:$0xff]
    %v152 = vld [vmem:[#allocation3 + $0x48] sm:$0xff]
    %v153 = vld [vmem:[#allocation3 + $0x50] sm:$0xff]
    %v154 = vld [vmem:[#allocation3 + $0x58] sm:$0xff]
    %v155 = vld [vmem:[#allocation3 + $0x60] sm:$0xff]
    %v156 = vld [vmem:[#allocation3 + $0x68] sm:$0xff]
    %v157 = vld [vmem:[#allocation3 + $0x70] sm:$0xff]
    %v158 = vld [vmem:[#allocation3 + $0x78] sm:$0xff]
    %v159 = vld [vmem:[#allocation3 + $0x80] sm:$0xff]
    %v160 = vld [vmem:[#allocation3 + $0x88] sm:$0xff]
    %v161 = vld [vmem:[#allocation3 + $0x90] sm:$0xff]
    %v162 = vld [vmem:[#allocation3 + $0x98] sm:$0xff]
    %v163 = vld [vmem:[#allocation3 + $0xa0] sm:$0xff]
    %v164 = vld [vmem:[#allocation3 + $0xa8] sm:$0xff]
    %v165 = vld [vmem:[#allocation3 + $0xb0] sm:$0xff]
    %v166 = vld [vmem:[#allocation3 + $0xb8] sm:$0xff]
    %v167 = vld [vmem:[#allocation3 + $0xc0] sm:$0xff]
    %v168 = vld [vmem:[#allocation3 + $0xc8] sm:$0xff]
    %v169 = vld [vmem:[#allocation3 + $0xd0] sm:$0xff]
    %v170 = vld [vmem:[#allocation3 + $0xd8] sm:$0xff]
    %v171 = vld [vmem:[#allocation3 + $0xe0] sm:$0xff]
    %v172 = vld [vmem:[#allocation3 + $0xe8] sm:$0xff]
    %v173 = vld [vmem:[#allocation3 + $0xf0] sm:$0xff]
    %v174 = vld [vmem:[#allocation3 + $0xf8] sm:$0xff]
    %v175 = vld [vmem:[#allocation3 + $0x100] sm:$0xff]
    %v176 = vld [vmem:[#allocation3 + $0x108] sm:$0xff]
    %v177 = vld [vmem:[#allocation3 + $0x110] sm:$0xff]
    %v178 = vld [vmem:[#allocation3 + $0x118] sm:$0xff]
    %v179 = vld [vmem:[#allocation3 + $0x120] sm:$0xff]
    %v180 = vld [vmem:[#allocation3 + $0x128] sm:$0xff]
    %v181 = vld [vmem:[#allocation3 + $0x130] sm:$0xff]
    %v182 = vld [vmem:[#allocation3 + $0x138] sm:$0xff]
    %v183 = vld [vmem:[#allocation3 + $0x140] sm:$0xff]
    %v184 = vld [vmem:[#allocation3 + $0x148] sm:$0xff]
    %v185 = vld [vmem:[#allocation3 + $0x150] sm:$0xff]
    %v186 = vld [vmem:[#allocation3 + $0x158] sm:$0xff]
    %v187 = vld [vmem:[#allocation3 + $0x160] sm:$0xff]
    %v188 = vld [vmem:[#allocation3 + $0x168] sm:$0xff]
    %v189 = vld [vmem:[#allocation3 + $0x170] sm:$0xff]
    %v190 = vld [vmem:[#allocation3 + $0x178] sm:$0xff]
    %v191 = vld [vmem:[#allocation3 + $0x180] sm:$0xff]
    %v192 = vld [vmem:[#allocation3 + $0x188] sm:$0xff]
    %v193 = vld [vmem:[#allocation3 + $0x190] sm:$0xff]
    %v194 = vld [vmem:[#allocation3 + $0x198] sm:$0xff]
    %v195 = vld [vmem:[#allocation3 + $0x1a0] sm:$0xff]
    %v196 = vld [vmem:[#allocation3 + $0x1a8] sm:$0xff]
    %v197 = vld [vmem:[#allocation3 + $0x1b0] sm:$0xff]
    %v198 = vld [vmem:[#allocation3 + $0x1b8] sm:$0xff]
    %v199 = vld [vmem:[#allocation3 + $0x1c0] sm:$0xff]
    %v200 = vld [vmem:[#allocation3 + $0x1c8] sm:$0xff]
    %v201 = vld [vmem:[#allocation3 + $0x1d0] sm:$0xff]
    %v202 = vld [vmem:[#allocation3 + $0x1d8] sm:$0xff]
    %v203 = vld [vmem:[#allocation3 + $0x1e0] sm:$0xff]
    %v204 = vld [vmem:[#allocation3 + $0x1e8] sm:$0xff]
    %v205 = vld [vmem:[#allocation3 + $0x1f0] sm:$0xff]
    %v206 = vld [vmem:[#allocation3 + $0x1f8] sm:$0xff]
    %v207 = vld [vmem:[#allocation3 + $0x200] sm:$0xff]
    %v208 = vld [vmem:[#allocation3 + $0x208] sm:$0xff]
    %v209 = vld [vmem:[#allocation3 + $0x210] sm:$0xff]
    %v210 = vld [vmem:[#allocation3 + $0x218] sm:$0xff]
    %v211 = vld [vmem:[#allocation3 + $0x220] sm:$0xff]
    %v212 = vld [vmem:[#allocation3 + $0x228] sm:$0xff]
    %v213 = vld [vmem:[#allocation3 + $0x230] sm:$0xff]
    %v214 = vld [vmem:[#allocation3 + $0x238] sm:$0xff]
    %v215 = vld [vmem:[#allocation3 + $0x240] sm:$0xff]
    %v216 = vld [vmem:[#allocation3 + $0x248] sm:$0xff]
    %v217 = vld [vmem:[#allocation3 + $0x250] sm:$0xff]
    %v218 = vld [vmem:[#allocation3 + $0x258] sm:$0xff]
    %v219 = vld [vmem:[#allocation3 + $0x260] sm:$0xff]
    %v220 = vld [vmem:[#allocation3 + $0x268] sm:$0xff]
    %v221 = vld [vmem:[#allocation3 + $0x270] sm:$0xff]
    %v222 = vld [vmem:[#allocation3 + $0x278] sm:$0xff]
    %v223 = vld [vmem:[#allocation3 + $0x280] sm:$0xff]
    %v224 = vld [vmem:[#allocation3 + $0x288] sm:$0xff]
    %v225 = vld [vmem:[#allocation3 + $0x290] sm:$0xff]
    %v226 = vld [vmem:[#allocation3 + $0x298] sm:$0xff]
    %v227 = vld [vmem:[#allocation3 + $0x2a0] sm:$0xff]
    %v228 = vld [vmem:[#allocation3 + $0x2a8] sm:$0xff]
    %v229 = vld [vmem:[#allocation3 + $0x2b0] sm:$0xff]
    %v230 = vld [vmem:[#allocation3 + $0x2b8] sm:$0xff]
    %v231 = vld [vmem:[#allocation3 + $0x2c0] sm:$0xff]
    %v232 = vld [vmem:[#allocation3 + $0x2c8] sm:$0xff]
    %v233 = vld [vmem:[#allocation3 + $0x2d0] sm:$0xff]
    %v234 = vld [vmem:[#allocation3 + $0x2d8] sm:$0xff]
    %v235 = vld [vmem:[#allocation3 + $0x2e0] sm:$0xff]
    %v236 = vld [vmem:[#allocation3 + $0x2e8] sm:$0xff]
    %v237 = vld [vmem:[#allocation3 + $0x2f0] sm:$0xff]
    %v238 = vld [vmem:[#allocation3 + $0x2f8] sm:$0xff]
    %v239 = vld [vmem:[#allocation3 + $0x300] sm:$0xff]
    %v240 = vld [vmem:[#allocation3 + $0x308] sm:$0xff]
    %v241 = vld [vmem:[#allocation3 + $0x310] sm:$0xff]
    %v242 = vld [vmem:[#allocation3 + $0x318] sm:$0xff]
    %v243 = vld [vmem:[#allocation3 + $0x320] sm:$0xff]
    %v244 = vld [vmem:[#allocation3 + $0x328] sm:$0xff]
    %v245 = vld [vmem:[#allocation3 + $0x330] sm:$0xff]
    %v246 = vld [vmem:[#allocation3 + $0x338] sm:$0xff]
    %v247 = vld [vmem:[#allocation3 + $0x340] sm:$0xff]
    %v248 = vld [vmem:[#allocation3 + $0x348] sm:$0xff]
    %v249 = vld [vmem:[#allocation3 + $0x350] sm:$0xff]
    %v250 = vld [vmem:[#allocation3 + $0x358] sm:$0xff]
    %v251 = vld [vmem:[#allocation3 + $0x360] sm:$0xff]
    %v252 = vld [vmem:[#allocation3 + $0x368] sm:$0xff]
    %v253 = vld [vmem:[#allocation3 + $0x370] sm:$0xff]
    %v254 = vld [vmem:[#allocation3 + $0x378] sm:$0xff]
    %v255 = vld [vmem:[#allocation3 + $0x380] sm:$0xff]
    %v256 = vld [vmem:[#allocation3 + $0x388] sm:$0xff]
    %v257 = vld [vmem:[#allocation3 + $0x390] sm:$0xff]
    %v258 = vld [vmem:[#allocation3 + $0x398] sm:$0xff]
    %v259 = vld [vmem:[#allocation3 + $0x3a0] sm:$0xff]
    %v260 = vld [vmem:[#allocation3 + $0x3a8] sm:$0xff]
    %v261 = vld [vmem:[#allocation3 + $0x3b0] sm:$0xff]
    %v262 = vld [vmem:[#allocation3 + $0x3b8] sm:$0xff]
    %v263 = vld [vmem:[#allocation3 + $0x3c0] sm:$0xff]
    %v264 = vld [vmem:[#allocation3 + $0x3c8] sm:$0xff]
    %v265 = vld [vmem:[#allocation3 + $0x3d0] sm:$0xff]
    %v266 = vld [vmem:[#allocation3 + $0x3d8] sm:$0xff]
    %v267 = vld [vmem:[#allocation3 + $0x3e0] sm:$0xff]
    %v268 = vld [vmem:[#allocation3 + $0x3e8] sm:$0xff]
    %v269 = vld [vmem:[#allocation3 + $0x3f0] sm:$0xff]
    %v270 = vld [vmem:[#allocation3 + $0x3f8] sm:$0xff]
    %v271 = vld [vmem:[#allocation3 + $0x400] sm:$0xff]
    %v272 = vld [vmem:[#allocation3 + $0x408] sm:$0xff]
    %v273 = vld [vmem:[#allocation3 + $0x410] sm:$0xff]
    %v274 = vld [vmem:[#allocation3 + $0x418] sm:$0xff]
    %v275 = vld [vmem:[#allocation3 + $0x420] sm:$0x3f]
    %v276 = vld [vmem:[#allocation3 + $0x428] sm:$0x3f]
    %v277 = vld [vmem:[#allocation3 + $0x430] sm:$0x3f]
    %v278 = vld [vmem:[#allocation6] sm:$0xff]
    %v279 = vld [vmem:[#allocation6 + $0x8] sm:$0xff]
    %v280 = vld [vmem:[#allocation6 + $0x10] sm:$0xff]
    %v281 = vld [vmem:[#allocation6 + $0x18] sm:$0xff]
    %v282 = vld [vmem:[#allocation6 + $0x20] sm:$0xff]
    %v283 = vld [vmem:[#allocation6 + $0x28] sm:$0xff]
    %v284 = vld [vmem:[#allocation6 + $0x30] sm:$0xff]
    %v285 = vld [vmem:[#allocation6 + $0x38] sm:$0xff]
    %v286 = vld [vmem:[#allocation6 + $0x40] sm:$0xff]
    %v287 = vld [vmem:[#allocation6 + $0x48] sm:$0xff]
    %v288 = vld [vmem:[#allocation6 + $0x50] sm:$0xff]
    %v289 = vld [vmem:[#allocation6 + $0x58] sm:$0xff]
    %v290 = vld [vmem:[#allocation6 + $0x60] sm:$0xff]
    %v291 = vld [vmem:[#allocation6 + $0x68] sm:$0xff]
    %v292 = vld [vmem:[#allocation6 + $0x70] sm:$0xff]
    %v293 = vld [vmem:[#allocation6 + $0x78] sm:$0xff]
    %v294 = vld [vmem:[#allocation6 + $0x80] sm:$0xff]
    %v295 = vld [vmem:[#allocation6 + $0x88] sm:$0xff]
    %v296 = vld [vmem:[#allocation6 + $0x90] sm:$0xff]
    %v297 = vld [vmem:[#allocation6 + $0x98] sm:$0xff]
    %v298 = vld [vmem:[#allocation6 + $0xa0] sm:$0xff]
    %v299 = vld [vmem:[#allocation6 + $0xa8] sm:$0xff]
    %v300 = vld [vmem:[#allocation6 + $0xb0] sm:$0xff]
    %v301 = vld [vmem:[#allocation6 + $0xb8] sm:$0xff]
    %v302 = vld [vmem:[#allocation6 + $0xc0] sm:$0xff]
    %v303 = vld [vmem:[#allocation6 + $0xc8] sm:$0xff]
    %v304 = vld [vmem:[#allocation6 + $0xd0] sm:$0xff]
    %v305 = vld [vmem:[#allocation6 + $0xd8] sm:$0xff]
    %v306 = vld [vmem:[#allocation6 + $0xe0] sm:$0xff]
    %v307 = vld [vmem:[#allocation6 + $0xe8] sm:$0xff]
    %v308 = vld [vmem:[#allocation6 + $0xf0] sm:$0xff]
    %v309 = vld [vmem:[#allocation6 + $0xf8] sm:$0xff]
    %v310 = vld [vmem:[#allocation6 + $0x100] sm:$0xff]
    %v311 = vld [vmem:[#allocation6 + $0x108] sm:$0xff]
    %v312 = vld [vmem:[#allocation6 + $0x110] sm:$0xff]
    %v313 = vld [vmem:[#allocation6 + $0x118] sm:$0xff]
    %v314 = vld [vmem:[#allocation6 + $0x120] sm:$0xff]
    %v315 = vld [vmem:[#allocation6 + $0x128] sm:$0xff]
    %v316 = vld [vmem:[#allocation6 + $0x130] sm:$0xff]
    %v317 = vld [vmem:[#allocation6 + $0x138] sm:$0xff]
    %v318 = vld [vmem:[#allocation6 + $0x140] sm:$0xff]
    %v319 = vld [vmem:[#allocation6 + $0x148] sm:$0xff]
    %v320 = vld [vmem:[#allocation6 + $0x150] sm:$0xff]
    %v321 = vld [vmem:[#allocation6 + $0x158] sm:$0xff]
    %v322 = vld [vmem:[#allocation6 + $0x160] sm:$0xff]
    %v323 = vld [vmem:[#allocation6 + $0x168] sm:$0xff]
    %v324 = vld [vmem:[#allocation6 + $0x170] sm:$0xff]
    %v325 = vld [vmem:[#allocation6 + $0x178] sm:$0xff]
    %v326 = vld [vmem:[#allocation6 + $0x180] sm:$0xff]
    %v327 = vld [vmem:[#allocation6 + $0x188] sm:$0xff]
    %v328 = vld [vmem:[#allocation6 + $0x190] sm:$0xff]
    %v329 = vld [vmem:[#allocation6 + $0x198] sm:$0xff]
    %v330 = vld [vmem:[#allocation6 + $0x1a0] sm:$0xff]
    %v331 = vld [vmem:[#allocation6 + $0x1a8] sm:$0xff]
    %v332 = vld [vmem:[#allocation6 + $0x1b0] sm:$0xff]
    %v333 = vld [vmem:[#allocation6 + $0x1b8] sm:$0xff]
    %v334 = vld [vmem:[#allocation6 + $0x1c0] sm:$0xff]
    %v335 = vld [vmem:[#allocation6 + $0x1c8] sm:$0xff]
    %v336 = vld [vmem:[#allocation6 + $0x1d0] sm:$0xff]
    %v337 = vld [vmem:[#allocation6 + $0x1d8] sm:$0xff]
    %v338 = vld [vmem:[#allocation6 + $0x1e0] sm:$0xff]
    %v339 = vld [vmem:[#allocation6 + $0x1e8] sm:$0xff]
    %v340 = vld [vmem:[#allocation6 + $0x1f0] sm:$0xff]
    %v341 = vld [vmem:[#allocation6 + $0x1f8] sm:$0xff]
    %v342 = vld [vmem:[#allocation6 + $0x200] sm:$0xff]
    %v343 = vld [vmem:[#allocation6 + $0x208] sm:$0xff]
    %v344 = vld [vmem:[#allocation6 + $0x210] sm:$0xff]
    %v345 = vld [vmem:[#allocation6 + $0x218] sm:$0xff]
    %v346 = vld [vmem:[#allocation6 + $0x220] sm:$0xff]
    %v347 = vld [vmem:[#allocation6 + $0x228] sm:$0xff]
    %v348 = vld [vmem:[#allocation6 + $0x230] sm:$0xff]
    %v349 = vld [vmem:[#allocation6 + $0x238] sm:$0xff]
    %v350 = vld [vmem:[#allocation6 + $0x240] sm:$0xff]
    %v351 = vld [vmem:[#allocation6 + $0x248] sm:$0xff]
    %v352 = vld [vmem:[#allocation6 + $0x250] sm:$0xff]
    %v353 = vld [vmem:[#allocation6 + $0x258] sm:$0xff]
    %v354 = vld [vmem:[#allocation6 + $0x260] sm:$0xff]
    %v355 = vld [vmem:[#allocation6 + $0x268] sm:$0xff]
    %v356 = vld [vmem:[#allocation6 + $0x270] sm:$0xff]
    %v357 = vld [vmem:[#allocation6 + $0x278] sm:$0xff]
    %v358 = vld [vmem:[#allocation6 + $0x280] sm:$0xff]
    %v359 = vld [vmem:[#allocation6 + $0x288] sm:$0xff]
    %v360 = vld [vmem:[#allocation6 + $0x290] sm:$0xff]
    %v361 = vld [vmem:[#allocation6 + $0x298] sm:$0xff]
    %v362 = vld [vmem:[#allocation6 + $0x2a0] sm:$0xff]
    %v363 = vld [vmem:[#allocation6 + $0x2a8] sm:$0xff]
    %v364 = vld [vmem:[#allocation6 + $0x2b0] sm:$0xff]
    %v365 = vld [vmem:[#allocation6 + $0x2b8] sm:$0xff]
    %v366 = vld [vmem:[#allocation6 + $0x2c0] sm:$0xff]
    %v367 = vld [vmem:[#allocation6 + $0x2c8] sm:$0xff]
    %v368 = vld [vmem:[#allocation6 + $0x2d0] sm:$0xff]
    %v369 = vld [vmem:[#allocation6 + $0x2d8] sm:$0xff]
    %v370 = vld [vmem:[#allocation6 + $0x2e0] sm:$0xff]
    %v371 = vld [vmem:[#allocation6 + $0x2e8] sm:$0xff]
    %v372 = vld [vmem:[#allocation6 + $0x2f0] sm:$0xff]
    %v373 = vld [vmem:[#allocation6 + $0x2f8] sm:$0xff]
    %v374 = vld [vmem:[#allocation6 + $0x300] sm:$0xff]
    %v375 = vld [vmem:[#allocation6 + $0x308] sm:$0xff]
    %v376 = vld [vmem:[#allocation6 + $0x310] sm:$0xff]
    %v377 = vld [vmem:[#allocation6 + $0x318] sm:$0xff]
    %v378 = vld [vmem:[#allocation6 + $0x320] sm:$0xff]
    %v379 = vld [vmem:[#allocation6 + $0x328] sm:$0xff]
    %v380 = vld [vmem:[#allocation6 + $0x330] sm:$0xff]
    %v381 = vld [vmem:[#allocation6 + $0x338] sm:$0xff]
    %v382 = vld [vmem:[#allocation6 + $0x340] sm:$0xff]
    %v383 = vld [vmem:[#allocation6 + $0x348] sm:$0xff]
    %v384 = vld [vmem:[#allocation6 + $0x350] sm:$0xff]
    %v385 = vld [vmem:[#allocation6 + $0x358] sm:$0xff]
    %v386 = vld [vmem:[#allocation6 + $0x360] sm:$0xff]
    %v387 = vld [vmem:[#allocation6 + $0x368] sm:$0xff]
    %v388 = vld [vmem:[#allocation6 + $0x370] sm:$0xff]
    %v389 = vld [vmem:[#allocation6 + $0x378] sm:$0xff]
    %v390 = vld [vmem:[#allocation6 + $0x380] sm:$0xff]
    %v391 = vld [vmem:[#allocation6 + $0x388] sm:$0xff]
    %v392 = vld [vmem:[#allocation6 + $0x390] sm:$0xff]
    %v393 = vld [vmem:[#allocation6 + $0x398] sm:$0xff]
    %v394 = vld [vmem:[#allocation6 + $0x3a0] sm:$0xff]
    %v395 = vld [vmem:[#allocation6 + $0x3a8] sm:$0xff]
    %v396 = vld [vmem:[#allocation6 + $0x3b0] sm:$0xff]
    %v397 = vld [vmem:[#allocation6 + $0x3b8] sm:$0xff]
    %v398 = vld [vmem:[#allocation6 + $0x3c0] sm:$0xff]
    %v399 = vld [vmem:[#allocation6 + $0x3c8] sm:$0xff]
    %v400 = vld [vmem:[#allocation6 + $0x3d0] sm:$0xff]
    %v401 = vld [vmem:[#allocation6 + $0x3d8] sm:$0xff]
    %v402 = vld [vmem:[#allocation6 + $0x3e0] sm:$0xff]
    %v403 = vld [vmem:[#allocation6 + $0x3e8] sm:$0xff]
    %v404 = vld [vmem:[#allocation6 + $0x3f0] sm:$0xff]
    %v405 = vld [vmem:[#allocation6 + $0x3f8] sm:$0xff]
    %v406 = vld [vmem:[#allocation6 + $0x400] sm:$0xff]
    %v407 = vld [vmem:[#allocation6 + $0x408] sm:$0xff]
    %v408 = vld [vmem:[#allocation6 + $0x410] sm:$0xff]
    %v409 = vld [vmem:[#allocation6 + $0x418] sm:$0xff]
    %v410 = vld [vmem:[#allocation6 + $0x420] sm:$0x3f]
    %v411 = vld [vmem:[#allocation6 + $0x428] sm:$0x3f]
    %v412 = vld [vmem:[#allocation6 + $0x430] sm:$0x3f]
    %v413 = vld [vmem:[%s2] sm:$0x7]
    %v414 = vld [vmem:[%s3] sm:$0x7]
    %v415 = vld [vmem:[%s4] sm:$0xff]
    %v416 = vld [vmem:[%s4 + $0x8] sm:$0xff]
    %v417 = vld [vmem:[%s4 + $0x10] sm:$0xff]
    %v418 = vld [vmem:[%s4 + $0x18] sm:$0xff]
    %v419 = vld [vmem:[%s4 + $0x20] sm:$0xff]
    %v420 = vld [vmem:[%s4 + $0x28] sm:$0xff]
    %v421 = vld [vmem:[%s4 + $0x30] sm:$0xff]
    %v422 = vld [vmem:[%s4 + $0x38] sm:$0xff]
    %v423 = vld [vmem:[%s4 + $0x40] sm:$0xff]
    %v424 = vld [vmem:[%s4 + $0x48] sm:$0xff]
    %v425 = vld [vmem:[%s4 + $0x50] sm:$0xff]
    %v426 = vld [vmem:[%s4 + $0x58] sm:$0xff]
    %v427 = vld [vmem:[%s4 + $0x60] sm:$0xff]
    %v428 = vld [vmem:[%s4 + $0x68] sm:$0xff]
    %v429 = vld [vmem:[%s4 + $0x70] sm:$0xff]
    %v430 = vld [vmem:[%s4 + $0x78] sm:$0xff]
    %v431 = vld [vmem:[%s4 + $0x80] sm:$0xff]
    %v432 = vld [vmem:[%s4 + $0x88] sm:$0xff]
    %v433 = vld [vmem:[%s4 + $0x90] sm:$0xff]
    %v434 = vld [vmem:[%s4 + $0x98] sm:$0xff]
    %v435 = vld [vmem:[%s4 + $0xa0] sm:$0xff]
    %v436 = vld [vmem:[%s4 + $0xa8] sm:$0xff]
    %v437 = vld [vmem:[%s4 + $0xb0] sm:$0xff]
    %v438 = vld [vmem:[%s4 + $0xb8] sm:$0xff]
    %v439 = vld [vmem:[%s4 + $0xc0] sm:$0xff]
    %v440 = vld [vmem:[%s4 + $0xc8] sm:$0xff]
    %v441 = vld [vmem:[%s4 + $0xd0] sm:$0xff]
    %v442 = vld [vmem:[%s4 + $0xd8] sm:$0xff]
    %v443 = vld [vmem:[%s4 + $0xe0] sm:$0xff]
    %v444 = vld [vmem:[%s4 + $0xe8] sm:$0xff]
    %v445 = vld [vmem:[%s4 + $0xf0] sm:$0xff]
    %v446 = vld [vmem:[%s4 + $0xf8] sm:$0xff]
    %v447 = vld [vmem:[%s4 + $0x100] sm:$0xff]
    %v448 = vld [vmem:[%s4 + $0x108] sm:$0xff]
    %v449 = vld [vmem:[%s4 + $0x110] sm:$0xff]
    %v450 = vld [vmem:[%s4 + $0x118] sm:$0xff]
    %v451 = vld [vmem:[%s4 + $0x120] sm:$0xff]
    %v452 = vld [vmem:[%s4 + $0x128] sm:$0xff]
    %v453 = vld [vmem:[%s4 + $0x130] sm:$0xff]
    %v454 = vld [vmem:[%s4 + $0x138] sm:$0xff]
    %v455 = vld [vmem:[%s4 + $0x140] sm:$0xff]
    %v456 = vld [vmem:[%s4 + $0x148] sm:$0xff]
    %v457 = vld [vmem:[%s4 + $0x150] sm:$0xff]
    %v458 = vld [vmem:[%s4 + $0x158] sm:$0xff]
    %v459 = vld [vmem:[%s4 + $0x160] sm:$0x3f]
    %v460 = vld [vmem:[%s5] sm:$0xff]
    %v461 = vld [vmem:[%s5 + $0x8] sm:$0xff]
    %v462 = vld [vmem:[%s5 + $0x10] sm:$0xff]
    %v463 = vld [vmem:[%s5 + $0x18] sm:$0x3]
    %v464 = vld [vmem:[%s5 + $0x20] sm:$0x3]
    %v465 = vld [vmem:[%s5 + $0x28] sm:$0x3]
    %vm466 = vcmask 80896
    %v468 = vsel %vm466, %v415, 0
    %v471 = vsel %vm466, %v416, 0
    %v474 = vsel %vm466, %v417, 0
    %v477 = vsel %vm466, %v418, 0
    %v480 = vsel %vm466, %v419, 0
    %v483 = vsel %vm466, %v420, 0
    %v486 = vsel %vm466, %v421, 0
    %v489 = vsel %vm466, %v422, 0
    %v492 = vsel %vm466, %v423, 0
    %v495 = vsel %vm466, %v424, 0
    %v498 = vsel %vm466, %v425, 0
    %v501 = vsel %vm466, %v426, 0
    %v504 = vsel %vm466, %v427, 0
    %v507 = vsel %vm466, %v428, 0
    %v510 = vsel %vm466, %v429, 0
    %v513 = vsel %vm466, %v430, 0
    %v516 = vsel %vm466, %v431, 0
    %v519 = vsel %vm466, %v432, 0
    %v522 = vsel %vm466, %v433, 0
    %v525 = vsel %vm466, %v434, 0
    %v528 = vsel %vm466, %v435, 0
    %v531 = vsel %vm466, %v436, 0
    %v534 = vsel %vm466, %v437, 0
    %v537 = vsel %vm466, %v438, 0
    %v540 = vsel %vm466, %v439, 0
    %v543 = vsel %vm466, %v440, 0
    %v546 = vsel %vm466, %v441, 0
    %v549 = vsel %vm466, %v442, 0
    %v552 = vsel %vm466, %v443, 0
    %v555 = vsel %vm466, %v444, 0
    %v558 = vsel %vm466, %v445, 0
    %v561 = vsel %vm466, %v446, 0
    %v564 = vsel %vm466, %v447, 0
    %v567 = vsel %vm466, %v448, 0
    %v570 = vsel %vm466, %v449, 0
    %v573 = vsel %vm466, %v450, 0
    %v576 = vsel %vm466, %v451, 0
    %v579 = vsel %vm466, %v452, 0
    %v582 = vsel %vm466, %v453, 0
    %v585 = vsel %vm466, %v454, 0
    %v588 = vsel %vm466, %v455, 0
    %v591 = vsel %vm466, %v456, 0
    %v594 = vsel %vm466, %v457, 0
    %v597 = vsel %vm466, %v458, 0
    %v600 = vsel %vm466, %v459, 0
    %vm602 = vcmask 1041408
    %v604 = vsel %vm602, %v463, 0
    %v607 = vsel %vm602, %v464, 0
    %v610 = vsel %vm602, %v465, 0
    %612 = vmatprep.subr.mxu0 %v461
    %613 = vmatpush1.msra.mxu0 %v460
    %614 = vmatprep.subr.mxu0 %v607
    %615 = vmatpush1.msra.mxu0 %v604
    %616 = vmatprep.subr.mxu0 0.0
    %617 = vmatpush1.msra.mxu0 0.0
    %618 = vmatprep.subr.mxu0 0.0
    %619 = vmatpush1.msra.mxu0 0.0
    %620 = vmatprep.subr.mxu0 0.0
    %621 = vmatpush1.msra.mxu0 0.0
    %622 = vmatprep.subr.mxu0 0.0
    %623 = vmatpush1.msra.mxu0 0.0
    %624 = vmatprep.subr.mxu0 0.0
    %625 = vmatpush1.msra.mxu0 0.0
    %626 = vmatprep.subr.mxu0 0.0
    %627 = vmatpush1.msra.mxu0 0.0
    %628 = vmatprep.subr.mxu0 0.0
    %629 = vmatpush1.msra.mxu0 0.0
    %630 = vmatprep.subr.mxu0 0.0
    %631 = vmatpush1.msra.mxu0 0.0
    %632 = vmatprep.subr.mxu0 0.0
    %633 = vmatpush1.msra.mxu0 0.0
    %634 = vmatprep.subr.mxu0 0.0
    %635 = vmatpush1.msra.mxu0 0.0
    %636 = vmatprep.subr.mxu0 0.0
    %637 = vmatpush1.msra.mxu0 0.0
    %638 = vmatprep.subr.mxu0 0.0
    %639 = vmatpush1.msra.mxu0 0.0
    %640 = vmatprep.subr.mxu0 0.0
    %641 = vmatpush1.msra.mxu0 0.0
    %642 = vmatprep.subr.mxu0 0.0
    %643 = vmatpush1.msra.mxu0 0.0
    %644 = vmatprep.subr.mxu0 0.0
    %645 = vmatpush1.msra.mxu0 0.0
    %646 = vmatprep.subr.mxu0 0.0
    %647 = vmatpush1.msra.mxu0 0.0
    %648 = vmatprep.subr.mxu0 0.0
    %649 = vmatpush1.msra.mxu0 0.0
    %650 = vmatprep.subr.mxu0 0.0
    %651 = vmatpush1.msra.mxu0 0.0
    %652 = vmatprep.subr.mxu0 0.0
    %653 = vmatpush1.msra.mxu0 0.0
    %654 = vmatprep.subr.mxu0 0.0
    %655 = vmatpush1.msra.mxu0 0.0
    %656 = vmatprep.subr.mxu0 0.0
    %657 = vmatpush1.msra.mxu0 0.0
    %658 = vmatprep.subr.mxu0 0.0
    %659 = vmatpush1.msra.mxu0 0.0
    %660 = vmatprep.subr.mxu0 0.0
    %661 = vmatpush1.msra.mxu0 0.0
    %662 = vmatprep.subr.mxu0 0.0
    %663 = vmatpush1.msra.mxu0 0.0
    %664 = vmatprep.subr.mxu0 0.0
    %665 = vmatpush1.msra.mxu0 0.0
    %666 = vmatprep.subr.mxu0 0.0
    %667 = vmatpush1.msra.mxu0 0.0
    %668 = vmatprep.subr.mxu0 0.0
    %669 = vmatpush1.msra.mxu0 0.0
    %670 = vmatprep.subr.mxu0 0.0
    %671 = vmatpush1.msra.mxu0 0.0
    %672 = vmatprep.subr.mxu0 0.0
    %673 = vmatpush1.msra.mxu0 0.0
    %674 = vmatprep.subr.mxu0 0.0
    %675 = vmatpush1.msra.mxu0 0.0
    %676 = vmatprep.mubr.f32.mxu0 0.0
    %677 = vmatmul.mubr.f32.gmra.mrb[0].mxu0 %v468
    %v678 = vpop.f32.mrb[0].mxu0
    %v679 = vadd.f32 0.0, %v678
    %v680 = vpop.f32.mrb[0].mxu0
    %v681 = vadd.f32 0.0, %v680
    %682 = vmatprep.mubr.f32.mxu0 0.0
    %683 = vmatmul.mubr.f32.gmra.mrb[0].mxu0 %v471
    %v684 = vpop.f32.mrb[0].mxu0
    %v685 = vadd.f32 0.0, %v684
    %v686 = vpop.f32.mrb[0].mxu0
    %v687 = vadd.f32 0.0, %v686
    %688 = vmatprep.mubr.f32.mxu0 0.0
    %689 = vmatmul.mubr.f32.gmra.mrb[0].mxu0 %v474
    %v690 = vpop.f32.mrb[0].mxu0
    %v691 = vadd.f32 0.0, %v690
    %v692 = vpop.f32.mrb[0].mxu0
    %v693 = vadd.f32 0.0, %v692
    %694 = vmatprep.mubr.f32.mxu0 0.0
    %695 = vmatmul.mubr.f32.gmra.mrb[0].mxu0 %v477
    %v696 = vpop.f32.mrb[0].mxu0
    %v697 = vadd.f32 0.0, %v696
    %v698 = vpop.f32.mrb[0].mxu0
    %v699 = vadd.f32 0.0, %v698
    %700 = vmatprep.mubr.f32.mxu0 0.0
    %701 = vmatmul.mubr.f32.gmra.mrb[0].mxu0 %v480
    %v702 = vpop.f32.mrb[0].mxu0
    %v703 = vadd.f32 0.0, %v702
    %v704 = vpop.f32.mrb[0].mxu0
    %v705 = vadd.f32 0.0, %v704
    %706 = vmatprep.mubr.f32.mxu0 0.0
    %707 = vmatmul.mubr.f32.gmra.mrb[0].mxu0 %v483
    %v708 = vpop.f32.mrb[0].mxu0
    %v709 = vadd.f32 0.0, %v708
    %v710 = vpop.f32.mrb[0].mxu0
    %v711 = vadd.f32 0.0, %v710
    %712 = vmatprep.mubr.f32.mxu0 0.0
    %713 = vmatmul.mubr.f32.gmra.mrb[0].mxu0 %v486
    %v714 = vpop.f32.mrb[0].mxu0
    %v715 = vadd.f32 0.0, %v714
    %v716 = vpop.f32.mrb[0].mxu0
    %v717 = vadd.f32 0.0, %v716
    %718 = vmatprep.mubr.f32.mxu0 0.0
    %719 = vmatmul.mubr.f32.gmra.mrb[0].mxu0 %v489
    %v720 = vpop.f32.mrb[0].mxu0
    %v721 = vadd.f32 0.0, %v720
    %v722 = vpop.f32.mrb[0].mxu0
    %v723 = vadd.f32 0.0, %v722
    %724 = vmatprep.mubr.f32.mxu0 0.0
    %725 = vmatmul.mubr.f32.gmra.mrb[0].mxu0 %v492
    %v726 = vpop.f32.mrb[0].mxu0
    %v727 = vadd.f32 0.0, %v726
    %v728 = vpop.f32.mrb[0].mxu0
    %v729 = vadd.f32 0.0, %v728
    %730 = vmatprep.mubr.f32.mxu0 0.0
    %731 = vmatmul.mubr.f32.gmra.mrb[0].mxu0 %v495
    %v732 = vpop.f32.mrb[0].mxu0
    %v733 = vadd.f32 0.0, %v732
    %v734 = vpop.f32.mrb[0].mxu0
    %v735 = vadd.f32 0.0, %v734
    %736 = vmatprep.mubr.f32.mxu0 0.0
    %737 = vmatmul.mubr.f32.gmra.mrb[0].mxu0 %v498
    %v738 = vpop.f32.mrb[0].mxu0
    %v739 = vadd.f32 0.0, %v738
    %v740 = vpop.f32.mrb[0].mxu0
    %v741 = vadd.f32 0.0, %v740
    %742 = vmatprep.mubr.f32.mxu0 0.0
    %743 = vmatmul.mubr.f32.gmra.mrb[0].mxu0 %v501
    %v744 = vpop.f32.mrb[0].mxu0
    %v745 = vadd.f32 0.0, %v744
    %v746 = vpop.f32.mrb[0].mxu0
    %v747 = vadd.f32 0.0, %v746
    %748 = vmatprep.mubr.f32.mxu0 0.0
    %749 = vmatmul.mubr.f32.gmra.mrb[0].mxu0 %v504
    %v750 = vpop.f32.mrb[0].mxu0
    %v751 = vadd.f32 0.0, %v750
    %v752 = vpop.f32.mrb[0].mxu0
    %v753 = vadd.f32 0.0, %v752
    %754 = vmatprep.mubr.f32.mxu0 0.0
    %755 = vmatmul.mubr.f32.gmra.mrb[0].mxu0 %v507
    %v756 = vpop.f32.mrb[0].mxu0
    %v757 = vadd.f32 0.0, %v756
    %v758 = vpop.f32.mrb[0].mxu0
    %v759 = vadd.f32 0.0, %v758
    %760 = vmatprep.mubr.f32.mxu0 0.0
    %761 = vmatmul.mubr.f32.gmra.mrb[0].mxu0 %v510
    %v762 = vpop.f32.mrb[0].mxu0
    %v763 = vadd.f32 0.0, %v762
    %v764 = vpop.f32.mrb[0].mxu0
    %v765 = vadd.f32 0.0, %v764
    %766 = vmatprep.mubr.f32.mxu0 0.0
    %767 = vmatmul.mubr.f32.gmra.mrb[0].mxu0 %v513
    %v768 = vpop.f32.mrb[0].mxu0
    %v769 = vadd.f32 0.0, %v768
    %v770 = vpop.f32.mrb[0].mxu0
    %v771 = vadd.f32 0.0, %v770
    %772 = vmatprep.mubr.f32.mxu0 0.0
    %773 = vmatmul.mubr.f32.gmra.mrb[0].mxu0 %v516
    %v774 = vpop.f32.mrb[0].mxu0
    %v775 = vadd.f32 0.0, %v774
    %v776 = vpop.f32.mrb[0].mxu0
    %v777 = vadd.f32 0.0, %v776
    %778 = vmatprep.mubr.f32.mxu0 0.0
    %779 = vmatmul.mubr.f32.gmra.mrb[0].mxu0 %v519
    %v780 = vpop.f32.mrb[0].mxu0
    %v781 = vadd.f32 0.0, %v780
    %v782 = vpop.f32.mrb[0].mxu0
    %v783 = vadd.f32 0.0, %v782
    %784 = vmatprep.mubr.f32.mxu0 0.0
    %785 = vmatmul.mubr.f32.gmra.mrb[0].mxu0 %v522
    %v786 = vpop.f32.mrb[0].mxu0
    %v787 = vadd.f32 0.0, %v786
    %v788 = vpop.f32.mrb[0].mxu0
    %v789 = vadd.f32 0.0, %v788
    %790 = vmatprep.mubr.f32.mxu0 0.0
    %791 = vmatmul.mubr.f32.gmra.mrb[0].mxu0 %v525
    %v792 = vpop.f32.mrb[0].mxu0
    %v793 = vadd.f32 0.0, %v792
    %v794 = vpop.f32.mrb[0].mxu0
    %v795 = vadd.f32 0.0, %v794
    %796 = vmatprep.mubr.f32.mxu0 0.0
    %797 = vmatmul.mubr.f32.gmra.mrb[0].mxu0 %v528
    %v798 = vpop.f32.mrb[0].mxu0
    %v799 = vadd.f32 0.0, %v798
    %v800 = vpop.f32.mrb[0].mxu0
    %v801 = vadd.f32 0.0, %v800
    %802 = vmatprep.mubr.f32.mxu0 0.0
    %803 = vmatmul.mubr.f32.gmra.mrb[0].mxu0 %v531
    %v804 = vpop.f32.mrb[0].mxu0
    %v805 = vadd.f32 0.0, %v804
    %v806 = vpop.f32.mrb[0].mxu0
    %v807 = vadd.f32 0.0, %v806
    %808 = vmatprep.mubr.f32.mxu0 0.0
    %809 = vmatmul.mubr.f32.gmra.mrb[0].mxu0 %v534
    %v810 = vpop.f32.mrb[0].mxu0
    %v811 = vadd.f32 0.0, %v810
    %v812 = vpop.f32.mrb[0].mxu0
    %v813 = vadd.f32 0.0, %v812
    %814 = vmatprep.mubr.f32.mxu0 0.0
    %815 = vmatmul.mubr.f32.gmra.mrb[0].mxu0 %v537
    %v816 = vpop.f32.mrb[0].mxu0
    %v817 = vadd.f32 0.0, %v816
    %v818 = vpop.f32.mrb[0].mxu0
    %v819 = vadd.f32 0.0, %v818
    %820 = vmatprep.mubr.f32.mxu0 0.0
    %821 = vmatmul.mubr.f32.gmra.mrb[0].mxu0 %v540
    %v822 = vpop.f32.mrb[0].mxu0
    %v823 = vadd.f32 0.0, %v822
    %v824 = vpop.f32.mrb[0].mxu0
    %v825 = vadd.f32 0.0, %v824
    %826 = vmatprep.mubr.f32.mxu0 0.0
    %827 = vmatmul.mubr.f32.gmra.mrb[0].mxu0 %v543
    %v828 = vpop.f32.mrb[0].mxu0
    %v829 = vadd.f32 0.0, %v828
    %v830 = vpop.f32.mrb[0].mxu0
    %v831 = vadd.f32 0.0, %v830
    %832 = vmatprep.mubr.f32.mxu0 0.0
    %833 = vmatmul.mubr.f32.gmra.mrb[0].mxu0 %v546
    %v834 = vpop.f32.mrb[0].mxu0
    %v835 = vadd.f32 0.0, %v834
    %v836 = vpop.f32.mrb[0].mxu0
    %v837 = vadd.f32 0.0, %v836
    %838 = vmatprep.mubr.f32.mxu0 0.0
    %839 = vmatmul.mubr.f32.gmra.mrb[0].mxu0 %v549
    %v840 = vpop.f32.mrb[0].mxu0
    %v841 = vadd.f32 0.0, %v840
    %v842 = vpop.f32.mrb[0].mxu0
    %v843 = vadd.f32 0.0, %v842
    %844 = vmatprep.mubr.f32.mxu0 0.0
    %845 = vmatmul.mubr.f32.gmra.mrb[0].mxu0 %v552
    %v846 = vpop.f32.mrb[0].mxu0
    %v847 = vadd.f32 0.0, %v846
    %v848 = vpop.f32.mrb[0].mxu0
    %v849 = vadd.f32 0.0, %v848
    %850 = vmatprep.mubr.f32.mxu0 0.0
    %851 = vmatmul.mubr.f32.gmra.mrb[0].mxu0 %v555
    %v852 = vpop.f32.mrb[0].mxu0
    %v853 = vadd.f32 0.0, %v852
    %v854 = vpop.f32.mrb[0].mxu0
    %v855 = vadd.f32 0.0, %v854
    %856 = vmatprep.mubr.f32.mxu0 0.0
    %857 = vmatmul.mubr.f32.gmra.mrb[0].mxu0 %v558
    %v858 = vpop.f32.mrb[0].mxu0
    %v859 = vadd.f32 0.0, %v858
    %v860 = vpop.f32.mrb[0].mxu0
    %v861 = vadd.f32 0.0, %v860
    %862 = vmatprep.mubr.f32.mxu0 0.0
    %863 = vmatmul.mubr.f32.gmra.mrb[0].mxu0 %v561
    %v864 = vpop.f32.mrb[0].mxu0
    %v865 = vadd.f32 0.0, %v864
    %v866 = vpop.f32.mrb[0].mxu0
    %v867 = vadd.f32 0.0, %v866
    %868 = vmatprep.mubr.f32.mxu0 0.0
    %869 = vmatmul.mubr.f32.gmra.mrb[0].mxu0 %v564
    %v870 = vpop.f32.mrb[0].mxu0
    %v871 = vadd.f32 0.0, %v870
    %v872 = vpop.f32.mrb[0].mxu0
    %v873 = vadd.f32 0.0, %v872
    %874 = vmatprep.mubr.f32.mxu0 0.0
    %875 = vmatmul.mubr.f32.gmra.mrb[0].mxu0 %v567
    %v876 = vpop.f32.mrb[0].mxu0
    %v877 = vadd.f32 0.0, %v876
    %v878 = vpop.f32.mrb[0].mxu0
    %v879 = vadd.f32 0.0, %v878
    %880 = vmatprep.mubr.f32.mxu0 0.0
    %881 = vmatmul.mubr.f32.gmra.mrb[0].mxu0 %v570
    %v882 = vpop.f32.mrb[0].mxu0
    %v883 = vadd.f32 0.0, %v882
    %v884 = vpop.f32.mrb[0].mxu0
    %v885 = vadd.f32 0.0, %v884
    %886 = vmatprep.mubr.f32.mxu0 0.0
    %887 = vmatmul.mubr.f32.gmra.mrb[0].mxu0 %v573
    %v888 = vpop.f32.mrb[0].mxu0
    %v889 = vadd.f32 0.0, %v888
    %v890 = vpop.f32.mrb[0].mxu0
    %v891 = vadd.f32 0.0, %v890
    %892 = vmatprep.mubr.f32.mxu0 0.0
    %893 = vmatmul.mubr.f32.gmra.mrb[0].mxu0 %v576
    %v894 = vpop.f32.mrb[0].mxu0
    %v895 = vadd.f32 0.0, %v894
    %v896 = vpop.f32.mrb[0].mxu0
    %v897 = vadd.f32 0.0, %v896
    %898 = vmatprep.mubr.f32.mxu0 0.0
    %899 = vmatmul.mubr.f32.gmra.mrb[0].mxu0 %v579
    %v900 = vpop.f32.mrb[0].mxu0
    %v901 = vadd.f32 0.0, %v900
    %v902 = vpop.f32.mrb[0].mxu0
    %v903 = vadd.f32 0.0, %v902
    %904 = vmatprep.mubr.f32.mxu0 0.0
    %905 = vmatmul.mubr.f32.gmra.mrb[0].mxu0 %v582
    %v906 = vpop.f32.mrb[0].mxu0
    %v907 = vadd.f32 0.0, %v906
    %v908 = vpop.f32.mrb[0].mxu0
    %v909 = vadd.f32 0.0, %v908
    %910 = vmatprep.mubr.f32.mxu0 0.0
    %911 = vmatmul.mubr.f32.gmra.mrb[0].mxu0 %v585
    %v912 = vpop.f32.mrb[0].mxu0
    %v913 = vadd.f32 0.0, %v912
    %v914 = vpop.f32.mrb[0].mxu0
    %v915 = vadd.f32 0.0, %v914
    %916 = vmatprep.mubr.f32.mxu0 0.0
    %917 = vmatmul.mubr.f32.gmra.mrb[0].mxu0 %v588
    %v918 = vpop.f32.mrb[0].mxu0
    %v919 = vadd.f32 0.0, %v918
    %v920 = vpop.f32.mrb[0].mxu0
    %v921 = vadd.f32 0.0, %v920
    %922 = vmatprep.mubr.f32.mxu0 0.0
    %923 = vmatmul.mubr.f32.gmra.mrb[0].mxu0 %v591
    %v924 = vpop.f32.mrb[0].mxu0
    %v925 = vadd.f32 0.0, %v924
    %v926 = vpop.f32.mrb[0].mxu0
    %v927 = vadd.f32 0.0, %v926
    %928 = vmatprep.mubr.f32.mxu0 0.0
    %929 = vmatmul.mubr.f32.gmra.mrb[0].mxu0 %v594
    %v930 = vpop.f32.mrb[0].mxu0
    %v931 = vadd.f32 0.0, %v930
    %v932 = vpop.f32.mrb[0].mxu0
    %v933 = vadd.f32 0.0, %v932
    %934 = vmatprep.mubr.f32.mxu0 0.0
    %935 = vmatmul.mubr.f32.gmra.mrb[0].mxu0 %v597
    %v936 = vpop.f32.mrb[0].mxu0
    %v937 = vadd.f32 0.0, %v936
    %v938 = vpop.f32.mrb[0].mxu0
    %v939 = vadd.f32 0.0, %v938
    %940 = vmatprep.mubr.f32.mxu0 0.0
    %941 = vmatmul.mubr.f32.gmra.mrb[0].mxu0 %v600
    %v942 = vpop.f32.mrb[0].mxu0
    %v943 = vadd.f32 0.0, %v942
    %v944 = vpop.f32.mrb[0].mxu0
    %v945 = vadd.f32 0.0, %v944
    %946 = vdwg.mxu0
    %947 = vmatprep.subr.mxu0 0.0
    %948 = vmatpush1.msra.mxu0 %v462
    %949 = vmatprep.subr.mxu0 0.0
    %950 = vmatpush1.msra.mxu0 %v610
    %951 = vmatprep.subr.mxu0 0.0
    %952 = vmatpush1.msra.mxu0 0.0
    %953 = vmatprep.subr.mxu0 0.0
    %954 = vmatpush1.msra.mxu0 0.0
    %955 = vmatprep.subr.mxu0 0.0
    %956 = vmatpush1.msra.mxu0 0.0
    %957 = vmatprep.subr.mxu0 0.0
    %958 = vmatpush1.msra.mxu0 0.0
    %959 = vmatprep.subr.mxu0 0.0
    %960 = vmatpush1.msra.mxu0 0.0
    %961 = vmatprep.subr.mxu0 0.0
    %962 = vmatpush1.msra.mxu0 0.0
    %963 = vmatprep.subr.mxu0 0.0
    %964 = vmatpush1.msra.mxu0 0.0
    %965 = vmatprep.subr.mxu0 0.0
    %966 = vmatpush1.msra.mxu0 0.0
    %967 = vmatprep.subr.mxu0 0.0
    %968 = vmatpush1.msra.mxu0 0.0
    %969 = vmatprep.subr.mxu0 0.0
    %970 = vmatpush1.msra.mxu0 0.0
    %971 = vmatprep.subr.mxu0 0.0
    %972 = vmatpush1.msra.mxu0 0.0
    %973 = vmatprep.subr.mxu0 0.0
    %974 = vmatpush1.msra.mxu0 0.0
    %975 = vmatprep.subr.mxu0 0.0
    %976 = vmatpush1.msra.mxu0 0.0
    %977 = vmatprep.subr.mxu0 0.0
    %978 = vmatpush1.msra.mxu0 0.0
    %979 = vmatprep.subr.mxu0 0.0
    %980 = vmatpush1.msra.mxu0 0.0
    %981 = vmatprep.subr.mxu0 0.0
    %982 = vmatpush1.msra.mxu0 0.0
    %983 = vmatprep.subr.mxu0 0.0
    %984 = vmatpush1.msra.mxu0 0.0
    %985 = vmatprep.subr.mxu0 0.0
    %986 = vmatpush1.msra.mxu0 0.0
    %987 = vmatprep.subr.mxu0 0.0
    %988 = vmatpush1.msra.mxu0 0.0
    %989 = vmatprep.subr.mxu0 0.0
    %990 = vmatpush1.msra.mxu0 0.0
    %991 = vmatprep.subr.mxu0 0.0
    %992 = vmatpush1.msra.mxu0 0.0
    %993 = vmatprep.subr.mxu0 0.0
    %994 = vmatpush1.msra.mxu0 0.0
    %995 = vmatprep.subr.mxu0 0.0
    %996 = vmatpush1.msra.mxu0 0.0
    %997 = vmatprep.subr.mxu0 0.0
    %998 = vmatpush1.msra.mxu0 0.0
    %999 = vmatprep.subr.mxu0 0.0
    %1000 = vmatpush1.msra.mxu0 0.0
    %1001 = vmatprep.subr.mxu0 0.0
    %1002 = vmatpush1.msra.mxu0 0.0
    %1003 = vmatprep.subr.mxu0 0.0
    %1004 = vmatpush1.msra.mxu0 0.0
    %1005 = vmatprep.subr.mxu0 0.0
    %1006 = vmatpush1.msra.mxu0 0.0
    %1007 = vmatprep.subr.mxu0 0.0
    %1008 = vmatpush1.msra.mxu0 0.0
    %1009 = vmatprep.subr.mxu0 0.0
    %1010 = vmatpush1.msra.mxu0 0.0
    %1011 = vmatprep.mubr.f32.mxu0 0.0
    %1012 = vmatmul.mubr.f32.gmra.mrb[0].mxu0 %v468
    %v1013 = vpop.f32.mrb[0].mxu0
    %v1014 = vadd.f32 0.0, %v1013
    %v1015 = vpop.f32.mrb[0].mxu0
    %1016 = vmatprep.mubr.f32.mxu0 0.0
    %1017 = vmatmul.mubr.f32.gmra.mrb[0].mxu0 %v471
    %v1018 = vpop.f32.mrb[0].mxu0
    %v1019 = vadd.f32 0.0, %v1018
    %v1020 = vpop.f32.mrb[0].mxu0
    %1021 = vmatprep.mubr.f32.mxu0 0.0
    %1022 = vmatmul.mubr.f32.gmra.mrb[0].mxu0 %v474
    %v1023 = vpop.f32.mrb[0].mxu0
    %v1024 = vadd.f32 0.0, %v1023
    %v1025 = vpop.f32.mrb[0].mxu0
    %1026 = vmatprep.mubr.f32.mxu0 0.0
    %1027 = vmatmul.mubr.f32.gmra.mrb[0].mxu0 %v477
    %v1028 = vpop.f32.mrb[0].mxu0
    %v1029 = vadd.f32 0.0, %v1028
    %v1030 = vpop.f32.mrb[0].mxu0
    %1031 = vmatprep.mubr.f32.mxu0 0.0
    %1032 = vmatmul.mubr.f32.gmra.mrb[0].mxu0 %v480
    %v1033 = vpop.f32.mrb[0].mxu0
    %v1034 = vadd.f32 0.0, %v1033
    %v1035 = vpop.f32.mrb[0].mxu0
    %1036 = vmatprep.mubr.f32.mxu0 0.0
    %1037 = vmatmul.mubr.f32.gmra.mrb[0].mxu0 %v483
    %v1038 = vpop.f32.mrb[0].mxu0
    %v1039 = vadd.f32 0.0, %v1038
    %v1040 = vpop.f32.mrb[0].mxu0
    %1041 = vmatprep.mubr.f32.mxu0 0.0
    %1042 = vmatmul.mubr.f32.gmra.mrb[0].mxu0 %v486
    %v1043 = vpop.f32.mrb[0].mxu0
    %v1044 = vadd.f32 0.0, %v1043
    %v1045 = vpop.f32.mrb[0].mxu0
    %1046 = vmatprep.mubr.f32.mxu0 0.0
    %1047 = vmatmul.mubr.f32.gmra.mrb[0].mxu0 %v489
    %v1048 = vpop.f32.mrb[0].mxu0
    %v1049 = vadd.f32 0.0, %v1048
    %v1050 = vpop.f32.mrb[0].mxu0
    %1051 = vmatprep.mubr.f32.mxu0 0.0
    %1052 = vmatmul.mubr.f32.gmra.mrb[0].mxu0 %v492
    %v1053 = vpop.f32.mrb[0].mxu0
    %v1054 = vadd.f32 0.0, %v1053
    %v1055 = vpop.f32.mrb[0].mxu0
    %1056 = vmatprep.mubr.f32.mxu0 0.0
    %1057 = vmatmul.mubr.f32.gmra.mrb[0].mxu0 %v495
    %v1058 = vpop.f32.mrb[0].mxu0
    %v1059 = vadd.f32 0.0, %v1058
    %v1060 = vpop.f32.mrb[0].mxu0
    %1061 = vmatprep.mubr.f32.mxu0 0.0
    %1062 = vmatmul.mubr.f32.gmra.mrb[0].mxu0 %v498
    %v1063 = vpop.f32.mrb[0].mxu0
    %v1064 = vadd.f32 0.0, %v1063
    %v1065 = vpop.f32.mrb[0].mxu0
    %1066 = vmatprep.mubr.f32.mxu0 0.0
    %1067 = vmatmul.mubr.f32.gmra.mrb[0].mxu0 %v501
    %v1068 = vpop.f32.mrb[0].mxu0
    %v1069 = vadd.f32 0.0, %v1068
    %v1070 = vpop.f32.mrb[0].mxu0
    %1071 = vmatprep.mubr.f32.mxu0 0.0
    %1072 = vmatmul.mubr.f32.gmra.mrb[0].mxu0 %v504
    %v1073 = vpop.f32.mrb[0].mxu0
    %v1074 = vadd.f32 0.0, %v1073
    %v1075 = vpop.f32.mrb[0].mxu0
    %1076 = vmatprep.mubr.f32.mxu0 0.0
    %1077 = vmatmul.mubr.f32.gmra.mrb[0].mxu0 %v507
    %v1078 = vpop.f32.mrb[0].mxu0
    %v1079 = vadd.f32 0.0, %v1078
    %v1080 = vpop.f32.mrb[0].mxu0
    %1081 = vmatprep.mubr.f32.mxu0 0.0
    %1082 = vmatmul.mubr.f32.gmra.mrb[0].mxu0 %v510
    %v1083 = vpop.f32.mrb[0].mxu0
    %v1084 = vadd.f32 0.0, %v1083
    %v1085 = vpop.f32.mrb[0].mxu0
    %1086 = vmatprep.mubr.f32.mxu0 0.0
    %1087 = vmatmul.mubr.f32.gmra.mrb[0].mxu0 %v513
    %v1088 = vpop.f32.mrb[0].mxu0
    %v1089 = vadd.f32 0.0, %v1088
    %v1090 = vpop.f32.mrb[0].mxu0
    %1091 = vmatprep.mubr.f32.mxu0 0.0
    %1092 = vmatmul.mubr.f32.gmra.mrb[0].mxu0 %v516
    %v1093 = vpop.f32.mrb[0].mxu0
    %v1094 = vadd.f32 0.0, %v1093
    %v1095 = vpop.f32.mrb[0].mxu0
    %1096 = vmatprep.mubr.f32.mxu0 0.0
    %1097 = vmatmul.mubr.f32.gmra.mrb[0].mxu0 %v519
    %v1098 = vpop.f32.mrb[0].mxu0
    %v1099 = vadd.f32 0.0, %v1098
    %v1100 = vpop.f32.mrb[0].mxu0
    %1101 = vmatprep.mubr.f32.mxu0 0.0
    %1102 = vmatmul.mubr.f32.gmra.mrb[0].mxu0 %v522
    %v1103 = vpop.f32.mrb[0].mxu0
    %v1104 = vadd.f32 0.0, %v1103
    %v1105 = vpop.f32.mrb[0].mxu0
    %1106 = vmatprep.mubr.f32.mxu0 0.0
    %1107 = vmatmul.mubr.f32.gmra.mrb[0].mxu0 %v525
    %v1108 = vpop.f32.mrb[0].mxu0
    %v1109 = vadd.f32 0.0, %v1108
    %v1110 = vpop.f32.mrb[0].mxu0
    %1111 = vmatprep.mubr.f32.mxu0 0.0
    %1112 = vmatmul.mubr.f32.gmra.mrb[0].mxu0 %v528
    %v1113 = vpop.f32.mrb[0].mxu0
    %v1114 = vadd.f32 0.0, %v1113
    %v1115 = vpop.f32.mrb[0].mxu0
    %1116 = vmatprep.mubr.f32.mxu0 0.0
    %1117 = vmatmul.mubr.f32.gmra.mrb[0].mxu0 %v531
    %v1118 = vpop.f32.mrb[0].mxu0
    %v1119 = vadd.f32 0.0, %v1118
    %v1120 = vpop.f32.mrb[0].mxu0
    %1121 = vmatprep.mubr.f32.mxu0 0.0
    %1122 = vmatmul.mubr.f32.gmra.mrb[0].mxu0 %v534
    %v1123 = vpop.f32.mrb[0].mxu0
    %v1124 = vadd.f32 0.0, %v1123
    %v1125 = vpop.f32.mrb[0].mxu0
    %1126 = vmatprep.mubr.f32.mxu0 0.0
    %1127 = vmatmul.mubr.f32.gmra.mrb[0].mxu0 %v537
    %v1128 = vpop.f32.mrb[0].mxu0
    %v1129 = vadd.f32 0.0, %v1128
    %v1130 = vpop.f32.mrb[0].mxu0
    %1131 = vmatprep.mubr.f32.mxu0 0.0
    %1132 = vmatmul.mubr.f32.gmra.mrb[0].mxu0 %v540
    %v1133 = vpop.f32.mrb[0].mxu0
    %v1134 = vadd.f32 0.0, %v1133
    %v1135 = vpop.f32.mrb[0].mxu0
    %1136 = vmatprep.mubr.f32.mxu0 0.0
    %1137 = vmatmul.mubr.f32.gmra.mrb[0].mxu0 %v543
    %v1138 = vpop.f32.mrb[0].mxu0
    %v1139 = vadd.f32 0.0, %v1138
    %v1140 = vpop.f32.mrb[0].mxu0
    %1141 = vmatprep.mubr.f32.mxu0 0.0
    %1142 = vmatmul.mubr.f32.gmra.mrb[0].mxu0 %v546
    %v1143 = vpop.f32.mrb[0].mxu0
    %v1144 = vadd.f32 0.0, %v1143
    %v1145 = vpop.f32.mrb[0].mxu0
    %1146 = vmatprep.mubr.f32.mxu0 0.0
    %1147 = vmatmul.mubr.f32.gmra.mrb[0].mxu0 %v549
    %v1148 = vpop.f32.mrb[0].mxu0
    %v1149 = vadd.f32 0.0, %v1148
    %v1150 = vpop.f32.mrb[0].mxu0
    %1151 = vmatprep.mubr.f32.mxu0 0.0
    %1152 = vmatmul.mubr.f32.gmra.mrb[0].mxu0 %v552
    %v1153 = vpop.f32.mrb[0].mxu0
    %v1154 = vadd.f32 0.0, %v1153
    %v1155 = vpop.f32.mrb[0].mxu0
    %1156 = vmatprep.mubr.f32.mxu0 0.0
    %1157 = vmatmul.mubr.f32.gmra.mrb[0].mxu0 %v555
    %v1158 = vpop.f32.mrb[0].mxu0
    %v1159 = vadd.f32 0.0, %v1158
    %v1160 = vpop.f32.mrb[0].mxu0
    %1161 = vmatprep.mubr.f32.mxu0 0.0
    %1162 = vmatmul.mubr.f32.gmra.mrb[0].mxu0 %v558
    %v1163 = vpop.f32.mrb[0].mxu0
    %v1164 = vadd.f32 0.0, %v1163
    %v1165 = vpop.f32.mrb[0].mxu0
    %1166 = vmatprep.mubr.f32.mxu0 0.0
    %1167 = vmatmul.mubr.f32.gmra.mrb[0].mxu0 %v561
    %v1168 = vpop.f32.mrb[0].mxu0
    %v1169 = vadd.f32 0.0, %v1168
    %v1170 = vpop.f32.mrb[0].mxu0
    %1171 = vmatprep.mubr.f32.mxu0 0.0
    %1172 = vmatmul.mubr.f32.gmra.mrb[0].mxu0 %v564
    %v1173 = vpop.f32.mrb[0].mxu0
    %v1174 = vadd.f32 0.0, %v1173
    %v1175 = vpop.f32.mrb[0].mxu0
    %1176 = vmatprep.mubr.f32.mxu0 0.0
    %1177 = vmatmul.mubr.f32.gmra.mrb[0].mxu0 %v567
    %v1178 = vpop.f32.mrb[0].mxu0
    %v1179 = vadd.f32 0.0, %v1178
    %v1180 = vpop.f32.mrb[0].mxu0
    %1181 = vmatprep.mubr.f32.mxu0 0.0
    %1182 = vmatmul.mubr.f32.gmra.mrb[0].mxu0 %v570
    %v1183 = vpop.f32.mrb[0].mxu0
    %v1184 = vadd.f32 0.0, %v1183
    %v1185 = vpop.f32.mrb[0].mxu0
    %1186 = vmatprep.mubr.f32.mxu0 0.0
    %1187 = vmatmul.mubr.f32.gmra.mrb[0].mxu0 %v573
    %v1188 = vpop.f32.mrb[0].mxu0
    %v1189 = vadd.f32 0.0, %v1188
    %v1190 = vpop.f32.mrb[0].mxu0
    %1191 = vmatprep.mubr.f32.mxu0 0.0
    %1192 = vmatmul.mubr.f32.gmra.mrb[0].mxu0 %v576
    %v1193 = vpop.f32.mrb[0].mxu0
    %v1194 = vadd.f32 0.0, %v1193
    %v1195 = vpop.f32.mrb[0].mxu0
    %1196 = vmatprep.mubr.f32.mxu0 0.0
    %1197 = vmatmul.mubr.f32.gmra.mrb[0].mxu0 %v579
    %v1198 = vpop.f32.mrb[0].mxu0
    %v1199 = vadd.f32 0.0, %v1198
    %v1200 = vpop.f32.mrb[0].mxu0
    %1201 = vmatprep.mubr.f32.mxu0 0.0
    %1202 = vmatmul.mubr.f32.gmra.mrb[0].mxu0 %v582
    %v1203 = vpop.f32.mrb[0].mxu0
    %v1204 = vadd.f32 0.0, %v1203
    %v1205 = vpop.f32.mrb[0].mxu0
    %1206 = vmatprep.mubr.f32.mxu0 0.0
    %1207 = vmatmul.mubr.f32.gmra.mrb[0].mxu0 %v585
    %v1208 = vpop.f32.mrb[0].mxu0
    %v1209 = vadd.f32 0.0, %v1208
    %v1210 = vpop.f32.mrb[0].mxu0
    %1211 = vmatprep.mubr.f32.mxu0 0.0
    %1212 = vmatmul.mubr.f32.gmra.mrb[0].mxu0 %v588
    %v1213 = vpop.f32.mrb[0].mxu0
    %v1214 = vadd.f32 0.0, %v1213
    %v1215 = vpop.f32.mrb[0].mxu0
    %1216 = vmatprep.mubr.f32.mxu0 0.0
    %1217 = vmatmul.mubr.f32.gmra.mrb[0].mxu0 %v591
    %v1218 = vpop.f32.mrb[0].mxu0
    %v1219 = vadd.f32 0.0, %v1218
    %v1220 = vpop.f32.mrb[0].mxu0
    %1221 = vmatprep.mubr.f32.mxu0 0.0
    %1222 = vmatmul.mubr.f32.gmra.mrb[0].mxu0 %v594
    %v1223 = vpop.f32.mrb[0].mxu0
    %v1224 = vadd.f32 0.0, %v1223
    %v1225 = vpop.f32.mrb[0].mxu0
    %1226 = vmatprep.mubr.f32.mxu0 0.0
    %1227 = vmatmul.mubr.f32.gmra.mrb[0].mxu0 %v597
    %v1228 = vpop.f32.mrb[0].mxu0
    %v1229 = vadd.f32 0.0, %v1228
    %v1230 = vpop.f32.mrb[0].mxu0
    %1231 = vmatprep.mubr.f32.mxu0 0.0
    %1232 = vmatmul.mubr.f32.gmra.mrb[0].mxu0 %v600
    %v1233 = vpop.f32.mrb[0].mxu0
    %v1234 = vadd.f32 0.0, %v1233
    %v1235 = vpop.f32.mrb[0].mxu0
    %1236 = vdwg.mxu0
    %v1237 = vmax.f32 %v679, 0.0
    %v1238 = vmax.f32 %v681, 0.0
    %v1239 = vmax.f32 %v1014, 0.0
    %v1240 = vmax.f32 %v685, 0.0
    %v1241 = vmax.f32 %v687, 0.0
    %v1242 = vmax.f32 %v1019, 0.0
    %v1243 = vmax.f32 %v691, 0.0
    %v1244 = vmax.f32 %v693, 0.0
    %v1245 = vmax.f32 %v1024, 0.0
    %v1246 = vmax.f32 %v697, 0.0
    %v1247 = vmax.f32 %v699, 0.0
    %v1248 = vmax.f32 %v1029, 0.0
    %v1249 = vmax.f32 %v703, 0.0
    %v1250 = vmax.f32 %v705, 0.0
    %v1251 = vmax.f32 %v1034, 0.0
    %v1252 = vmax.f32 %v709, 0.0
    %v1253 = vmax.f32 %v711, 0.0
    %v1254 = vmax.f32 %v1039, 0.0
    %v1255 = vmax.f32 %v715, 0.0
    %v1256 = vmax.f32 %v717, 0.0
    %v1257 = vmax.f32 %v1044, 0.0
    %v1258 = vmax.f32 %v721, 0.0
    %v1259 = vmax.f32 %v723, 0.0
    %v1260 = vmax.f32 %v1049, 0.0
    %v1261 = vmax.f32 %v727, 0.0
    %v1262 = vmax.f32 %v729, 0.0
    %v1263 = vmax.f32 %v1054, 0.0
    %v1264 = vmax.f32 %v733, 0.0
    %v1265 = vmax.f32 %v735, 0.0
    %v1266 = vmax.f32 %v1059, 0.0
    %v1267 = vmax.f32 %v739, 0.0
    %v1268 = vmax.f32 %v741, 0.0
    %v1269 = vmax.f32 %v1064, 0.0
    %v1270 = vmax.f32 %v745, 0.0
    %v1271 = vmax.f32 %v747, 0.0
    %v1272 = vmax.f32 %v1069, 0.0
    %v1273 = vmax.f32 %v751, 0.0
    %v1274 = vmax.f32 %v753, 0.0
    %v1275 = vmax.f32 %v1074, 0.0
    %v1276 = vmax.f32 %v757, 0.0
    %v1277 = vmax.f32 %v759, 0.0
    %v1278 = vmax.f32 %v1079, 0.0
    %v1279 = vmax.f32 %v763, 0.0
    %v1280 = vmax.f32 %v765, 0.0
    %v1281 = vmax.f32 %v1084, 0.0
    %v1282 = vmax.f32 %v769, 0.0
    %v1283 = vmax.f32 %v771, 0.0
    %v1284 = vmax.f32 %v1089, 0.0
    %v1285 = vmax.f32 %v775, 0.0
    %v1286 = vmax.f32 %v777, 0.0
    %v1287 = vmax.f32 %v1094, 0.0
    %v1288 = vmax.f32 %v781, 0.0
    %v1289 = vmax.f32 %v783, 0.0
    %v1290 = vmax.f32 %v1099, 0.0
    %v1291 = vmax.f32 %v787, 0.0
    %v1292 = vmax.f32 %v789, 0.0
    %v1293 = vmax.f32 %v1104, 0.0
    %v1294 = vmax.f32 %v793, 0.0
    %v1295 = vmax.f32 %v795, 0.0
    %v1296 = vmax.f32 %v1109, 0.0
    %v1297 = vmax.f32 %v799, 0.0
    %v1298 = vmax.f32 %v801, 0.0
    %v1299 = vmax.f32 %v1114, 0.0
    %v1300 = vmax.f32 %v805, 0.0
    %v1301 = vmax.f32 %v807, 0.0
    %v1302 = vmax.f32 %v1119, 0.0
    %v1303 = vmax.f32 %v811, 0.0
    %v1304 = vmax.f32 %v813, 0.0
    %v1305 = vmax.f32 %v1124, 0.0
    %v1306 = vmax.f32 %v817, 0.0
    %v1307 = vmax.f32 %v819, 0.0
    %v1308 = vmax.f32 %v1129, 0.0
    %v1309 = vmax.f32 %v823, 0.0
    %v1310 = vmax.f32 %v825, 0.0
    %v1311 = vmax.f32 %v1134, 0.0
    %v1312 = vmax.f32 %v829, 0.0
    %v1313 = vmax.f32 %v831, 0.0
    %v1314 = vmax.f32 %v1139, 0.0
    %v1315 = vmax.f32 %v835, 0.0
    %v1316 = vmax.f32 %v837, 0.0
    %v1317 = vmax.f32 %v1144, 0.0
    %v1318 = vmax.f32 %v841, 0.0
    %v1319 = vmax.f32 %v843, 0.0
    %v1320 = vmax.f32 %v1149, 0.0
    %v1321 = vmax.f32 %v847, 0.0
    %v1322 = vmax.f32 %v849, 0.0
    %v1323 = vmax.f32 %v1154, 0.0
    %v1324 = vmax.f32 %v853, 0.0
    %v1325 = vmax.f32 %v855, 0.0
    %v1326 = vmax.f32 %v1159, 0.0
    %v1327 = vmax.f32 %v859, 0.0
    %v1328 = vmax.f32 %v861, 0.0
    %v1329 = vmax.f32 %v1164, 0.0
    %v1330 = vmax.f32 %v865, 0.0
    %v1331 = vmax.f32 %v867, 0.0
    %v1332 = vmax.f32 %v1169, 0.0
    %v1333 = vmax.f32 %v871, 0.0
    %v1334 = vmax.f32 %v873, 0.0
    %v1335 = vmax.f32 %v1174, 0.0
    %v1336 = vmax.f32 %v877, 0.0
    %v1337 = vmax.f32 %v879, 0.0
    %v1338 = vmax.f32 %v1179, 0.0
    %v1339 = vmax.f32 %v883, 0.0
    %v1340 = vmax.f32 %v885, 0.0
    %v1341 = vmax.f32 %v1184, 0.0
    %v1342 = vmax.f32 %v889, 0.0
    %v1343 = vmax.f32 %v891, 0.0
    %v1344 = vmax.f32 %v1189, 0.0
    %v1345 = vmax.f32 %v895, 0.0
    %v1346 = vmax.f32 %v897, 0.0
    %v1347 = vmax.f32 %v1194, 0.0
    %v1348 = vmax.f32 %v901, 0.0
    %v1349 = vmax.f32 %v903, 0.0
    %v1350 = vmax.f32 %v1199, 0.0
    %v1351 = vmax.f32 %v907, 0.0
    %v1352 = vmax.f32 %v909, 0.0
    %v1353 = vmax.f32 %v1204, 0.0
    %v1354 = vmax.f32 %v913, 0.0
    %v1355 = vmax.f32 %v915, 0.0
    %v1356 = vmax.f32 %v1209, 0.0
    %v1357 = vmax.f32 %v919, 0.0
    %v1358 = vmax.f32 %v921, 0.0
    %v1359 = vmax.f32 %v1214, 0.0
    %v1360 = vmax.f32 %v925, 0.0
    %v1361 = vmax.f32 %v927, 0.0
    %v1362 = vmax.f32 %v1219, 0.0
    %v1363 = vmax.f32 %v931, 0.0
    %v1364 = vmax.f32 %v933, 0.0
    %v1365 = vmax.f32 %v1224, 0.0
    %v1366 = vmax.f32 %v937, 0.0
    %v1367 = vmax.f32 %v939, 0.0
    %v1368 = vmax.f32 %v1229, 0.0
    %v1369 = vmax.f32 %v943, 0.0
    %v1370 = vmax.f32 %v945, 0.0
    %v1371 = vmax.f32 %v1234, 0.0
    %v1372 = vmax.f32 %v1237, %v1243
    %v1373 = vmax.f32 %v1240, %v1246
    %v1374 = vmax.f32 %v1372, %v1249
    %v1375 = vmax.f32 %v1373, %v1252
    %v1376 = vmax.f32 %v1374, %v1255
    %v1377 = vmax.f32 %v1375, %v1258
    %v1378 = vmax.f32 %v1376, %v1261
    %v1379 = vmax.f32 %v1377, %v1264
    %v1380 = vmax.f32 %v1378, %v1267
    %v1381 = vmax.f32 %v1379, %v1270
    %v1382 = vmax.f32 %v1380, %v1273
    %v1383 = vmax.f32 %v1381, %v1276
    %v1384 = vmax.f32 %v1382, %v1279
    %v1385 = vmax.f32 %v1383, %v1282
    %v1386 = vmax.f32 %v1384, %v1285
    %v1387 = vmax.f32 %v1385, %v1288
    %v1388 = vmax.f32 %v1386, %v1291
    %v1389 = vmax.f32 %v1387, %v1294
    %v1390 = vmax.f32 %v1388, %v1297
    %v1391 = vmax.f32 %v1389, %v1300
    %v1392 = vmax.f32 %v1390, %v1303
    %v1393 = vmax.f32 %v1391, %v1306
    %v1394 = vmax.f32 %v1392, %v1309
    %v1395 = vmax.f32 %v1393, %v1312
    %v1396 = vmax.f32 %v1394, %v1315
    %v1397 = vmax.f32 %v1395, %v1318
    %v1398 = vmax.f32 %v1396, %v1321
    %v1399 = vmax.f32 %v1397, %v1324
    %v1400 = vmax.f32 %v1398, %v1327
    %v1401 = vmax.f32 %v1399, %v1330
    %v1402 = vmax.f32 %v1400, %v1333
    %v1403 = vmax.f32 %v1401, %v1336
    %v1404 = vmax.f32 %v1402, %v1339
    %v1405 = vmax.f32 %v1403, %v1342
    %v1406 = vmax.f32 %v1404, %v1345
    %v1407 = vmax.f32 %v1405, %v1348
    %v1408 = vmax.f32 %v1406, %v1351
    %v1409 = vmax.f32 %v1407, %v1354
    %v1410 = vmax.f32 %v1408, %v1357
    %v1411 = vmax.f32 %v1409, %v1360
    %v1412 = vmax.f32 %v1410, %v1363
    %v1413 = vmax.f32 %v1411, %v1366
    %vm1414 = vcmask 1045504
    %v1415 = vsel %vm1414, %v1369, -inf
    %v1416 = vmax.f32 %v1412, %v1415
    %v1417 = vmax.f32 %v1416, %v1413
    %v1418 = vrot.slane %v1417, 4
    %v1419 = vmax.f32 %v1417, %v1418
    %v1420 = vrot.slane %v1419, 2
    %v1421 = vmax.f32 %v1419, %v1420
    %v1422 = vrot.slane %v1421, 1
    %v1423 = vmax.f32 %v1421, %v1422
    %v1424 = vmax.f32 %v1238, %v1244
    %v1425 = vmax.f32 %v1241, %v1247
    %v1426 = vmax.f32 %v1424, %v1250
    %v1427 = vmax.f32 %v1425, %v1253
    %v1428 = vmax.f32 %v1426, %v1256
    %v1429 = vmax.f32 %v1427, %v1259
    %v1430 = vmax.f32 %v1428, %v1262
    %v1431 = vmax.f32 %v1429, %v1265
    %v1432 = vmax.f32 %v1430, %v1268
    %v1433 = vmax.f32 %v1431, %v1271
    %v1434 = vmax.f32 %v1432, %v1274
    %v1435 = vmax.f32 %v1433, %v1277
    %v1436 = vmax.f32 %v1434, %v1280
    %v1437 = vmax.f32 %v1435, %v1283
    %v1438 = vmax.f32 %v1436, %v1286
    %v1439 = vmax.f32 %v1437, %v1289
    %v1440 = vmax.f32 %v1438, %v1292
    %v1441 = vmax.f32 %v1439, %v1295
    %v1442 = vmax.f32 %v1440, %v1298
    %v1443 = vmax.f32 %v1441, %v1301
    %v1444 = vmax.f32 %v1442, %v1304
    %v1445 = vmax.f32 %v1443, %v1307
    %v1446 = vmax.f32 %v1444, %v1310
    %v1447 = vmax.f32 %v1445, %v1313
    %v1448 = vmax.f32 %v1446, %v1316
    %v1449 = vmax.f32 %v1447, %v1319
    %v1450 = vmax.f32 %v1448, %v1322
    %v1451 = vmax.f32 %v1449, %v1325
    %v1452 = vmax.f32 %v1450, %v1328
    %v1453 = vmax.f32 %v1451, %v1331
    %v1454 = vmax.f32 %v1452, %v1334
    %v1455 = vmax.f32 %v1453, %v1337
    %v1456 = vmax.f32 %v1454, %v1340
    %v1457 = vmax.f32 %v1455, %v1343
    %v1458 = vmax.f32 %v1456, %v1346
    %v1459 = vmax.f32 %v1457, %v1349
    %v1460 = vmax.f32 %v1458, %v1352
    %v1461 = vmax.f32 %v1459, %v1355
    %v1462 = vmax.f32 %v1460, %v1358
    %v1463 = vmax.f32 %v1461, %v1361
    %v1464 = vmax.f32 %v1462, %v1364
    %v1465 = vmax.f32 %v1463, %v1367
    %v1466 = vsel %vm1414, %v1370, -inf
    %v1467 = vmax.f32 %v1464, %v1466
    %v1468 = vmax.f32 %v1467, %v1465
    %v1469 = vrot.slane %v1468, 4
    %v1470 = vmax.f32 %v1468, %v1469
    %v1471 = vrot.slane %v1470, 2
    %v1472 = vmax.f32 %v1470, %v1471
    %v1473 = vrot.slane %v1472, 1
    %v1474 = vmax.f32 %v1472, %v1473
    %v1475 = vsel %vm63, %v1239, -inf
    %v1476 = vsel %vm63, %v1242, -inf
    %v1477 = vsel %vm63, %v1245, -inf
    %v1478 = vmax.f32 %v1475, %v1477
    %v1479 = vsel %vm63, %v1248, -inf
    %v1480 = vmax.f32 %v1476, %v1479
    %v1481 = vsel %vm63, %v1251, -inf
    %v1482 = vmax.f32 %v1478, %v1481
    %v1483 = vsel %vm63, %v1254, -inf
    %v1484 = vmax.f32 %v1480, %v1483
    %v1485 = vsel %vm63, %v1257, -inf
    %v1486 = vmax.f32 %v1482, %v1485
    %v1487 = vsel %vm63, %v1260, -inf
    %v1488 = vmax.f32 %v1484, %v1487
    %v1489 = vsel %vm63, %v1263, -inf
    %v1490 = vmax.f32 %v1486, %v1489
    %v1491 = vsel %vm63, %v1266, -inf
    %v1492 = vmax.f32 %v1488, %v1491
    %v1493 = vsel %vm63, %v1269, -inf
    %v1494 = vmax.f32 %v1490, %v1493
    %v1495 = vsel %vm63, %v1272, -inf
    %v1496 = vmax.f32 %v1492, %v1495
    %v1497 = vsel %vm63, %v1275, -inf
    %v1498 = vmax.f32 %v1494, %v1497
    %v1499 = vsel %vm63, %v1278, -inf
    %v1500 = vmax.f32 %v1496, %v1499
    %v1501 = vsel %vm63, %v1281, -inf
    %v1502 = vmax.f32 %v1498, %v1501
    %v1503 = vsel %vm63, %v1284, -inf
    %v1504 = vmax.f32 %v1500, %v1503
    %v1505 = vsel %vm63, %v1287, -inf
    %v1506 = vmax.f32 %v1502, %v1505
    %v1507 = vsel %vm63, %v1290, -inf
    %v1508 = vmax.f32 %v1504, %v1507
    %v1509 = vsel %vm63, %v1293, -inf
    %v1510 = vmax.f32 %v1506, %v1509
    %v1511 = vsel %vm63, %v1296, -inf
    %v1512 = vmax.f32 %v1508, %v1511
    %v1513 = vsel %vm63, %v1299, -inf
    %v1514 = vmax.f32 %v1510, %v1513
    %v1515 = vsel %vm63, %v1302, -inf
    %v1516 = vmax.f32 %v1512, %v1515
    %v1517 = vsel %vm63, %v1305, -inf
    %v1518 = vmax.f32 %v1514, %v1517
    %v1519 = vsel %vm63, %v1308, -inf
    %v1520 = vmax.f32 %v1516, %v1519
    %v1521 = vsel %vm63, %v1311, -inf
    %v1522 = vmax.f32 %v1518, %v1521
    %v1523 = vsel %vm63, %v1314, -inf
    %v1524 = vmax.f32 %v1520, %v1523
    %v1525 = vsel %vm63, %v1317, -inf
    %v1526 = vmax.f32 %v1522, %v1525
    %v1527 = vsel %vm63, %v1320, -inf
    %v1528 = vmax.f32 %v1524, %v1527
    %v1529 = vsel %vm63, %v1323, -inf
    %v1530 = vmax.f32 %v1526, %v1529
    %v1531 = vsel %vm63, %v1326, -inf
    %v1532 = vmax.f32 %v1528, %v1531
    %v1533 = vsel %vm63, %v1329, -inf
    %v1534 = vmax.f32 %v1530, %v1533
    %v1535 = vsel %vm63, %v1332, -inf
    %v1536 = vmax.f32 %v1532, %v1535
    %v1537 = vsel %vm63, %v1335, -inf
    %v1538 = vmax.f32 %v1534, %v1537
    %v1539 = vsel %vm63, %v1338, -inf
    %v1540 = vmax.f32 %v1536, %v1539
    %v1541 = vsel %vm63, %v1341, -inf
    %v1542 = vmax.f32 %v1538, %v1541
    %v1543 = vsel %vm63, %v1344, -inf
    %v1544 = vmax.f32 %v1540, %v1543
    %v1545 = vsel %vm63, %v1347, -inf
    %v1546 = vmax.f32 %v1542, %v1545
    %v1547 = vsel %vm63, %v1350, -inf
    %v1548 = vmax.f32 %v1544, %v1547
    %v1549 = vsel %vm63, %v1353, -inf
    %v1550 = vmax.f32 %v1546, %v1549
    %v1551 = vsel %vm63, %v1356, -inf
    %v1552 = vmax.f32 %v1548, %v1551
    %v1553 = vsel %vm63, %v1359, -inf
    %v1554 = vmax.f32 %v1550, %v1553
    %v1555 = vsel %vm63, %v1362, -inf
    %v1556 = vmax.f32 %v1552, %v1555
    %v1557 = vsel %vm63, %v1365, -inf
    %v1558 = vmax.f32 %v1554, %v1557
    %v1559 = vsel %vm63, %v1368, -inf
    %v1560 = vmax.f32 %v1556, %v1559
    %vm1561 = vcmask 832512
    %v1562 = vsel %vm1561, %v1371, -inf
    %v1563 = vmax.f32 %v1558, %v1562
    %v1564 = vmax.f32 %v1563, %v1560
    %v1565 = vrot.slane %v1564, 4
    %v1566 = vmax.f32 %v1564, %v1565
    %v1567 = vrot.slane %v1566, 2
    %v1568 = vmax.f32 %v1566, %v1567
    %v1569 = vrot.slane %v1568, 1
    %v1570 = vmax.f32 %v1568, %v1569
    %v1571 = vsub.f32 %v1237, %v1423
    %v1572 = vsub.f32 %v1238, %v1474
    %v1573 = vsub.f32 %v1239, %v1570
    %v1574 = vsub.f32 %v1240, %v1423
    %v1575 = vsub.f32 %v1241, %v1474
    %v1576 = vsub.f32 %v1242, %v1570
    %v1577 = vsub.f32 %v1243, %v1423
    %v1578 = vsub.f32 %v1244, %v1474
    %v1579 = vsub.f32 %v1245, %v1570
    %v1580 = vsub.f32 %v1246, %v1423
    %v1581 = vsub.f32 %v1247, %v1474
    %v1582 = vsub.f32 %v1248, %v1570
    %v1583 = vsub.f32 %v1249, %v1423
    %v1584 = vsub.f32 %v1250, %v1474
    %v1585 = vsub.f32 %v1251, %v1570
    %v1586 = vsub.f32 %v1252, %v1423
    %v1587 = vsub.f32 %v1253, %v1474
    %v1588 = vsub.f32 %v1254, %v1570
    %v1589 = vsub.f32 %v1255, %v1423
    %v1590 = vsub.f32 %v1256, %v1474
    %v1591 = vsub.f32 %v1257, %v1570
    %v1592 = vsub.f32 %v1258, %v1423
    %v1593 = vsub.f32 %v1259, %v1474
    %v1594 = vsub.f32 %v1260, %v1570
    %v1595 = vsub.f32 %v1261, %v1423
    %v1596 = vsub.f32 %v1262, %v1474
    %v1597 = vsub.f32 %v1263, %v1570
    %v1598 = vsub.f32 %v1264, %v1423
    %v1599 = vsub.f32 %v1265, %v1474
    %v1600 = vsub.f32 %v1266, %v1570
    %v1601 = vsub.f32 %v1267, %v1423
    %v1602 = vsub.f32 %v1268, %v1474
    %v1603 = vsub.f32 %v1269, %v1570
    %v1604 = vsub.f32 %v1270, %v1423
    %v1605 = vsub.f32 %v1271, %v1474
    %v1606 = vsub.f32 %v1272, %v1570
    %v1607 = vsub.f32 %v1273, %v1423
    %v1608 = vsub.f32 %v1274, %v1474
    %v1609 = vsub.f32 %v1275, %v1570
    %v1610 = vsub.f32 %v1276, %v1423
    %v1611 = vsub.f32 %v1277, %v1474
    %v1612 = vsub.f32 %v1278, %v1570
    %v1613 = vsub.f32 %v1279, %v1423
    %v1614 = vsub.f32 %v1280, %v1474
    %v1615 = vsub.f32 %v1281, %v1570
    %v1616 = vsub.f32 %v1282, %v1423
    %v1617 = vsub.f32 %v1283, %v1474
    %v1618 = vsub.f32 %v1284, %v1570
    %v1619 = vsub.f32 %v1285, %v1423
    %v1620 = vsub.f32 %v1286, %v1474
    %v1621 = vsub.f32 %v1287, %v1570
    %v1622 = vsub.f32 %v1288, %v1423
    %v1623 = vsub.f32 %v1289, %v1474
    %v1624 = vsub.f32 %v1290, %v1570
    %v1625 = vsub.f32 %v1291, %v1423
    %v1626 = vsub.f32 %v1292, %v1474
    %v1627 = vsub.f32 %v1293, %v1570
    %v1628 = vsub.f32 %v1294, %v1423
    %v1629 = vsub.f32 %v1295, %v1474
    %v1630 = vsub.f32 %v1296, %v1570
    %v1631 = vsub.f32 %v1297, %v1423
    %v1632 = vsub.f32 %v1298, %v1474
    %v1633 = vsub.f32 %v1299, %v1570
    %v1634 = vsub.f32 %v1300, %v1423
    %v1635 = vsub.f32 %v1301, %v1474
    %v1636 = vsub.f32 %v1302, %v1570
    %v1637 = vsub.f32 %v1303, %v1423
    %v1638 = vsub.f32 %v1304, %v1474
    %v1639 = vsub.f32 %v1305, %v1570
    %v1640 = vsub.f32 %v1306, %v1423
    %v1641 = vsub.f32 %v1307, %v1474
    %v1642 = vsub.f32 %v1308, %v1570
    %v1643 = vsub.f32 %v1309, %v1423
    %v1644 = vsub.f32 %v1310, %v1474
    %v1645 = vsub.f32 %v1311, %v1570
    %v1646 = vsub.f32 %v1312, %v1423
    %v1647 = vsub.f32 %v1313, %v1474
    %v1648 = vsub.f32 %v1314, %v1570
    %v1649 = vsub.f32 %v1315, %v1423
    %v1650 = vsub.f32 %v1316, %v1474
    %v1651 = vsub.f32 %v1317, %v1570
    %v1652 = vsub.f32 %v1318, %v1423
    %v1653 = vsub.f32 %v1319, %v1474
    %v1654 = vsub.f32 %v1320, %v1570
    %v1655 = vsub.f32 %v1321, %v1423
    %v1656 = vsub.f32 %v1322, %v1474
    %v1657 = vsub.f32 %v1323, %v1570
    %v1658 = vsub.f32 %v1324, %v1423
    %v1659 = vsub.f32 %v1325, %v1474
    %v1660 = vsub.f32 %v1326, %v1570
    %v1661 = vsub.f32 %v1327, %v1423
    %v1662 = vsub.f32 %v1328, %v1474
    %v1663 = vsub.f32 %v1329, %v1570
    %v1664 = vsub.f32 %v1330, %v1423
    %v1665 = vsub.f32 %v1331, %v1474
    %v1666 = vsub.f32 %v1332, %v1570
    %v1667 = vsub.f32 %v1333, %v1423
    %v1668 = vsub.f32 %v1334, %v1474
    %v1669 = vsub.f32 %v1335, %v1570
    %v1670 = vsub.f32 %v1336, %v1423
    %v1671 = vsub.f32 %v1337, %v1474
    %v1672 = vsub.f32 %v1338, %v1570
    %v1673 = vsub.f32 %v1339, %v1423
    %v1674 = vsub.f32 %v1340, %v1474
    %v1675 = vsub.f32 %v1341, %v1570
    %v1676 = vsub.f32 %v1342, %v1423
    %v1677 = vsub.f32 %v1343, %v1474
    %v1678 = vsub.f32 %v1344, %v1570
    %v1679 = vsub.f32 %v1345, %v1423
    %v1680 = vsub.f32 %v1346, %v1474
    %v1681 = vsub.f32 %v1347, %v1570
    %v1682 = vsub.f32 %v1348, %v1423
    %v1683 = vsub.f32 %v1349, %v1474
    %v1684 = vsub.f32 %v1350, %v1570
    %v1685 = vsub.f32 %v1351, %v1423
    %v1686 = vsub.f32 %v1352, %v1474
    %v1687 = vsub.f32 %v1353, %v1570
    %v1688 = vsub.f32 %v1354, %v1423
    %v1689 = vsub.f32 %v1355, %v1474
    %v1690 = vsub.f32 %v1356, %v1570
    %v1691 = vsub.f32 %v1357, %v1423
    %v1692 = vsub.f32 %v1358, %v1474
    %v1693 = vsub.f32 %v1359, %v1570
    %v1694 = vsub.f32 %v1360, %v1423
    %v1695 = vsub.f32 %v1361, %v1474
    %v1696 = vsub.f32 %v1362, %v1570
    %v1697 = vsub.f32 %v1363, %v1423
    %v1698 = vsub.f32 %v1364, %v1474
    %v1699 = vsub.f32 %v1365, %v1570
    %v1700 = vsub.f32 %v1366, %v1423
    %v1701 = vsub.f32 %v1367, %v1474
    %v1702 = vsub.f32 %v1368, %v1570
    %v1703 = vsub.f32 %v1369, %v1423
    %v1704 = vsub.f32 %v1370, %v1474
    %v1705 = vsub.f32 %v1371, %v1570
    %v1706 = vmul.f32 %v1571, 1.442695
    %v1707 = vpow.pop %v1706
    %v1708 = vmul.f32 %v1572, 1.442695
    %v1709 = vpow.pop %v1708
    %v1710 = vmul.f32 %v1573, 1.442695
    %v1711 = vpow.pop %v1710
    %v1712 = vmul.f32 %v1574, 1.442695
    %v1713 = vpow.pop %v1712
    %v1714 = vmul.f32 %v1575, 1.442695
    %v1715 = vpow.pop %v1714
    %v1716 = vmul.f32 %v1576, 1.442695
    %v1717 = vpow.pop %v1716
    %v1718 = vmul.f32 %v1577, 1.442695
    %v1719 = vpow.pop %v1718
    %v1720 = vmul.f32 %v1578, 1.442695
    %v1721 = vpow.pop %v1720
    %v1722 = vmul.f32 %v1579, 1.442695
    %v1723 = vpow.pop %v1722
    %v1724 = vmul.f32 %v1580, 1.442695
    %v1725 = vpow.pop %v1724
    %v1726 = vmul.f32 %v1581, 1.442695
    %v1727 = vpow.pop %v1726
    %v1728 = vmul.f32 %v1582, 1.442695
    %v1729 = vpow.pop %v1728
    %v1730 = vmul.f32 %v1583, 1.442695
    %v1731 = vpow.pop %v1730
    %v1732 = vmul.f32 %v1584, 1.442695
    %v1733 = vpow.pop %v1732
    %v1734 = vmul.f32 %v1585, 1.442695
    %v1735 = vpow.pop %v1734
    %v1736 = vmul.f32 %v1586, 1.442695
    %v1737 = vpow.pop %v1736
    %v1738 = vmul.f32 %v1587, 1.442695
    %v1739 = vpow.pop %v1738
    %v1740 = vmul.f32 %v1588, 1.442695
    %v1741 = vpow.pop %v1740
    %v1742 = vmul.f32 %v1589, 1.442695
    %v1743 = vpow.pop %v1742
    %v1744 = vmul.f32 %v1590, 1.442695
    %v1745 = vpow.pop %v1744
    %v1746 = vmul.f32 %v1591, 1.442695
    %v1747 = vpow.pop %v1746
    %v1748 = vmul.f32 %v1592, 1.442695
    %v1749 = vpow.pop %v1748
    %v1750 = vmul.f32 %v1593, 1.442695
    %v1751 = vpow.pop %v1750
    %v1752 = vmul.f32 %v1594, 1.442695
    %v1753 = vpow.pop %v1752
    %v1754 = vmul.f32 %v1595, 1.442695
    %v1755 = vpow.pop %v1754
    %v1756 = vmul.f32 %v1596, 1.442695
    %v1757 = vpow.pop %v1756
    %v1758 = vmul.f32 %v1597, 1.442695
    %v1759 = vpow.pop %v1758
    %v1760 = vmul.f32 %v1598, 1.442695
    %v1761 = vpow.pop %v1760
    %v1762 = vmul.f32 %v1599, 1.442695
    %v1763 = vpow.pop %v1762
    %v1764 = vmul.f32 %v1600, 1.442695
    %v1765 = vpow.pop %v1764
    %v1766 = vmul.f32 %v1601, 1.442695
    %v1767 = vpow.pop %v1766
    %v1768 = vmul.f32 %v1602, 1.442695
    %v1769 = vpow.pop %v1768
    %v1770 = vmul.f32 %v1603, 1.442695
    %v1771 = vpow.pop %v1770
    %v1772 = vmul.f32 %v1604, 1.442695
    %v1773 = vpow.pop %v1772
    %v1774 = vmul.f32 %v1605, 1.442695
    %v1775 = vpow.pop %v1774
    %v1776 = vmul.f32 %v1606, 1.442695
    %v1777 = vpow.pop %v1776
    %v1778 = vmul.f32 %v1607, 1.442695
    %v1779 = vpow.pop %v1778
    %v1780 = vmul.f32 %v1608, 1.442695
    %v1781 = vpow.pop %v1780
    %v1782 = vmul.f32 %v1609, 1.442695
    %v1783 = vpow.pop %v1782
    %v1784 = vmul.f32 %v1610, 1.442695
    %v1785 = vpow.pop %v1784
    %v1786 = vmul.f32 %v1611, 1.442695
    %v1787 = vpow.pop %v1786
    %v1788 = vmul.f32 %v1612, 1.442695
    %v1789 = vpow.pop %v1788
    %v1790 = vmul.f32 %v1613, 1.442695
    %v1791 = vpow.pop %v1790
    %v1792 = vmul.f32 %v1614, 1.442695
    %v1793 = vpow.pop %v1792
    %v1794 = vmul.f32 %v1615, 1.442695
    %v1795 = vpow.pop %v1794
    %v1796 = vmul.f32 %v1616, 1.442695
    %v1797 = vpow.pop %v1796
    %v1798 = vmul.f32 %v1617, 1.442695
    %v1799 = vpow.pop %v1798
    %v1800 = vmul.f32 %v1618, 1.442695
    %v1801 = vpow.pop %v1800
    %v1802 = vmul.f32 %v1619, 1.442695
    %v1803 = vpow.pop %v1802
    %v1804 = vmul.f32 %v1620, 1.442695
    %v1805 = vpow.pop %v1804
    %v1806 = vmul.f32 %v1621, 1.442695
    %v1807 = vpow.pop %v1806
    %v1808 = vmul.f32 %v1622, 1.442695
    %v1809 = vpow.pop %v1808
    %v1810 = vmul.f32 %v1623, 1.442695
    %v1811 = vpow.pop %v1810
    %v1812 = vmul.f32 %v1624, 1.442695
    %v1813 = vpow.pop %v1812
    %v1814 = vmul.f32 %v1625, 1.442695
    %v1815 = vpow.pop %v1814
    %v1816 = vmul.f32 %v1626, 1.442695
    %v1817 = vpow.pop %v1816
    %v1818 = vmul.f32 %v1627, 1.442695
    %v1819 = vpow.pop %v1818
    %v1820 = vmul.f32 %v1628, 1.442695
    %v1821 = vpow.pop %v1820
    %v1822 = vmul.f32 %v1629, 1.442695
    %v1823 = vpow.pop %v1822
    %v1824 = vmul.f32 %v1630, 1.442695
    %v1825 = vpow.pop %v1824
    %v1826 = vmul.f32 %v1631, 1.442695
    %v1827 = vpow.pop %v1826
    %v1828 = vmul.f32 %v1632, 1.442695
    %v1829 = vpow.pop %v1828
    %v1830 = vmul.f32 %v1633, 1.442695
    %v1831 = vpow.pop %v1830
    %v1832 = vmul.f32 %v1634, 1.442695
    %v1833 = vpow.pop %v1832
    %v1834 = vmul.f32 %v1635, 1.442695
    %v1835 = vpow.pop %v1834
    %v1836 = vmul.f32 %v1636, 1.442695
    %v1837 = vpow.pop %v1836
    %v1838 = vmul.f32 %v1637, 1.442695
    %v1839 = vpow.pop %v1838
    %v1840 = vmul.f32 %v1638, 1.442695
    %v1841 = vpow.pop %v1840
    %v1842 = vmul.f32 %v1639, 1.442695
    %v1843 = vpow.pop %v1842
    %v1844 = vmul.f32 %v1640, 1.442695
    %v1845 = vpow.pop %v1844
    %v1846 = vmul.f32 %v1641, 1.442695
    %v1847 = vpow.pop %v1846
    %v1848 = vmul.f32 %v1642, 1.442695
    %v1849 = vpow.pop %v1848
    %v1850 = vmul.f32 %v1643, 1.442695
    %v1851 = vpow.pop %v1850
    %v1852 = vmul.f32 %v1644, 1.442695
    %v1853 = vpow.pop %v1852
    %v1854 = vmul.f32 %v1645, 1.442695
    %v1855 = vpow.pop %v1854
    %v1856 = vmul.f32 %v1646, 1.442695
    %v1857 = vpow.pop %v1856
    %v1858 = vmul.f32 %v1647, 1.442695
    %v1859 = vpow.pop %v1858
    %v1860 = vmul.f32 %v1648, 1.442695
    %v1861 = vpow.pop %v1860
    %v1862 = vmul.f32 %v1649, 1.442695
    %v1863 = vpow.pop %v1862
    %v1864 = vmul.f32 %v1650, 1.442695
    %v1865 = vpow.pop %v1864
    %v1866 = vmul.f32 %v1651, 1.442695
    %v1867 = vpow.pop %v1866
    %v1868 = vmul.f32 %v1652, 1.442695
    %v1869 = vpow.pop %v1868
    %v1870 = vmul.f32 %v1653, 1.442695
    %v1871 = vpow.pop %v1870
    %v1872 = vmul.f32 %v1654, 1.442695
    %v1873 = vpow.pop %v1872
    %v1874 = vmul.f32 %v1655, 1.442695
    %v1875 = vpow.pop %v1874
    %v1876 = vmul.f32 %v1656, 1.442695
    %v1877 = vpow.pop %v1876
    %v1878 = vmul.f32 %v1657, 1.442695
    %v1879 = vpow.pop %v1878
    %v1880 = vmul.f32 %v1658, 1.442695
    %v1881 = vpow.pop %v1880
    %v1882 = vmul.f32 %v1659, 1.442695
    %v1883 = vpow.pop %v1882
    %v1884 = vmul.f32 %v1660, 1.442695
    %v1885 = vpow.pop %v1884
    %v1886 = vmul.f32 %v1661, 1.442695
    %v1887 = vpow.pop %v1886
    %v1888 = vmul.f32 %v1662, 1.442695
    %v1889 = vpow.pop %v1888
    %v1890 = vmul.f32 %v1663, 1.442695
    %v1891 = vpow.pop %v1890
    %v1892 = vmul.f32 %v1664, 1.442695
    %v1893 = vpow.pop %v1892
    %v1894 = vmul.f32 %v1665, 1.442695
    %v1895 = vpow.pop %v1894
    %v1896 = vmul.f32 %v1666, 1.442695
    %v1897 = vpow.pop %v1896
    %v1898 = vmul.f32 %v1667, 1.442695
    %v1899 = vpow.pop %v1898
    %v1900 = vmul.f32 %v1668, 1.442695
    %v1901 = vpow.pop %v1900
    %v1902 = vmul.f32 %v1669, 1.442695
    %v1903 = vpow.pop %v1902
    %v1904 = vmul.f32 %v1670, 1.442695
    %v1905 = vpow.pop %v1904
    %v1906 = vmul.f32 %v1671, 1.442695
    %v1907 = vpow.pop %v1906
    %v1908 = vmul.f32 %v1672, 1.442695
    %v1909 = vpow.pop %v1908
    %v1910 = vmul.f32 %v1673, 1.442695
    %v1911 = vpow.pop %v1910
    %v1912 = vmul.f32 %v1674, 1.442695
    %v1913 = vpow.pop %v1912
    %v1914 = vmul.f32 %v1675, 1.442695
    %v1915 = vpow.pop %v1914
    %v1916 = vmul.f32 %v1676, 1.442695
    %v1917 = vpow.pop %v1916
    %v1918 = vmul.f32 %v1677, 1.442695
    %v1919 = vpow.pop %v1918
    %v1920 = vmul.f32 %v1678, 1.442695
    %v1921 = vpow.pop %v1920
    %v1922 = vmul.f32 %v1679, 1.442695
    %v1923 = vpow.pop %v1922
    %v1924 = vmul.f32 %v1680, 1.442695
    %v1925 = vpow.pop %v1924
    %v1926 = vmul.f32 %v1681, 1.442695
    %v1927 = vpow.pop %v1926
    %v1928 = vmul.f32 %v1682, 1.442695
    %v1929 = vpow.pop %v1928
    %v1930 = vmul.f32 %v1683, 1.442695
    %v1931 = vpow.pop %v1930
    %v1932 = vmul.f32 %v1684, 1.442695
    %v1933 = vpow.pop %v1932
    %v1934 = vmul.f32 %v1685, 1.442695
    %v1935 = vpow.pop %v1934
    %v1936 = vmul.f32 %v1686, 1.442695
    %v1937 = vpow.pop %v1936
    %v1938 = vmul.f32 %v1687, 1.442695
    %v1939 = vpow.pop %v1938
    %v1940 = vmul.f32 %v1688, 1.442695
    %v1941 = vpow.pop %v1940
    %v1942 = vmul.f32 %v1689, 1.442695
    %v1943 = vpow.pop %v1942
    %v1944 = vmul.f32 %v1690, 1.442695
    %v1945 = vpow.pop %v1944
    %v1946 = vmul.f32 %v1691, 1.442695
    %v1947 = vpow.pop %v1946
    %v1948 = vmul.f32 %v1692, 1.442695
    %v1949 = vpow.pop %v1948
    %v1950 = vmul.f32 %v1693, 1.442695
    %v1951 = vpow.pop %v1950
    %v1952 = vmul.f32 %v1694, 1.442695
    %v1953 = vpow.pop %v1952
    %v1954 = vmul.f32 %v1695, 1.442695
    %v1955 = vpow.pop %v1954
    %v1956 = vmul.f32 %v1696, 1.442695
    %v1957 = vpow.pop %v1956
    %v1958 = vmul.f32 %v1697, 1.442695
    %v1959 = vpow.pop %v1958
    %v1960 = vmul.f32 %v1698, 1.442695
    %v1961 = vpow.pop %v1960
    %v1962 = vmul.f32 %v1699, 1.442695
    %v1963 = vpow.pop %v1962
    %v1964 = vmul.f32 %v1700, 1.442695
    %v1965 = vpow.pop %v1964
    %v1966 = vmul.f32 %v1701, 1.442695
    %v1967 = vpow.pop %v1966
    %v1968 = vmul.f32 %v1702, 1.442695
    %v1969 = vpow.pop %v1968
    %v1970 = vmul.f32 %v1703, 1.442695
    %v1971 = vpow.pop %v1970
    %v1972 = vmul.f32 %v1704, 1.442695
    %v1973 = vpow.pop %v1972
    %v1974 = vmul.f32 %v1705, 1.442695
    %v1975 = vpow.pop %v1974
    %v1976 = vadd.f32 %v1707, %v1713
    %v1977 = vadd.f32 %v1976, %v1719
    %v1978 = vadd.f32 %v1977, %v1725
    %v1979 = vadd.f32 %v1978, %v1731
    %v1980 = vadd.f32 %v1979, %v1737
    %v1981 = vadd.f32 %v1980, %v1743
    %v1982 = vadd.f32 %v1981, %v1749
    %v1983 = vadd.f32 %v1982, %v1755
    %v1984 = vadd.f32 %v1983, %v1761
    %v1985 = vadd.f32 %v1984, %v1767
    %v1986 = vadd.f32 %v1985, %v1773
    %v1987 = vadd.f32 %v1986, %v1779
    %v1988 = vadd.f32 %v1987, %v1785
    %v1989 = vadd.f32 %v1988, %v1791
    %v1990 = vadd.f32 %v1989, %v1797
    %v1991 = vadd.f32 %v1990, %v1803
    %v1992 = vadd.f32 %v1991, %v1809
    %v1993 = vadd.f32 %v1992, %v1815
    %v1994 = vadd.f32 %v1993, %v1821
    %v1995 = vadd.f32 %v1994, %v1827
    %v1996 = vadd.f32 %v1995, %v1833
    %v1997 = vadd.f32 %v1996, %v1839
    %v1998 = vadd.f32 %v1997, %v1845
    %v1999 = vadd.f32 %v1998, %v1851
    %v2000 = vadd.f32 %v1999, %v1857
    %v2001 = vadd.f32 %v2000, %v1863
    %v2002 = vadd.f32 %v2001, %v1869
    %v2003 = vadd.f32 %v2002, %v1875
    %v2004 = vadd.f32 %v2003, %v1881
    %v2005 = vadd.f32 %v2004, %v1887
    %v2006 = vadd.f32 %v2005, %v1893
    %v2007 = vadd.f32 %v2006, %v1899
    %v2008 = vadd.f32 %v2007, %v1905
    %v2009 = vadd.f32 %v2008, %v1911
    %v2010 = vadd.f32 %v2009, %v1917
    %v2011 = vadd.f32 %v2010, %v1923
    %v2012 = vadd.f32 %v2011, %v1929
    %v2013 = vadd.f32 %v2012, %v1935
    %v2014 = vadd.f32 %v2013, %v1941
    %v2015 = vadd.f32 %v2014, %v1947
    %v2016 = vadd.f32 %v2015, %v1953
    %v2017 = vadd.f32 %v2016, %v1959
    %v2018 = vadd.f32 %v2017, %v1965
    %v2019 = vsel %vm1414, %v1971, 0.0
    %v2020 = vadd.f32 %v2018, %v2019
    %v2021 = vrot.slane %v2020, 4
    %v2022 = vadd.f32 %v2020, %v2021
    %v2023 = vrot.slane %v2022, 2
    %v2024 = vadd.f32 %v2022, %v2023
    %v2025 = vrot.slane %v2024, 1
    %v2026 = vadd.f32 %v2024, %v2025
    %v2027 = vadd.f32 %v1709, %v1715
    %v2028 = vadd.f32 %v2027, %v1721
    %v2029 = vadd.f32 %v2028, %v1727
    %v2030 = vadd.f32 %v2029, %v1733
    %v2031 = vadd.f32 %v2030, %v1739
    %v2032 = vadd.f32 %v2031, %v1745
    %v2033 = vadd.f32 %v2032, %v1751
    %v2034 = vadd.f32 %v2033, %v1757
    %v2035 = vadd.f32 %v2034, %v1763
    %v2036 = vadd.f32 %v2035, %v1769
    %v2037 = vadd.f32 %v2036, %v1775
    %v2038 = vadd.f32 %v2037, %v1781
    %v2039 = vadd.f32 %v2038, %v1787
    %v2040 = vadd.f32 %v2039, %v1793
    %v2041 = vadd.f32 %v2040, %v1799
    %v2042 = vadd.f32 %v2041, %v1805
    %v2043 = vadd.f32 %v2042, %v1811
    %v2044 = vadd.f32 %v2043, %v1817
    %v2045 = vadd.f32 %v2044, %v1823
    %v2046 = vadd.f32 %v2045, %v1829
    %v2047 = vadd.f32 %v2046, %v1835
    %v2048 = vadd.f32 %v2047, %v1841
    %v2049 = vadd.f32 %v2048, %v1847
    %v2050 = vadd.f32 %v2049, %v1853
    %v2051 = vadd.f32 %v2050, %v1859
    %v2052 = vadd.f32 %v2051, %v1865
    %v2053 = vadd.f32 %v2052, %v1871
    %v2054 = vadd.f32 %v2053, %v1877
    %v2055 = vadd.f32 %v2054, %v1883
    %v2056 = vadd.f32 %v2055, %v1889
    %v2057 = vadd.f32 %v2056, %v1895
    %v2058 = vadd.f32 %v2057, %v1901
    %v2059 = vadd.f32 %v2058, %v1907
    %v2060 = vadd.f32 %v2059, %v1913
    %v2061 = vadd.f32 %v2060, %v1919
    %v2062 = vadd.f32 %v2061, %v1925
    %v2063 = vadd.f32 %v2062, %v1931
    %v2064 = vadd.f32 %v2063, %v1937
    %v2065 = vadd.f32 %v2064, %v1943
    %v2066 = vadd.f32 %v2065, %v1949
    %v2067 = vadd.f32 %v2066, %v1955
    %v2068 = vadd.f32 %v2067, %v1961
    %v2069 = vadd.f32 %v2068, %v1967
    %v2070 = vsel %vm1414, %v1973, 0.0
    %v2071 = vadd.f32 %v2069, %v2070
    %v2072 = vrot.slane %v2071, 4
    %v2073 = vadd.f32 %v2071, %v2072
    %v2074 = vrot.slane %v2073, 2
    %v2075 = vadd.f32 %v2073, %v2074
    %v2076 = vrot.slane %v2075, 1
    %v2077 = vadd.f32 %v2075, %v2076
    %v2078 = vsel %vm63, %v1711, 0.0
    %v2079 = vsel %vm63, %v1717, 0.0
    %v2080 = vadd.f32 %v2078, %v2079
    %v2081 = vsel %vm63, %v1723, 0.0
    %v2082 = vadd.f32 %v2080, %v2081
    %v2083 = vsel %vm63, %v1729, 0.0
    %v2084 = vadd.f32 %v2082, %v2083
    %v2085 = vsel %vm63, %v1735, 0.0
    %v2086 = vadd.f32 %v2084, %v2085
    %v2087 = vsel %vm63, %v1741, 0.0
    %v2088 = vadd.f32 %v2086, %v2087
    %v2089 = vsel %vm63, %v1747, 0.0
    %v2090 = vadd.f32 %v2088, %v2089
    %v2091 = vsel %vm63, %v1753, 0.0
    %v2092 = vadd.f32 %v2090, %v2091
    %v2093 = vsel %vm63, %v1759, 0.0
    %v2094 = vadd.f32 %v2092, %v2093
    %v2095 = vsel %vm63, %v1765, 0.0
    %v2096 = vadd.f32 %v2094, %v2095
    %v2097 = vsel %vm63, %v1771, 0.0
    %v2098 = vadd.f32 %v2096, %v2097
    %v2099 = vsel %vm63, %v1777, 0.0
    %v2100 = vadd.f32 %v2098, %v2099
    %v2101 = vsel %vm63, %v1783, 0.0
    %v2102 = vadd.f32 %v2100, %v2101
    %v2103 = vsel %vm63, %v1789, 0.0
    %v2104 = vadd.f32 %v2102, %v2103
    %v2105 = vsel %vm63, %v1795, 0.0
    %v2106 = vadd.f32 %v2104, %v2105
    %v2107 = vsel %vm63, %v1801, 0.0
    %v2108 = vadd.f32 %v2106, %v2107
    %v2109 = vsel %vm63, %v1807, 0.0
    %v2110 = vadd.f32 %v2108, %v2109
    %v2111 = vsel %vm63, %v1813, 0.0
    %v2112 = vadd.f32 %v2110, %v2111
    %v2113 = vsel %vm63, %v1819, 0.0
    %v2114 = vadd.f32 %v2112, %v2113
    %v2115 = vsel %vm63, %v1825, 0.0
    %v2116 = vadd.f32 %v2114, %v2115
    %v2117 = vsel %vm63, %v1831, 0.0
    %v2118 = vadd.f32 %v2116, %v2117
    %v2119 = vsel %vm63, %v1837, 0.0
    %v2120 = vadd.f32 %v2118, %v2119
    %v2121 = vsel %vm63, %v1843, 0.0
    %v2122 = vadd.f32 %v2120, %v2121
    %v2123 = vsel %vm63, %v1849, 0.0
    %v2124 = vadd.f32 %v2122, %v2123
    %v2125 = vsel %vm63, %v1855, 0.0
    %v2126 = vadd.f32 %v2124, %v2125
    %v2127 = vsel %vm63, %v1861, 0.0
    %v2128 = vadd.f32 %v2126, %v2127
    %v2129 = vsel %vm63, %v1867, 0.0
    %v2130 = vadd.f32 %v2128, %v2129
    %v2131 = vsel %vm63, %v1873, 0.0
    %v2132 = vadd.f32 %v2130, %v2131
    %v2133 = vsel %vm63, %v1879, 0.0
    %v2134 = vadd.f32 %v2132, %v2133
    %v2135 = vsel %vm63, %v1885, 0.0
    %v2136 = vadd.f32 %v2134, %v2135
    %v2137 = vsel %vm63, %v1891, 0.0
    %v2138 = vadd.f32 %v2136, %v2137
    %v2139 = vsel %vm63, %v1897, 0.0
    %v2140 = vadd.f32 %v2138, %v2139
    %v2141 = vsel %vm63, %v1903, 0.0
    %v2142 = vadd.f32 %v2140, %v2141
    %v2143 = vsel %vm63, %v1909, 0.0
    %v2144 = vadd.f32 %v2142, %v2143
    %v2145 = vsel %vm63, %v1915, 0.0
    %v2146 = vadd.f32 %v2144, %v2145
    %v2147 = vsel %vm63, %v1921, 0.0
    %v2148 = vadd.f32 %v2146, %v2147
    %v2149 = vsel %vm63, %v1927, 0.0
    %v2150 = vadd.f32 %v2148, %v2149
    %v2151 = vsel %vm63, %v1933, 0.0
    %v2152 = vadd.f32 %v2150, %v2151
    %v2153 = vsel %vm63, %v1939, 0.0
    %v2154 = vadd.f32 %v2152, %v2153
    %v2155 = vsel %vm63, %v1945, 0.0
    %v2156 = vadd.f32 %v2154, %v2155
    %v2157 = vsel %vm63, %v1951, 0.0
    %v2158 = vadd.f32 %v2156, %v2157
    %v2159 = vsel %vm63, %v1957, 0.0
    %v2160 = vadd.f32 %v2158, %v2159
    %v2161 = vsel %vm63, %v1963, 0.0
    %v2162 = vadd.f32 %v2160, %v2161
    %v2163 = vsel %vm63, %v1969, 0.0
    %v2164 = vadd.f32 %v2162, %v2163
    %v2165 = vsel %vm1561, %v1975, 0.0
    %v2166 = vadd.f32 %v2164, %v2165
    %v2167 = vrot.slane %v2166, 4
    %v2168 = vadd.f32 %v2166, %v2167
    %v2169 = vrot.slane %v2168, 2
    %v2170 = vadd.f32 %v2168, %v2169
    %v2171 = vrot.slane %v2170, 1
    %v2172 = vadd.f32 %v2170, %v2171
    %v2173 = vrcp.pop %v2026
    %v2174 = vmul.f32 1.0, %v2173
    %v2175 = vrcp.pop %v2077
    %v2176 = vmul.f32 1.0, %v2175
    %v2177 = vrcp.pop %v2172
    %v2178 = vmul.f32 1.0, %v2177
    %v2179 = vld [vmem:[%s6] sm:$0xff]
    %v2180 = vld [vmem:[%s6 + $0x8] sm:$0xff]
    %v2181 = vld [vmem:[%s6 + $0x10] sm:$0xff]
    %v2182 = vld [vmem:[%s6 + $0x18] sm:$0xff]
    %v2183 = vld [vmem:[%s6 + $0x20] sm:$0xff]
    %v2184 = vld [vmem:[%s6 + $0x28] sm:$0xff]
    %v2185 = vld [vmem:[%s6 + $0x30] sm:$0x3]
    %v2186 = vld [vmem:[%s6 + $0x38] sm:$0x3]
    %v2187 = vld [vmem:[%s6 + $0x40] sm:$0x3]
    %2188 = vst [vmem:[#allocation2] sm:$0xff] %v2179
    %2189 = vst [vmem:[#allocation2 + $0x8] sm:$0xff] %v2180
    %2190 = vst.msk [vmem:[#allocation2 + $0x10] sm:$0xff] %vm63, %v2181
    %2191 = vst [vmem:[#allocation2 + $0x18] sm:$0xff] %v2182
    %2192 = vst [vmem:[#allocation2 + $0x20] sm:$0xff] %v2183
    %2193 = vst.msk [vmem:[#allocation2 + $0x28] sm:$0xff] %vm63, %v2184
    %2194 = vst [vmem:[#allocation2 + $0x30] sm:$0x3] %v2185
    %2195 = vst [vmem:[#allocation2 + $0x38] sm:$0x3] %v2186
    %vm2196 = vcmask 828416
    %2197 = vst.msk [vmem:[#allocation2 + $0x40] sm:$0x3] %vm2196, %v2187
    %2198 = vst [vmem:[#allocation2 + $0x48] sm:$0xff] %v2179
    %2199 = vst [vmem:[#allocation2 + $0x50] sm:$0xff] %v2180
    %2200 = vst.msk [vmem:[#allocation2 + $0x58] sm:$0xff] %vm63, %v2181
    %2201 = vst [vmem:[#allocation2 + $0x60] sm:$0xff] %v2182
    %2202 = vst [vmem:[#allocation2 + $0x68] sm:$0xff] %v2183
    %2203 = vst.msk [vmem:[#allocation2 + $0x70] sm:$0xff] %vm63, %v2184
    %2204 = vst [vmem:[#allocation2 + $0x78] sm:$0x3] %v2185
    %2205 = vst [vmem:[#allocation2 + $0x80] sm:$0x3] %v2186
    %2206 = vst.msk [vmem:[#allocation2 + $0x88] sm:$0x3] %vm2196, %v2187
    %2207 = vst [vmem:[#allocation2 + $0x90] sm:$0xff] %v2179
    %2208 = vst [vmem:[#allocation2 + $0x98] sm:$0xff] %v2180
    %2209 = vst.msk [vmem:[#allocation2 + $0xa0] sm:$0xff] %vm63, %v2181
    %2210 = vst [vmem:[#allocation2 + $0xa8] sm:$0xff] %v2182
    %2211 = vst [vmem:[#allocation2 + $0xb0] sm:$0xff] %v2183
    %2212 = vst.msk [vmem:[#allocation2 + $0xb8] sm:$0xff] %vm63, %v2184
    %2213 = vst [vmem:[#allocation2 + $0xc0] sm:$0x3] %v2185
    %2214 = vst [vmem:[#allocation2 + $0xc8] sm:$0x3] %v2186
    %2215 = vst.msk [vmem:[#allocation2 + $0xd0] sm:$0x3] %vm2196, %v2187
    %v2217 = vsel %vm63, %v2181, 0
    %v2220 = vsel %vm63, %v2184, 0
    %v2223 = vsel %vm63, %v2187, 0
    %v2226 = vsel %vm1414, %v410, 0
    %v2229 = vsel %vm1414, %v411, 0
    %v2232 = vsel %vm1414, %v412, 0
    %2234 = vmatprep.subr.mxu0 %v279
    %2235 = vmatpush1.msra.mxu0 %v278
    %2236 = vmatprep.subr.mxu0 %v282
    %2237 = vmatpush1.msra.mxu0 %v281
    %2238 = vmatprep.subr.mxu0 %v285
    %2239 = vmatpush1.msra.mxu0 %v284
    %2240 = vmatprep.subr.mxu0 %v288
    %2241 = vmatpush1.msra.mxu0 %v287
    %2242 = vmatprep.subr.mxu0 %v291
    %2243 = vmatpush1.msra.mxu0 %v290
    %2244 = vmatprep.subr.mxu0 %v294
    %2245 = vmatpush1.msra.mxu0 %v293
    %2246 = vmatprep.subr.mxu0 %v297
    %2247 = vmatpush1.msra.mxu0 %v296
    %2248 = vmatprep.subr.mxu0 %v300
    %2249 = vmatpush1.msra.mxu0 %v299
    %2250 = vmatprep.subr.mxu0 %v303
    %2251 = vmatpush1.msra.mxu0 %v302
    %2252 = vmatprep.subr.mxu0 %v306
    %2253 = vmatpush1.msra.mxu0 %v305
    %2254 = vmatprep.subr.mxu0 %v309
    %2255 = vmatpush1.msra.mxu0 %v308
    %2256 = vmatprep.subr.mxu0 %v312
    %2257 = vmatpush1.msra.mxu0 %v311
    %2258 = vmatprep.subr.mxu0 %v315
    %2259 = vmatpush1.msra.mxu0 %v314
    %2260 = vmatprep.subr.mxu0 %v318
    %2261 = vmatpush1.msra.mxu0 %v317
    %2262 = vmatprep.subr.mxu0 %v321
    %2263 = vmatpush1.msra.mxu0 %v320
    %2264 = vmatprep.subr.mxu0 %v324
    %2265 = vmatpush1.msra.mxu0 %v323
    %2266 = vmatprep.subr.mxu0 %v327
    %2267 = vmatpush1.msra.mxu0 %v326
    %2268 = vmatprep.subr.mxu0 %v330
    %2269 = vmatpush1.msra.mxu0 %v329
    %2270 = vmatprep.subr.mxu0 %v333
    %2271 = vmatpush1.msra.mxu0 %v332
    %2272 = vmatprep.subr.mxu0 %v336
    %2273 = vmatpush1.msra.mxu0 %v335
    %2274 = vmatprep.subr.mxu0 %v339
    %2275 = vmatpush1.msra.mxu0 %v338
    %2276 = vmatprep.subr.mxu0 %v342
    %2277 = vmatpush1.msra.mxu0 %v341
    %2278 = vmatprep.subr.mxu0 %v345
    %2279 = vmatpush1.msra.mxu0 %v344
    %2280 = vmatprep.subr.mxu0 %v348
    %2281 = vmatpush1.msra.mxu0 %v347
    %2282 = vmatprep.subr.mxu0 %v351
    %2283 = vmatpush1.msra.mxu0 %v350
    %2284 = vmatprep.subr.mxu0 %v354
    %2285 = vmatpush1.msra.mxu0 %v353
    %2286 = vmatprep.subr.mxu0 %v357
    %2287 = vmatpush1.msra.mxu0 %v356
    %2288 = vmatprep.subr.mxu0 %v360
    %2289 = vmatpush1.msra.mxu0 %v359
    %2290 = vmatprep.subr.mxu0 %v363
    %2291 = vmatpush1.msra.mxu0 %v362
    %2292 = vmatprep.subr.mxu0 %v366
    %2293 = vmatpush1.msra.mxu0 %v365
    %2294 = vmatprep.subr.mxu0 %v369
    %2295 = vmatpush1.msra.mxu0 %v368
    %2296 = vmatprep.subr.mxu0 %v372
    %2297 = vmatpush1.msra.mxu0 %v371
    %2298 = vmatprep.mubr.f32.mxu0 %v2180
    %2299 = vmatmul.mubr.f32.gmra.mrb[0].mxu0 %v2179
    %v2300 = vpop.f32.mrb[0].mxu0
    %v2301 = vadd.f32 0.0, %v2300
    %v2302 = vpop.f32.mrb[0].mxu0
    %v2303 = vadd.f32 0.0, %v2302
    %2304 = vmatprep.mubr.f32.mxu0 %v2183
    %2305 = vmatmul.mubr.f32.gmra.mrb[0].mxu0 %v2182
    %v2306 = vpop.f32.mrb[0].mxu0
    %v2307 = vadd.f32 0.0, %v2306
    %v2308 = vpop.f32.mrb[0].mxu0
    %v2309 = vadd.f32 0.0, %v2308
    %2310 = vmatprep.mubr.f32.mxu0 %v2186
    %2311 = vmatmul.mubr.f32.gmra.mrb[0].mxu0 %v2185
    %v2312 = vpop.f32.mrb[0].mxu0
    %v2313 = vadd.f32 0.0, %v2312
    %v2314 = vpop.f32.mrb[0].mxu0
    %v2315 = vadd.f32 0.0, %v2314
    %2316 = vdwg.mxu0
    %2317 = vmatprep.subr.mxu0 %v375
    %2318 = vmatpush1.msra.mxu0 %v374
    %2319 = vmatprep.subr.mxu0 %v378
    %2320 = vmatpush1.msra.mxu0 %v377
    %2321 = vmatprep.subr.mxu0 %v381
    %2322 = vmatpush1.msra.mxu0 %v380
    %2323 = vmatprep.subr.mxu0 %v384
    %2324 = vmatpush1.msra.mxu0 %v383
    %2325 = vmatprep.subr.mxu0 %v387
    %2326 = vmatpush1.msra.mxu0 %v386
    %2327 = vmatprep.subr.mxu0 %v390
    %2328 = vmatpush1.msra.mxu0 %v389
    %2329 = vmatprep.subr.mxu0 %v393
    %2330 = vmatpush1.msra.mxu0 %v392
    %2331 = vmatprep.subr.mxu0 %v396
    %2332 = vmatpush1.msra.mxu0 %v395
    %2333 = vmatprep.subr.mxu0 %v399
    %2334 = vmatpush1.msra.mxu0 %v398
    %2335 = vmatprep.subr.mxu0 %v402
    %2336 = vmatpush1.msra.mxu0 %v401
    %2337 = vmatprep.subr.mxu0 %v405
    %2338 = vmatpush1.msra.mxu0 %v404
    %2339 = vmatprep.subr.mxu0 %v408
    %2340 = vmatpush1.msra.mxu0 %v407
    %2341 = vmatprep.subr.mxu0 %v2229
    %2342 = vmatpush1.msra.mxu0 %v2226
    %2343 = vmatprep.subr.mxu0 0.0
    %2344 = vmatpush1.msra.mxu0 0.0
    %2345 = vmatprep.subr.mxu0 0.0
    %2346 = vmatpush1.msra.mxu0 0.0
    %2347 = vmatprep.subr.mxu0 0.0
    %2348 = vmatpush1.msra.mxu0 0.0
    %2349 = vmatprep.subr.mxu0 0.0
    %2350 = vmatpush1.msra.mxu0 0.0
    %2351 = vmatprep.subr.mxu0 0.0
    %2352 = vmatpush1.msra.mxu0 0.0
    %2353 = vmatprep.subr.mxu0 0.0
    %2354 = vmatpush1.msra.mxu0 0.0
    %2355 = vmatprep.subr.mxu0 0.0
    %2356 = vmatpush1.msra.mxu0 0.0
    %2357 = vmatprep.subr.mxu0 0.0
    %2358 = vmatpush1.msra.mxu0 0.0
    %2359 = vmatprep.subr.mxu0 0.0
    %2360 = vmatpush1.msra.mxu0 0.0
    %2361 = vmatprep.subr.mxu0 0.0
    %2362 = vmatpush1.msra.mxu0 0.0
    %2363 = vmatprep.subr.mxu0 0.0
    %2364 = vmatpush1.msra.mxu0 0.0
    %2365 = vmatprep.subr.mxu0 0.0
    %2366 = vmatpush1.msra.mxu0 0.0
    %2367 = vmatprep.subr.mxu0 0.0
    %2368 = vmatpush1.msra.mxu0 0.0
    %2369 = vmatprep.subr.mxu0 0.0
    %2370 = vmatpush1.msra.mxu0 0.0
    %2371 = vmatprep.subr.mxu0 0.0
    %2372 = vmatpush1.msra.mxu0 0.0
    %2373 = vmatprep.subr.mxu0 0.0
    %2374 = vmatpush1.msra.mxu0 0.0
    %2375 = vmatprep.subr.mxu0 0.0
    %2376 = vmatpush1.msra.mxu0 0.0
    %2377 = vmatprep.subr.mxu0 0.0
    %2378 = vmatpush1.msra.mxu0 0.0
    %2379 = vmatprep.subr.mxu0 0.0
    %2380 = vmatpush1.msra.mxu0 0.0
    %2381 = vmatprep.mubr.f32.mxu0 0.0
    %2382 = vmatmul.mubr.f32.gmra.mrb[0].mxu0 %v2217
    %v2383 = vpop.f32.mrb[0].mxu0
    %v2384 = vadd.f32 %v2301, %v2383
    %v2385 = vpop.f32.mrb[0].mxu0
    %v2386 = vadd.f32 %v2303, %v2385
    %2387 = vmatprep.mubr.f32.mxu0 0.0
    %2388 = vmatmul.mubr.f32.gmra.mrb[0].mxu0 %v2220
    %v2389 = vpop.f32.mrb[0].mxu0
    %v2390 = vadd.f32 %v2307, %v2389
    %v2391 = vpop.f32.mrb[0].mxu0
    %v2392 = vadd.f32 %v2309, %v2391
    %2393 = vmatprep.mubr.f32.mxu0 0.0
    %2394 = vmatmul.mubr.f32.gmra.mrb[0].mxu0 %v2223
    %v2395 = vpop.f32.mrb[0].mxu0
    %v2396 = vadd.f32 %v2313, %v2395
    %v2397 = vpop.f32.mrb[0].mxu0
    %v2398 = vadd.f32 %v2315, %v2397
    %2399 = vdwg.mxu0
    %2400 = vmatprep.subr.mxu0 0.0
    %2401 = vmatpush1.msra.mxu0 %v280
    %2402 = vmatprep.subr.mxu0 0.0
    %2403 = vmatpush1.msra.mxu0 %v283
    %2404 = vmatprep.subr.mxu0 0.0
    %2405 = vmatpush1.msra.mxu0 %v286
    %2406 = vmatprep.subr.mxu0 0.0
    %2407 = vmatpush1.msra.mxu0 %v289
    %2408 = vmatprep.subr.mxu0 0.0
    %2409 = vmatpush1.msra.mxu0 %v292
    %2410 = vmatprep.subr.mxu0 0.0
    %2411 = vmatpush1.msra.mxu0 %v295
    %2412 = vmatprep.subr.mxu0 0.0
    %2413 = vmatpush1.msra.mxu0 %v298
    %2414 = vmatprep.subr.mxu0 0.0
    %2415 = vmatpush1.msra.mxu0 %v301
    %2416 = vmatprep.subr.mxu0 0.0
    %2417 = vmatpush1.msra.mxu0 %v304
    %2418 = vmatprep.subr.mxu0 0.0
    %2419 = vmatpush1.msra.mxu0 %v307
    %2420 = vmatprep.subr.mxu0 0.0
    %2421 = vmatpush1.msra.mxu0 %v310
    %2422 = vmatprep.subr.mxu0 0.0
    %2423 = vmatpush1.msra.mxu0 %v313
    %2424 = vmatprep.subr.mxu0 0.0
    %2425 = vmatpush1.msra.mxu0 %v316
    %2426 = vmatprep.subr.mxu0 0.0
    %2427 = vmatpush1.msra.mxu0 %v319
    %2428 = vmatprep.subr.mxu0 0.0
    %2429 = vmatpush1.msra.mxu0 %v322
    %2430 = vmatprep.subr.mxu0 0.0
    %2431 = vmatpush1.msra.mxu0 %v325
    %2432 = vmatprep.subr.mxu0 0.0
    %2433 = vmatpush1.msra.mxu0 %v328
    %2434 = vmatprep.subr.mxu0 0.0
    %2435 = vmatpush1.msra.mxu0 %v331
    %2436 = vmatprep.subr.mxu0 0.0
    %2437 = vmatpush1.msra.mxu0 %v334
    %2438 = vmatprep.subr.mxu0 0.0
    %2439 = vmatpush1.msra.mxu0 %v337
    %2440 = vmatprep.subr.mxu0 0.0
    %2441 = vmatpush1.msra.mxu0 %v340
    %2442 = vmatprep.subr.mxu0 0.0
    %2443 = vmatpush1.msra.mxu0 %v343
    %2444 = vmatprep.subr.mxu0 0.0
    %2445 = vmatpush1.msra.mxu0 %v346
    %2446 = vmatprep.subr.mxu0 0.0
    %2447 = vmatpush1.msra.mxu0 %v349
    %2448 = vmatprep.subr.mxu0 0.0
    %2449 = vmatpush1.msra.mxu0 %v352
    %2450 = vmatprep.subr.mxu0 0.0
    %2451 = vmatpush1.msra.mxu0 %v355
    %2452 = vmatprep.subr.mxu0 0.0
    %2453 = vmatpush1.msra.mxu0 %v358
    %2454 = vmatprep.subr.mxu0 0.0
    %2455 = vmatpush1.msra.mxu0 %v361
    %2456 = vmatprep.subr.mxu0 0.0
    %2457 = vmatpush1.msra.mxu0 %v364
    %2458 = vmatprep.subr.mxu0 0.0
    %2459 = vmatpush1.msra.mxu0 %v367
    %2460 = vmatprep.subr.mxu0 0.0
    %2461 = vmatpush1.msra.mxu0 %v370
    %2462 = vmatprep.subr.mxu0 0.0
    %2463 = vmatpush1.msra.mxu0 %v373
    %2464 = vmatprep.mubr.f32.mxu0 %v2180
    %2465 = vmatmul.mubr.f32.gmra.mrb[0].mxu0 %v2179
    %v2466 = vpop.f32.mrb[0].mxu0
    %v2467 = vadd.f32 0.0, %v2466
    %v2468 = vpop.f32.mrb[0].mxu0
    %2469 = vmatprep.mubr.f32.mxu0 %v2183
    %2470 = vmatmul.mubr.f32.gmra.mrb[0].mxu0 %v2182
    %v2471 = vpop.f32.mrb[0].mxu0
    %v2472 = vadd.f32 0.0, %v2471
    %v2473 = vpop.f32.mrb[0].mxu0
    %2474 = vmatprep.mubr.f32.mxu0 %v2186
    %2475 = vmatmul.mubr.f32.gmra.mrb[0].mxu0 %v2185
    %v2476 = vpop.f32.mrb[0].mxu0
    %v2477 = vadd.f32 0.0, %v2476
    %v2478 = vpop.f32.mrb[0].mxu0
    %2479 = vdwg.mxu0
    %2480 = vmatprep.subr.mxu0 0.0
    %2481 = vmatpush1.msra.mxu0 %v376
    %2482 = vmatprep.subr.mxu0 0.0
    %2483 = vmatpush1.msra.mxu0 %v379
    %2484 = vmatprep.subr.mxu0 0.0
    %2485 = vmatpush1.msra.mxu0 %v382
    %2486 = vmatprep.subr.mxu0 0.0
    %2487 = vmatpush1.msra.mxu0 %v385
    %2488 = vmatprep.subr.mxu0 0.0
    %2489 = vmatpush1.msra.mxu0 %v388
    %2490 = vmatprep.subr.mxu0 0.0
    %2491 = vmatpush1.msra.mxu0 %v391
    %2492 = vmatprep.subr.mxu0 0.0
    %2493 = vmatpush1.msra.mxu0 %v394
    %2494 = vmatprep.subr.mxu0 0.0
    %2495 = vmatpush1.msra.mxu0 %v397
    %2496 = vmatprep.subr.mxu0 0.0
    %2497 = vmatpush1.msra.mxu0 %v400
    %2498 = vmatprep.subr.mxu0 0.0
    %2499 = vmatpush1.msra.mxu0 %v403
    %2500 = vmatprep.subr.mxu0 0.0
    %2501 = vmatpush1.msra.mxu0 %v406
    %2502 = vmatprep.subr.mxu0 0.0
    %2503 = vmatpush1.msra.mxu0 %v409
    %2504 = vmatprep.subr.mxu0 0.0
    %2505 = vmatpush1.msra.mxu0 %v2232
    %2506 = vmatprep.subr.mxu0 0.0
    %2507 = vmatpush1.msra.mxu0 0.0
    %2508 = vmatprep.subr.mxu0 0.0
    %2509 = vmatpush1.msra.mxu0 0.0
    %2510 = vmatprep.subr.mxu0 0.0
    %2511 = vmatpush1.msra.mxu0 0.0
    %2512 = vmatprep.subr.mxu0 0.0
    %2513 = vmatpush1.msra.mxu0 0.0
    %2514 = vmatprep.subr.mxu0 0.0
    %2515 = vmatpush1.msra.mxu0 0.0
    %2516 = vmatprep.subr.mxu0 0.0
    %2517 = vmatpush1.msra.mxu0 0.0
    %2518 = vmatprep.subr.mxu0 0.0
    %2519 = vmatpush1.msra.mxu0 0.0
    %2520 = vmatprep.subr.mxu0 0.0
    %2521 = vmatpush1.msra.mxu0 0.0
    %2522 = vmatprep.subr.mxu0 0.0
    %2523 = vmatpush1.msra.mxu0 0.0
    %2524 = vmatprep.subr.mxu0 0.0
    %2525 = vmatpush1.msra.mxu0 0.0
    %2526 = vmatprep.subr.mxu0 0.0
    %2527 = vmatpush1.msra.mxu0 0.0
    %2528 = vmatprep.subr.mxu0 0.0
    %2529 = vmatpush1.msra.mxu0 0.0
    %2530 = vmatprep.subr.mxu0 0.0
    %2531 = vmatpush1.msra.mxu0 0.0
    %2532 = vmatprep.subr.mxu0 0.0
    %2533 = vmatpush1.msra.mxu0 0.0
    %2534 = vmatprep.subr.mxu0 0.0
    %2535 = vmatpush1.msra.mxu0 0.0
    %2536 = vmatprep.subr.mxu0 0.0
    %2537 = vmatpush1.msra.mxu0 0.0
    %2538 = vmatprep.subr.mxu0 0.0
    %2539 = vmatpush1.msra.mxu0 0.0
    %2540 = vmatprep.subr.mxu0 0.0
    %2541 = vmatpush1.msra.mxu0 0.0
    %2542 = vmatprep.subr.mxu0 0.0
    %2543 = vmatpush1.msra.mxu0 0.0
    %2544 = vmatprep.mubr.f32.mxu0 0.0
    %2545 = vmatmul.mubr.f32.gmra.mrb[0].mxu0 %v2217
    %v2546 = vpop.f32.mrb[0].mxu0
    %v2547 = vadd.f32 %v2467, %v2546
    %v2548 = vpop.f32.mrb[0].mxu0
    %2549 = vmatprep.mubr.f32.mxu0 0.0
    %2550 = vmatmul.mubr.f32.gmra.mrb[0].mxu0 %v2220
    %v2551 = vpop.f32.mrb[0].mxu0
    %v2552 = vadd.f32 %v2472, %v2551
    %v2553 = vpop.f32.mrb[0].mxu0
    %2554 = vmatprep.mubr.f32.mxu0 0.0
    %2555 = vmatmul.mubr.f32.gmra.mrb[0].mxu0 %v2223
    %v2556 = vpop.f32.mrb[0].mxu0
    %v2557 = vadd.f32 %v2477, %v2556
    %v2558 = vpop.f32.mrb[0].mxu0
    %2559 = vdwg.mxu0
    %v2561 = vlaneseq
    %v2562 = vshrl.u32 %v2561, 7
    %v2563 = vsub.s32 0, %v2562
    %v2564 = vrot.slane %v413, %v2563
    %v2565 = vlaneseq
    %v2566 = vshrl.u32 %v2565, 7
    %v2567 = vsub.s32 1, %v2566
    %v2568 = vrot.slane %v413, %v2567
    %v2569 = vlaneseq
    %v2570 = vshrl.u32 %v2569, 7
    %v2571 = vsub.s32 2, %v2570
    %v2572 = vrot.slane %v413, %v2571
    %v2576 = vmul.f32 %v2384, %v2564
    %v2577 = vmul.f32 %v2386, %v2568
    %v2578 = vmul.f32 %v2547, %v2572
    %v2579 = vmul.f32 %v2390, %v2564
    %v2580 = vmul.f32 %v2392, %v2568
    %v2581 = vmul.f32 %v2552, %v2572
    %v2582 = vmul.f32 %v2396, %v2564
    %v2583 = vmul.f32 %v2398, %v2568
    %v2584 = vmul.f32 %v2557, %v2572
    %v2586 = vsel %vm1414, %v275, 0
    %v2589 = vsel %vm1414, %v276, 0
    %v2592 = vsel %vm1414, %v277, 0
    %2594 = vmatprep.subr.mxu0 %v144
    %2595 = vmatpush1.msra.mxu0 %v143
    %2596 = vmatprep.subr.mxu0 %v147
    %2597 = vmatpush1.msra.mxu0 %v146
    %2598 = vmatprep.subr.mxu0 %v150
    %2599 = vmatpush1.msra.mxu0 %v149
    %2600 = vmatprep.subr.mxu0 %v153
    %2601 = vmatpush1.msra.mxu0 %v152
    %2602 = vmatprep.subr.mxu0 %v156
    %2603 = vmatpush1.msra.mxu0 %v155
    %2604 = vmatprep.subr.mxu0 %v159
    %2605 = vmatpush1.msra.mxu0 %v158
    %2606 = vmatprep.subr.mxu0 %v162
    %2607 = vmatpush1.msra.mxu0 %v161
    %2608 = vmatprep.subr.mxu0 %v165
    %2609 = vmatpush1.msra.mxu0 %v164
    %2610 = vmatprep.subr.mxu0 %v168
    %2611 = vmatpush1.msra.mxu0 %v167
    %2612 = vmatprep.subr.mxu0 %v171
    %2613 = vmatpush1.msra.mxu0 %v170
    %2614 = vmatprep.subr.mxu0 %v174
    %2615 = vmatpush1.msra.mxu0 %v173
    %2616 = vmatprep.subr.mxu0 %v177
    %2617 = vmatpush1.msra.mxu0 %v176
    %2618 = vmatprep.subr.mxu0 %v180
    %2619 = vmatpush1.msra.mxu0 %v179
    %2620 = vmatprep.subr.mxu0 %v183
    %2621 = vmatpush1.msra.mxu0 %v182
    %2622 = vmatprep.subr.mxu0 %v186
    %2623 = vmatpush1.msra.mxu0 %v185
    %2624 = vmatprep.subr.mxu0 %v189
    %2625 = vmatpush1.msra.mxu0 %v188
    %2626 = vmatprep.subr.mxu0 %v192
    %2627 = vmatpush1.msra.mxu0 %v191
    %2628 = vmatprep.subr.mxu0 %v195
    %2629 = vmatpush1.msra.mxu0 %v194
    %2630 = vmatprep.subr.mxu0 %v198
    %2631 = vmatpush1.msra.mxu0 %v197
    %2632 = vmatprep.subr.mxu0 %v201
    %2633 = vmatpush1.msra.mxu0 %v200
    %2634 = vmatprep.subr.mxu0 %v204
    %2635 = vmatpush1.msra.mxu0 %v203
    %2636 = vmatprep.subr.mxu0 %v207
    %2637 = vmatpush1.msra.mxu0 %v206
    %2638 = vmatprep.subr.mxu0 %v210
    %2639 = vmatpush1.msra.mxu0 %v209
    %2640 = vmatprep.subr.mxu0 %v213
    %2641 = vmatpush1.msra.mxu0 %v212
    %2642 = vmatprep.subr.mxu0 %v216
    %2643 = vmatpush1.msra.mxu0 %v215
    %2644 = vmatprep.subr.mxu0 %v219
    %2645 = vmatpush1.msra.mxu0 %v218
    %2646 = vmatprep.subr.mxu0 %v222
    %2647 = vmatpush1.msra.mxu0 %v221
    %2648 = vmatprep.subr.mxu0 %v225
    %2649 = vmatpush1.msra.mxu0 %v224
    %2650 = vmatprep.subr.mxu0 %v228
    %2651 = vmatpush1.msra.mxu0 %v227
    %2652 = vmatprep.subr.mxu0 %v231
    %2653 = vmatpush1.msra.mxu0 %v230
    %2654 = vmatprep.subr.mxu0 %v234
    %2655 = vmatpush1.msra.mxu0 %v233
    %2656 = vmatprep.subr.mxu0 %v237
    %2657 = vmatpush1.msra.mxu0 %v236
    %2658 = vmatprep.mubr.f32.mxu0 %v2180
    %2659 = vmatmul.mubr.f32.gmra.mrb[0].mxu0 %v2179
    %v2660 = vpop.f32.mrb[0].mxu0
    %v2661 = vadd.f32 0.0, %v2660
    %v2662 = vpop.f32.mrb[0].mxu0
    %v2663 = vadd.f32 0.0, %v2662
    %2664 = vmatprep.mubr.f32.mxu0 %v2183
    %2665 = vmatmul.mubr.f32.gmra.mrb[0].mxu0 %v2182
    %v2666 = vpop.f32.mrb[0].mxu0
    %v2667 = vadd.f32 0.0, %v2666
    %v2668 = vpop.f32.mrb[0].mxu0
    %v2669 = vadd.f32 0.0, %v2668
    %2670 = vmatprep.mubr.f32.mxu0 %v2186
    %2671 = vmatmul.mubr.f32.gmra.mrb[0].mxu0 %v2185
    %v2672 = vpop.f32.mrb[0].mxu0
    %v2673 = vadd.f32 0.0, %v2672
    %v2674 = vpop.f32.mrb[0].mxu0
    %v2675 = vadd.f32 0.0, %v2674
    %2676 = vdwg.mxu0
    %2677 = vmatprep.subr.mxu0 %v240
    %2678 = vmatpush1.msra.mxu0 %v239
    %2679 = vmatprep.subr.mxu0 %v243
    %2680 = vmatpush1.msra.mxu0 %v242
    %2681 = vmatprep.subr.mxu0 %v246
    %2682 = vmatpush1.msra.mxu0 %v245
    %2683 = vmatprep.subr.mxu0 %v249
    %2684 = vmatpush1.msra.mxu0 %v248
    %2685 = vmatprep.subr.mxu0 %v252
    %2686 = vmatpush1.msra.mxu0 %v251
    %2687 = vmatprep.subr.mxu0 %v255
    %2688 = vmatpush1.msra.mxu0 %v254
    %2689 = vmatprep.subr.mxu0 %v258
    %2690 = vmatpush1.msra.mxu0 %v257
    %2691 = vmatprep.subr.mxu0 %v261
    %2692 = vmatpush1.msra.mxu0 %v260
    %2693 = vmatprep.subr.mxu0 %v264
    %2694 = vmatpush1.msra.mxu0 %v263
    %2695 = vmatprep.subr.mxu0 %v267
    %2696 = vmatpush1.msra.mxu0 %v266
    %2697 = vmatprep.subr.mxu0 %v270
    %2698 = vmatpush1.msra.mxu0 %v269
    %2699 = vmatprep.subr.mxu0 %v273
    %2700 = vmatpush1.msra.mxu0 %v272
    %2701 = vmatprep.subr.mxu0 %v2589
    %2702 = vmatpush1.msra.mxu0 %v2586
    %2703 = vmatprep.subr.mxu0 0.0
    %2704 = vmatpush1.msra.mxu0 0.0
    %2705 = vmatprep.subr.mxu0 0.0
    %2706 = vmatpush1.msra.mxu0 0.0
    %2707 = vmatprep.subr.mxu0 0.0
    %2708 = vmatpush1.msra.mxu0 0.0
    %2709 = vmatprep.subr.mxu0 0.0
    %2710 = vmatpush1.msra.mxu0 0.0
    %2711 = vmatprep.subr.mxu0 0.0
    %2712 = vmatpush1.msra.mxu0 0.0
    %2713 = vmatprep.subr.mxu0 0.0
    %2714 = vmatpush1.msra.mxu0 0.0
    %2715 = vmatprep.subr.mxu0 0.0
    %2716 = vmatpush1.msra.mxu0 0.0
    %2717 = vmatprep.subr.mxu0 0.0
    %2718 = vmatpush1.msra.mxu0 0.0
    %2719 = vmatprep.subr.mxu0 0.0
    %2720 = vmatpush1.msra.mxu0 0.0
    %2721 = vmatprep.subr.mxu0 0.0
    %2722 = vmatpush1.msra.mxu0 0.0
    %2723 = vmatprep.subr.mxu0 0.0
    %2724 = vmatpush1.msra.mxu0 0.0
    %2725 = vmatprep.subr.mxu0 0.0
    %2726 = vmatpush1.msra.mxu0 0.0
    %2727 = vmatprep.subr.mxu0 0.0
    %2728 = vmatpush1.msra.mxu0 0.0
    %2729 = vmatprep.subr.mxu0 0.0
    %2730 = vmatpush1.msra.mxu0 0.0
    %2731 = vmatprep.subr.mxu0 0.0
    %2732 = vmatpush1.msra.mxu0 0.0
    %2733 = vmatprep.subr.mxu0 0.0
    %2734 = vmatpush1.msra.mxu0 0.0
    %2735 = vmatprep.subr.mxu0 0.0
    %2736 = vmatpush1.msra.mxu0 0.0
    %2737 = vmatprep.subr.mxu0 0.0
    %2738 = vmatpush1.msra.mxu0 0.0
    %2739 = vmatprep.subr.mxu0 0.0
    %2740 = vmatpush1.msra.mxu0 0.0
    %2741 = vmatprep.mubr.f32.mxu0 0.0
    %2742 = vmatmul.mubr.f32.gmra.mrb[0].mxu0 %v2217
    %v2743 = vpop.f32.mrb[0].mxu0
    %v2744 = vadd.f32 %v2661, %v2743
    %v2745 = vpop.f32.mrb[0].mxu0
    %v2746 = vadd.f32 %v2663, %v2745
    %2747 = vmatprep.mubr.f32.mxu0 0.0
    %2748 = vmatmul.mubr.f32.gmra.mrb[0].mxu0 %v2220
    %v2749 = vpop.f32.mrb[0].mxu0
    %v2750 = vadd.f32 %v2667, %v2749
    %v2751 = vpop.f32.mrb[0].mxu0
    %v2752 = vadd.f32 %v2669, %v2751
    %2753 = vmatprep.mubr.f32.mxu0 0.0
    %2754 = vmatmul.mubr.f32.gmra.mrb[0].mxu0 %v2223
    %v2755 = vpop.f32.mrb[0].mxu0
    %v2756 = vadd.f32 %v2673, %v2755
    %v2757 = vpop.f32.mrb[0].mxu0
    %v2758 = vadd.f32 %v2675, %v2757
    %2759 = vdwg.mxu0
    %2760 = vmatprep.subr.mxu0 0.0
    %2761 = vmatpush1.msra.mxu0 %v145
    %2762 = vmatprep.subr.mxu0 0.0
    %2763 = vmatpush1.msra.mxu0 %v148
    %2764 = vmatprep.subr.mxu0 0.0
    %2765 = vmatpush1.msra.mxu0 %v151
    %2766 = vmatprep.subr.mxu0 0.0
    %2767 = vmatpush1.msra.mxu0 %v154
    %2768 = vmatprep.subr.mxu0 0.0
    %2769 = vmatpush1.msra.mxu0 %v157
    %2770 = vmatprep.subr.mxu0 0.0
    %2771 = vmatpush1.msra.mxu0 %v160
    %2772 = vmatprep.subr.mxu0 0.0
    %2773 = vmatpush1.msra.mxu0 %v163
    %2774 = vmatprep.subr.mxu0 0.0
    %2775 = vmatpush1.msra.mxu0 %v166
    %2776 = vmatprep.subr.mxu0 0.0
    %2777 = vmatpush1.msra.mxu0 %v169
    %2778 = vmatprep.subr.mxu0 0.0
    %2779 = vmatpush1.msra.mxu0 %v172
    %2780 = vmatprep.subr.mxu0 0.0
    %2781 = vmatpush1.msra.mxu0 %v175
    %2782 = vmatprep.subr.mxu0 0.0
    %2783 = vmatpush1.msra.mxu0 %v178
    %2784 = vmatprep.subr.mxu0 0.0
    %2785 = vmatpush1.msra.mxu0 %v181
    %2786 = vmatprep.subr.mxu0 0.0
    %2787 = vmatpush1.msra.mxu0 %v184
    %2788 = vmatprep.subr.mxu0 0.0
    %2789 = vmatpush1.msra.mxu0 %v187
    %2790 = vmatprep.subr.mxu0 0.0
    %2791 = vmatpush1.msra.mxu0 %v190
    %2792 = vmatprep.subr.mxu0 0.0
    %2793 = vmatpush1.msra.mxu0 %v193
    %2794 = vmatprep.subr.mxu0 0.0
    %2795 = vmatpush1.msra.mxu0 %v196
    %2796 = vmatprep.subr.mxu0 0.0
    %2797 = vmatpush1.msra.mxu0 %v199
    %2798 = vmatprep.subr.mxu0 0.0
    %2799 = vmatpush1.msra.mxu0 %v202
    %2800 = vmatprep.subr.mxu0 0.0
    %2801 = vmatpush1.msra.mxu0 %v205
    %2802 = vmatprep.subr.mxu0 0.0
    %2803 = vmatpush1.msra.mxu0 %v208
    %2804 = vmatprep.subr.mxu0 0.0
    %2805 = vmatpush1.msra.mxu0 %v211
    %2806 = vmatprep.subr.mxu0 0.0
    %2807 = vmatpush1.msra.mxu0 %v214
    %2808 = vmatprep.subr.mxu0 0.0
    %2809 = vmatpush1.msra.mxu0 %v217
    %2810 = vmatprep.subr.mxu0 0.0
    %2811 = vmatpush1.msra.mxu0 %v220
    %2812 = vmatprep.subr.mxu0 0.0
    %2813 = vmatpush1.msra.mxu0 %v223
    %2814 = vmatprep.subr.mxu0 0.0
    %2815 = vmatpush1.msra.mxu0 %v226
    %2816 = vmatprep.subr.mxu0 0.0
    %2817 = vmatpush1.msra.mxu0 %v229
    %2818 = vmatprep.subr.mxu0 0.0
    %2819 = vmatpush1.msra.mxu0 %v232
    %2820 = vmatprep.subr.mxu0 0.0
    %2821 = vmatpush1.msra.mxu0 %v235
    %2822 = vmatprep.subr.mxu0 0.0
    %2823 = vmatpush1.msra.mxu0 %v238
    %2824 = vmatprep.mubr.f32.mxu0 %v2180
    %2825 = vmatmul.mubr.f32.gmra.mrb[0].mxu0 %v2179
    %v2826 = vpop.f32.mrb[0].mxu0
    %v2827 = vadd.f32 0.0, %v2826
    %v2828 = vpop.f32.mrb[0].mxu0
    %2829 = vmatprep.mubr.f32.mxu0 %v2183
    %2830 = vmatmul.mubr.f32.gmra.mrb[0].mxu0 %v2182
    %v2831 = vpop.f32.mrb[0].mxu0
    %v2832 = vadd.f32 0.0, %v2831
    %v2833 = vpop.f32.mrb[0].mxu0
    %2834 = vmatprep.mubr.f32.mxu0 %v2186
    %2835 = vmatmul.mubr.f32.gmra.mrb[0].mxu0 %v2185
    %v2836 = vpop.f32.mrb[0].mxu0
    %v2837 = vadd.f32 0.0, %v2836
    %v2838 = vpop.f32.mrb[0].mxu0
    %2839 = vdwg.mxu0
    %2840 = vmatprep.subr.mxu0 0.0
    %2841 = vmatpush1.msra.mxu0 %v241
    %2842 = vmatprep.subr.mxu0 0.0
    %2843 = vmatpush1.msra.mxu0 %v244
    %2844 = vmatprep.subr.mxu0 0.0
    %2845 = vmatpush1.msra.mxu0 %v247
    %2846 = vmatprep.subr.mxu0 0.0
    %2847 = vmatpush1.msra.mxu0 %v250
    %2848 = vmatprep.subr.mxu0 0.0
    %2849 = vmatpush1.msra.mxu0 %v253
    %2850 = vmatprep.subr.mxu0 0.0
    %2851 = vmatpush1.msra.mxu0 %v256
    %2852 = vmatprep.subr.mxu0 0.0
    %2853 = vmatpush1.msra.mxu0 %v259
    %2854 = vmatprep.subr.mxu0 0.0
    %2855 = vmatpush1.msra.mxu0 %v262
    %2856 = vmatprep.subr.mxu0 0.0
    %2857 = vmatpush1.msra.mxu0 %v265
    %2858 = vmatprep.subr.mxu0 0.0
    %2859 = vmatpush1.msra.mxu0 %v268
    %2860 = vmatprep.subr.mxu0 0.0
    %2861 = vmatpush1.msra.mxu0 %v271
    %2862 = vmatprep.subr.mxu0 0.0
    %2863 = vmatpush1.msra.mxu0 %v274
    %2864 = vmatprep.subr.mxu0 0.0
    %2865 = vmatpush1.msra.mxu0 %v2592
    %2866 = vmatprep.subr.mxu0 0.0
    %2867 = vmatpush1.msra.mxu0 0.0
    %2868 = vmatprep.subr.mxu0 0.0
    %2869 = vmatpush1.msra.mxu0 0.0
    %2870 = vmatprep.subr.mxu0 0.0
    %2871 = vmatpush1.msra.mxu0 0.0
    %2872 = vmatprep.subr.mxu0 0.0
    %2873 = vmatpush1.msra.mxu0 0.0
    %2874 = vmatprep.subr.mxu0 0.0
    %2875 = vmatpush1.msra.mxu0 0.0
    %2876 = vmatprep.subr.mxu0 0.0
    %2877 = vmatpush1.msra.mxu0 0.0
    %2878 = vmatprep.subr.mxu0 0.0
    %2879 = vmatpush1.msra.mxu0 0.0
    %2880 = vmatprep.subr.mxu0 0.0
    %2881 = vmatpush1.msra.mxu0 0.0
    %2882 = vmatprep.subr.mxu0 0.0
    %2883 = vmatpush1.msra.mxu0 0.0
    %2884 = vmatprep.subr.mxu0 0.0
    %2885 = vmatpush1.msra.mxu0 0.0
    %2886 = vmatprep.subr.mxu0 0.0
    %2887 = vmatpush1.msra.mxu0 0.0
    %2888 = vmatprep.subr.mxu0 0.0
    %2889 = vmatpush1.msra.mxu0 0.0
    %2890 = vmatprep.subr.mxu0 0.0
    %2891 = vmatpush1.msra.mxu0 0.0
    %2892 = vmatprep.subr.mxu0 0.0
    %2893 = vmatpush1.msra.mxu0 0.0
    %2894 = vmatprep.subr.mxu0 0.0
    %2895 = vmatpush1.msra.mxu0 0.0
    %2896 = vmatprep.subr.mxu0 0.0
    %2897 = vmatpush1.msra.mxu0 0.0
    %2898 = vmatprep.subr.mxu0 0.0
    %2899 = vmatpush1.msra.mxu0 0.0
    %2900 = vmatprep.subr.mxu0 0.0
    %2901 = vmatpush1.msra.mxu0 0.0
    %2902 = vmatprep.subr.mxu0 0.0
    %2903 = vmatpush1.msra.mxu0 0.0
    %2904 = vmatprep.mubr.f32.mxu0 0.0
    %2905 = vmatmul.mubr.f32.gmra.mrb[0].mxu0 %v2217
    %v2906 = vpop.f32.mrb[0].mxu0
    %v2907 = vadd.f32 %v2827, %v2906
    %v2908 = vpop.f32.mrb[0].mxu0
    %2909 = vmatprep.mubr.f32.mxu0 0.0
    %2910 = vmatmul.mubr.f32.gmra.mrb[0].mxu0 %v2220
    %v2911 = vpop.f32.mrb[0].mxu0
    %v2912 = vadd.f32 %v2832, %v2911
    %v2913 = vpop.f32.mrb[0].mxu0
    %2914 = vmatprep.mubr.f32.mxu0 0.0
    %2915 = vmatmul.mubr.f32.gmra.mrb[0].mxu0 %v2223
    %v2916 = vpop.f32.mrb[0].mxu0
    %v2917 = vadd.f32 %v2837, %v2916
    %v2918 = vpop.f32.mrb[0].mxu0
    %2919 = vdwg.mxu0
    %v2921 = vlaneseq
    %v2922 = vshrl.u32 %v2921, 7
    %v2923 = vsub.s32 0, %v2922
    %v2924 = vrot.slane %v414, %v2923
    %v2925 = vlaneseq
    %v2926 = vshrl.u32 %v2925, 7
    %v2927 = vsub.s32 1, %v2926
    %v2928 = vrot.slane %v414, %v2927
    %v2929 = vlaneseq
    %v2930 = vshrl.u32 %v2929, 7
    %v2931 = vsub.s32 2, %v2930
    %v2932 = vrot.slane %v414, %v2931
    %v2936 = vmul.f32 %v2744, %v2924
    %v2937 = vmul.f32 %v2746, %v2928
    %v2938 = vmul.f32 %v2907, %v2932
    %v2939 = vmul.f32 %v2750, %v2924
    %v2940 = vmul.f32 %v2752, %v2928
    %v2941 = vmul.f32 %v2912, %v2932
    %v2942 = vmul.f32 %v2756, %v2924
    %v2943 = vmul.f32 %v2758, %v2928
    %v2944 = vmul.f32 %v2917, %v2932
    %v2946 = vsel %vm1414, %v1971, 0
    %v2949 = vsel %vm1414, %v1973, 0
    %v2952 = vsel %vm1414, %v1975, 0
    %2954 = vmatprep.subr.mxu0 %v1709
    %2955 = vmatpush1.msra.mxu0 %v1707
    %2956 = vmatprep.subr.mxu0 %v1715
    %2957 = vmatpush1.msra.mxu0 %v1713
    %2958 = vmatprep.subr.mxu0 %v1721
    %2959 = vmatpush1.msra.mxu0 %v1719
    %2960 = vmatprep.subr.mxu0 %v1727
    %2961 = vmatpush1.msra.mxu0 %v1725
    %2962 = vmatprep.subr.mxu0 %v1733
    %2963 = vmatpush1.msra.mxu0 %v1731
    %2964 = vmatprep.subr.mxu0 %v1739
    %2965 = vmatpush1.msra.mxu0 %v1737
    %2966 = vmatprep.subr.mxu0 %v1745
    %2967 = vmatpush1.msra.mxu0 %v1743
    %2968 = vmatprep.subr.mxu0 %v1751
    %2969 = vmatpush1.msra.mxu0 %v1749
    %2970 = vmatprep.subr.mxu0 %v1757
    %2971 = vmatpush1.msra.mxu0 %v1755
    %2972 = vmatprep.subr.mxu0 %v1763
    %2973 = vmatpush1.msra.mxu0 %v1761
    %2974 = vmatprep.subr.mxu0 %v1769
    %2975 = vmatpush1.msra.mxu0 %v1767
    %2976 = vmatprep.subr.mxu0 %v1775
    %2977 = vmatpush1.msra.mxu0 %v1773
    %2978 = vmatprep.subr.mxu0 %v1781
    %2979 = vmatpush1.msra.mxu0 %v1779
    %2980 = vmatprep.subr.mxu0 %v1787
    %2981 = vmatpush1.msra.mxu0 %v1785
    %2982 = vmatprep.subr.mxu0 %v1793
    %2983 = vmatpush1.msra.mxu0 %v1791
    %2984 = vmatprep.subr.mxu0 %v1799
    %2985 = vmatpush1.msra.mxu0 %v1797
    %2986 = vmatprep.subr.mxu0 %v1805
    %2987 = vmatpush1.msra.mxu0 %v1803
    %2988 = vmatprep.subr.mxu0 %v1811
    %2989 = vmatpush1.msra.mxu0 %v1809
    %2990 = vmatprep.subr.mxu0 %v1817
    %2991 = vmatpush1.msra.mxu0 %v1815
    %2992 = vmatprep.subr.mxu0 %v1823
    %2993 = vmatpush1.msra.mxu0 %v1821
    %2994 = vmatprep.subr.mxu0 %v1829
    %2995 = vmatpush1.msra.mxu0 %v1827
    %2996 = vmatprep.subr.mxu0 %v1835
    %2997 = vmatpush1.msra.mxu0 %v1833
    %2998 = vmatprep.subr.mxu0 %v1841
    %2999 = vmatpush1.msra.mxu0 %v1839
    %3000 = vmatprep.subr.mxu0 %v1847
    %3001 = vmatpush1.msra.mxu0 %v1845
    %3002 = vmatprep.subr.mxu0 %v1853
    %3003 = vmatpush1.msra.mxu0 %v1851
    %3004 = vmatprep.subr.mxu0 %v1859
    %3005 = vmatpush1.msra.mxu0 %v1857
    %3006 = vmatprep.subr.mxu0 %v1865
    %3007 = vmatpush1.msra.mxu0 %v1863
    %3008 = vmatprep.subr.mxu0 %v1871
    %3009 = vmatpush1.msra.mxu0 %v1869
    %3010 = vmatprep.subr.mxu0 %v1877
    %3011 = vmatpush1.msra.mxu0 %v1875
    %3012 = vmatprep.subr.mxu0 %v1883
    %3013 = vmatpush1.msra.mxu0 %v1881
    %3014 = vmatprep.subr.mxu0 %v1889
    %3015 = vmatpush1.msra.mxu0 %v1887
    %3016 = vmatprep.subr.mxu0 %v1895
    %3017 = vmatpush1.msra.mxu0 %v1893
    %3018 = vmatprep.mubr.f32.mxu0 %v2180
    %3019 = vmatmul.mubr.f32.gmra.mrb[0].mxu0 %v2179
    %v3020 = vpop.f32.mrb[0].mxu0
    %v3021 = vadd.f32 0.0, %v3020
    %v3022 = vpop.f32.mrb[0].mxu0
    %v3023 = vadd.f32 0.0, %v3022
    %3024 = vmatprep.mubr.f32.mxu0 %v2183
    %3025 = vmatmul.mubr.f32.gmra.mrb[0].mxu0 %v2182
    %v3026 = vpop.f32.mrb[0].mxu0
    %v3027 = vadd.f32 0.0, %v3026
    %v3028 = vpop.f32.mrb[0].mxu0
    %v3029 = vadd.f32 0.0, %v3028
    %3030 = vmatprep.mubr.f32.mxu0 %v2186
    %3031 = vmatmul.mubr.f32.gmra.mrb[0].mxu0 %v2185
    %v3032 = vpop.f32.mrb[0].mxu0
    %v3033 = vadd.f32 0.0, %v3032
    %v3034 = vpop.f32.mrb[0].mxu0
    %v3035 = vadd.f32 0.0, %v3034
    %3036 = vdwg.mxu0
    %3037 = vmatprep.subr.mxu0 %v1901
    %3038 = vmatpush1.msra.mxu0 %v1899
    %3039 = vmatprep.subr.mxu0 %v1907
    %3040 = vmatpush1.msra.mxu0 %v1905
    %3041 = vmatprep.subr.mxu0 %v1913
    %3042 = vmatpush1.msra.mxu0 %v1911
    %3043 = vmatprep.subr.mxu0 %v1919
    %3044 = vmatpush1.msra.mxu0 %v1917
    %3045 = vmatprep.subr.mxu0 %v1925
    %3046 = vmatpush1.msra.mxu0 %v1923
    %3047 = vmatprep.subr.mxu0 %v1931
    %3048 = vmatpush1.msra.mxu0 %v1929
    %3049 = vmatprep.subr.mxu0 %v1937
    %3050 = vmatpush1.msra.mxu0 %v1935
    %3051 = vmatprep.subr.mxu0 %v1943
    %3052 = vmatpush1.msra.mxu0 %v1941
    %3053 = vmatprep.subr.mxu0 %v1949
    %3054 = vmatpush1.msra.mxu0 %v1947
    %3055 = vmatprep.subr.mxu0 %v1955
    %3056 = vmatpush1.msra.mxu0 %v1953
    %3057 = vmatprep.subr.mxu0 %v1961
    %3058 = vmatpush1.msra.mxu0 %v1959
    %3059 = vmatprep.subr.mxu0 %v1967
    %3060 = vmatpush1.msra.mxu0 %v1965
    %3061 = vmatprep.subr.mxu0 %v2949
    %3062 = vmatpush1.msra.mxu0 %v2946
    %3063 = vmatprep.subr.mxu0 0.0
    %3064 = vmatpush1.msra.mxu0 0.0
    %3065 = vmatprep.subr.mxu0 0.0
    %3066 = vmatpush1.msra.mxu0 0.0
    %3067 = vmatprep.subr.mxu0 0.0
    %3068 = vmatpush1.msra.mxu0 0.0
    %3069 = vmatprep.subr.mxu0 0.0
    %3070 = vmatpush1.msra.mxu0 0.0
    %3071 = vmatprep.subr.mxu0 0.0
    %3072 = vmatpush1.msra.mxu0 0.0
    %3073 = vmatprep.subr.mxu0 0.0
    %3074 = vmatpush1.msra.mxu0 0.0
    %3075 = vmatprep.subr.mxu0 0.0
    %3076 = vmatpush1.msra.mxu0 0.0
    %3077 = vmatprep.subr.mxu0 0.0
    %3078 = vmatpush1.msra.mxu0 0.0
    %3079 = vmatprep.subr.mxu0 0.0
    %3080 = vmatpush1.msra.mxu0 0.0
    %3081 = vmatprep.subr.mxu0 0.0
    %3082 = vmatpush1.msra.mxu0 0.0
    %3083 = vmatprep.subr.mxu0 0.0
    %3084 = vmatpush1.msra.mxu0 0.0
    %3085 = vmatprep.subr.mxu0 0.0
    %3086 = vmatpush1.msra.mxu0 0.0
    %3087 = vmatprep.subr.mxu0 0.0
    %3088 = vmatpush1.msra.mxu0 0.0
    %3089 = vmatprep.subr.mxu0 0.0
    %3090 = vmatpush1.msra.mxu0 0.0
    %3091 = vmatprep.subr.mxu0 0.0
    %3092 = vmatpush1.msra.mxu0 0.0
    %3093 = vmatprep.subr.mxu0 0.0
    %3094 = vmatpush1.msra.mxu0 0.0
    %3095 = vmatprep.subr.mxu0 0.0
    %3096 = vmatpush1.msra.mxu0 0.0
    %3097 = vmatprep.subr.mxu0 0.0
    %3098 = vmatpush1.msra.mxu0 0.0
    %3099 = vmatprep.subr.mxu0 0.0
    %3100 = vmatpush1.msra.mxu0 0.0
    %3101 = vmatprep.mubr.f32.mxu0 0.0
    %3102 = vmatmul.mubr.f32.gmra.mrb[0].mxu0 %v2217
    %v3103 = vpop.f32.mrb[0].mxu0
    %v3104 = vadd.f32 %v3021, %v3103
    %v3105 = vpop.f32.mrb[0].mxu0
    %v3106 = vadd.f32 %v3023, %v3105
    %3107 = vmatprep.mubr.f32.mxu0 0.0
    %3108 = vmatmul.mubr.f32.gmra.mrb[0].mxu0 %v2220
    %v3109 = vpop.f32.mrb[0].mxu0
    %v3110 = vadd.f32 %v3027, %v3109
    %v3111 = vpop.f32.mrb[0].mxu0
    %v3112 = vadd.f32 %v3029, %v3111
    %3113 = vmatprep.mubr.f32.mxu0 0.0
    %3114 = vmatmul.mubr.f32.gmra.mrb[0].mxu0 %v2223
    %v3115 = vpop.f32.mrb[0].mxu0
    %v3116 = vadd.f32 %v3033, %v3115
    %v3117 = vpop.f32.mrb[0].mxu0
    %v3118 = vadd.f32 %v3035, %v3117
    %3119 = vdwg.mxu0
    %3120 = vmatprep.subr.mxu0 0.0
    %3121 = vmatpush1.msra.mxu0 %v1711
    %3122 = vmatprep.subr.mxu0 0.0
    %3123 = vmatpush1.msra.mxu0 %v1717
    %3124 = vmatprep.subr.mxu0 0.0
    %3125 = vmatpush1.msra.mxu0 %v1723
    %3126 = vmatprep.subr.mxu0 0.0
    %3127 = vmatpush1.msra.mxu0 %v1729
    %3128 = vmatprep.subr.mxu0 0.0
    %3129 = vmatpush1.msra.mxu0 %v1735
    %3130 = vmatprep.subr.mxu0 0.0
    %3131 = vmatpush1.msra.mxu0 %v1741
    %3132 = vmatprep.subr.mxu0 0.0
    %3133 = vmatpush1.msra.mxu0 %v1747
    %3134 = vmatprep.subr.mxu0 0.0
    %3135 = vmatpush1.msra.mxu0 %v1753
    %3136 = vmatprep.subr.mxu0 0.0
    %3137 = vmatpush1.msra.mxu0 %v1759
    %3138 = vmatprep.subr.mxu0 0.0
    %3139 = vmatpush1.msra.mxu0 %v1765
    %3140 = vmatprep.subr.mxu0 0.0
    %3141 = vmatpush1.msra.mxu0 %v1771
    %3142 = vmatprep.subr.mxu0 0.0
    %3143 = vmatpush1.msra.mxu0 %v1777
    %3144 = vmatprep.subr.mxu0 0.0
    %3145 = vmatpush1.msra.mxu0 %v1783
    %3146 = vmatprep.subr.mxu0 0.0
    %3147 = vmatpush1.msra.mxu0 %v1789
    %3148 = vmatprep.subr.mxu0 0.0
    %3149 = vmatpush1.msra.mxu0 %v1795
    %3150 = vmatprep.subr.mxu0 0.0
    %3151 = vmatpush1.msra.mxu0 %v1801
    %3152 = vmatprep.subr.mxu0 0.0
    %3153 = vmatpush1.msra.mxu0 %v1807
    %3154 = vmatprep.subr.mxu0 0.0
    %3155 = vmatpush1.msra.mxu0 %v1813
    %3156 = vmatprep.subr.mxu0 0.0
    %3157 = vmatpush1.msra.mxu0 %v1819
    %3158 = vmatprep.subr.mxu0 0.0
    %3159 = vmatpush1.msra.mxu0 %v1825
    %3160 = vmatprep.subr.mxu0 0.0
    %3161 = vmatpush1.msra.mxu0 %v1831
    %3162 = vmatprep.subr.mxu0 0.0
    %3163 = vmatpush1.msra.mxu0 %v1837
    %3164 = vmatprep.subr.mxu0 0.0
    %3165 = vmatpush1.msra.mxu0 %v1843
    %3166 = vmatprep.subr.mxu0 0.0
    %3167 = vmatpush1.msra.mxu0 %v1849
    %3168 = vmatprep.subr.mxu0 0.0
    %3169 = vmatpush1.msra.mxu0 %v1855
    %3170 = vmatprep.subr.mxu0 0.0
    %3171 = vmatpush1.msra.mxu0 %v1861
    %3172 = vmatprep.subr.mxu0 0.0
    %3173 = vmatpush1.msra.mxu0 %v1867
    %3174 = vmatprep.subr.mxu0 0.0
    %3175 = vmatpush1.msra.mxu0 %v1873
    %3176 = vmatprep.subr.mxu0 0.0
    %3177 = vmatpush1.msra.mxu0 %v1879
    %3178 = vmatprep.subr.mxu0 0.0
    %3179 = vmatpush1.msra.mxu0 %v1885
    %3180 = vmatprep.subr.mxu0 0.0
    %3181 = vmatpush1.msra.mxu0 %v1891
    %3182 = vmatprep.subr.mxu0 0.0
    %3183 = vmatpush1.msra.mxu0 %v1897
    %3184 = vmatprep.mubr.f32.mxu0 %v2180
    %3185 = vmatmul.mubr.f32.gmra.mrb[0].mxu0 %v2179
    %v3186 = vpop.f32.mrb[0].mxu0
    %v3187 = vadd.f32 0.0, %v3186
    %v3188 = vpop.f32.mrb[0].mxu0
    %3189 = vmatprep.mubr.f32.mxu0 %v2183
    %3190 = vmatmul.mubr.f32.gmra.mrb[0].mxu0 %v2182
    %v3191 = vpop.f32.mrb[0].mxu0
    %v3192 = vadd.f32 0.0, %v3191
    %v3193 = vpop.f32.mrb[0].mxu0
    %3194 = vmatprep.mubr.f32.mxu0 %v2186
    %3195 = vmatmul.mubr.f32.gmra.mrb[0].mxu0 %v2185
    %v3196 = vpop.f32.mrb[0].mxu0
    %v3197 = vadd.f32 0.0, %v3196
    %v3198 = vpop.f32.mrb[0].mxu0
    %3199 = vdwg.mxu0
    %3200 = vmatprep.subr.mxu0 0.0
    %3201 = vmatpush1.msra.mxu0 %v1903
    %3202 = vmatprep.subr.mxu0 0.0
    %3203 = vmatpush1.msra.mxu0 %v1909
    %3204 = vmatprep.subr.mxu0 0.0
    %3205 = vmatpush1.msra.mxu0 %v1915
    %3206 = vmatprep.subr.mxu0 0.0
    %3207 = vmatpush1.msra.mxu0 %v1921
    %3208 = vmatprep.subr.mxu0 0.0
    %3209 = vmatpush1.msra.mxu0 %v1927
    %3210 = vmatprep.subr.mxu0 0.0
    %3211 = vmatpush1.msra.mxu0 %v1933
    %3212 = vmatprep.subr.mxu0 0.0
    %3213 = vmatpush1.msra.mxu0 %v1939
    %3214 = vmatprep.subr.mxu0 0.0
    %3215 = vmatpush1.msra.mxu0 %v1945
    %3216 = vmatprep.subr.mxu0 0.0
    %3217 = vmatpush1.msra.mxu0 %v1951
    %3218 = vmatprep.subr.mxu0 0.0
    %3219 = vmatpush1.msra.mxu0 %v1957
    %3220 = vmatprep.subr.mxu0 0.0
    %3221 = vmatpush1.msra.mxu0 %v1963
    %3222 = vmatprep.subr.mxu0 0.0
    %3223 = vmatpush1.msra.mxu0 %v1969
    %3224 = vmatprep.subr.mxu0 0.0
    %3225 = vmatpush1.msra.mxu0 %v2952
    %3226 = vmatprep.subr.mxu0 0.0
    %3227 = vmatpush1.msra.mxu0 0.0
    %3228 = vmatprep.subr.mxu0 0.0
    %3229 = vmatpush1.msra.mxu0 0.0
    %3230 = vmatprep.subr.mxu0 0.0
    %3231 = vmatpush1.msra.mxu0 0.0
    %3232 = vmatprep.subr.mxu0 0.0
    %3233 = vmatpush1.msra.mxu0 0.0
    %3234 = vmatprep.subr.mxu0 0.0
    %3235 = vmatpush1.msra.mxu0 0.0
    %3236 = vmatprep.subr.mxu0 0.0
    %3237 = vmatpush1.msra.mxu0 0.0
    %3238 = vmatprep.subr.mxu0 0.0
    %3239 = vmatpush1.msra.mxu0 0.0
    %3240 = vmatprep.subr.mxu0 0.0
    %3241 = vmatpush1.msra.mxu0 0.0
    %3242 = vmatprep.subr.mxu0 0.0
    %3243 = vmatpush1.msra.mxu0 0.0
    %3244 = vmatprep.subr.mxu0 0.0
    %3245 = vmatpush1.msra.mxu0 0.0
    %3246 = vmatprep.subr.mxu0 0.0
    %3247 = vmatpush1.msra.mxu0 0.0
    %3248 = vmatprep.subr.mxu0 0.0
    %3249 = vmatpush1.msra.mxu0 0.0
    %3250 = vmatprep.subr.mxu0 0.0
    %3251 = vmatpush1.msra.mxu0 0.0
    %3252 = vmatprep.subr.mxu0 0.0
    %3253 = vmatpush1.msra.mxu0 0.0
    %3254 = vmatprep.subr.mxu0 0.0
    %3255 = vmatpush1.msra.mxu0 0.0
    %3256 = vmatprep.subr.mxu0 0.0
    %3257 = vmatpush1.msra.mxu0 0.0
    %3258 = vmatprep.subr.mxu0 0.0
    %3259 = vmatpush1.msra.mxu0 0.0
    %3260 = vmatprep.subr.mxu0 0.0
    %3261 = vmatpush1.msra.mxu0 0.0
    %3262 = vmatprep.subr.mxu0 0.0
    %3263 = vmatpush1.msra.mxu0 0.0
    %3264 = vmatprep.mubr.f32.mxu0 0.0
    %3265 = vmatmul.mubr.f32.gmra.mrb[0].mxu0 %v2217
    %v3266 = vpop.f32.mrb[0].mxu0
    %v3267 = vadd.f32 %v3187, %v3266
    %v3268 = vpop.f32.mrb[0].mxu0
    %3269 = vmatprep.mubr.f32.mxu0 0.0
    %3270 = vmatmul.mubr.f32.gmra.mrb[0].mxu0 %v2220
    %v3271 = vpop.f32.mrb[0].mxu0
    %v3272 = vadd.f32 %v3192, %v3271
    %v3273 = vpop.f32.mrb[0].mxu0
    %3274 = vmatprep.mubr.f32.mxu0 0.0
    %3275 = vmatmul.mubr.f32.gmra.mrb[0].mxu0 %v2223
    %v3276 = vpop.f32.mrb[0].mxu0
    %v3277 = vadd.f32 %v3197, %v3276
    %v3278 = vpop.f32.mrb[0].mxu0
    %3279 = vdwg.mxu0
    %v3280 = vmul.f32 %v3104, %v2174
    %v3281 = vmul.f32 %v3106, %v2176
    %v3282 = vmul.f32 %v3267, %v2178
    %v3283 = vmul.f32 %v3110, %v2174
    %v3284 = vmul.f32 %v3112, %v2176
    %v3285 = vmul.f32 %v3272, %v2178
    %v3286 = vmul.f32 %v3116, %v2174
    %v3287 = vmul.f32 %v3118, %v2176
    %v3288 = vmul.f32 %v3277, %v2178
    %3289 = vst [vmem:[#allocation2 + $0xd8] sm:$0xff] %v2576
    %3290 = vst [vmem:[#allocation2 + $0xe0] sm:$0xff] %v2577
    %3291 = vst.msk [vmem:[#allocation2 + $0xe8] sm:$0xff] %vm63, %v2578
    %3292 = vst [vmem:[#allocation2 + $0xf0] sm:$0xff] %v2579
    %3293 = vst [vmem:[#allocation2 + $0xf8] sm:$0xff] %v2580
    %3294 = vst.msk [vmem:[#allocation2 + $0x100] sm:$0xff] %vm63, %v2581
    %3295 = vst [vmem:[#allocation2 + $0x108] sm:$0x3] %v2582
    %3296 = vst [vmem:[#allocation2 + $0x110] sm:$0x3] %v2583
    %3297 = vst.msk [vmem:[#allocation2 + $0x118] sm:$0x3] %vm2196, %v2584
    %3298 = vst [vmem:[#allocation2 + $0x120] sm:$0xff] %v2936
    %3299 = vst [vmem:[#allocation2 + $0x128] sm:$0xff] %v2937
    %3300 = vst.msk [vmem:[#allocation2 + $0x130] sm:$0xff] %vm63, %v2938
    %3301 = vst [vmem:[#allocation2 + $0x138] sm:$0xff] %v2939
    %3302 = vst [vmem:[#allocation2 + $0x140] sm:$0xff] %v2940
    %3303 = vst.msk [vmem:[#allocation2 + $0x148] sm:$0xff] %vm63, %v2941
    %3304 = vst [vmem:[#allocation2 + $0x150] sm:$0x3] %v2942
    %3305 = vst [vmem:[#allocation2 + $0x158] sm:$0x3] %v2943
    %3306 = vst.msk [vmem:[#allocation2 + $0x160] sm:$0x3] %vm2196, %v2944
    %3307 = vst [vmem:[#allocation2 + $0x168] sm:$0xff] %v3280
    %3308 = vst [vmem:[#allocation2 + $0x170] sm:$0xff] %v3281
    %3309 = vst.msk [vmem:[#allocation2 + $0x178] sm:$0xff] %vm63, %v3282
    %3310 = vst [vmem:[#allocation2 + $0x180] sm:$0xff] %v3283
    %3311 = vst [vmem:[#allocation2 + $0x188] sm:$0xff] %v3284
    %3312 = vst.msk [vmem:[#allocation2 + $0x190] sm:$0xff] %vm63, %v3285
    %3313 = vst [vmem:[#allocation2 + $0x198] sm:$0x3] %v3286
    %3314 = vst [vmem:[#allocation2 + $0x1a0] sm:$0x3] %v3287
    %3315 = vst.msk [vmem:[#allocation2 + $0x1a8] sm:$0x3] %vm2196, %v3288
    %v3317 = vsel %vm63, %v2578, 0
    %v3320 = vsel %vm63, %v2581, 0
    %v3323 = vsel %vm63, %v2584, 0
    %3325 = vmatprep.subr.mxu0 %v279
    %3326 = vmatpush1.msra.mxu0 %v278
    %3327 = vmatprep.subr.mxu0 %v282
    %3328 = vmatpush1.msra.mxu0 %v281
    %3329 = vmatprep.subr.mxu0 %v285
    %3330 = vmatpush1.msra.mxu0 %v284
    %3331 = vmatprep.subr.mxu0 %v288
    %3332 = vmatpush1.msra.mxu0 %v287
    %3333 = vmatprep.subr.mxu0 %v291
    %3334 = vmatpush1.msra.mxu0 %v290
    %3335 = vmatprep.subr.mxu0 %v294
    %3336 = vmatpush1.msra.mxu0 %v293
    %3337 = vmatprep.subr.mxu0 %v297
    %3338 = vmatpush1.msra.mxu0 %v296
    %3339 = vmatprep.subr.mxu0 %v300
    %3340 = vmatpush1.msra.mxu0 %v299
    %3341 = vmatprep.subr.mxu0 %v303
    %3342 = vmatpush1.msra.mxu0 %v302
    %3343 = vmatprep.subr.mxu0 %v306
    %3344 = vmatpush1.msra.mxu0 %v305
    %3345 = vmatprep.subr.mxu0 %v309
    %3346 = vmatpush1.msra.mxu0 %v308
    %3347 = vmatprep.subr.mxu0 %v312
    %3348 = vmatpush1.msra.mxu0 %v311
    %3349 = vmatprep.subr.mxu0 %v315
    %3350 = vmatpush1.msra.mxu0 %v314
    %3351 = vmatprep.subr.mxu0 %v318
    %3352 = vmatpush1.msra.mxu0 %v317
    %3353 = vmatprep.subr.mxu0 %v321
    %3354 = vmatpush1.msra.mxu0 %v320
    %3355 = vmatprep.subr.mxu0 %v324
    %3356 = vmatpush1.msra.mxu0 %v323
    %3357 = vmatprep.subr.mxu0 %v327
    %3358 = vmatpush1.msra.mxu0 %v326
    %3359 = vmatprep.subr.mxu0 %v330
    %3360 = vmatpush1.msra.mxu0 %v329
    %3361 = vmatprep.subr.mxu0 %v333
    %3362 = vmatpush1.msra.mxu0 %v332
    %3363 = vmatprep.subr.mxu0 %v336
    %3364 = vmatpush1.msra.mxu0 %v335
    %3365 = vmatprep.subr.mxu0 %v339
    %3366 = vmatpush1.msra.mxu0 %v338
    %3367 = vmatprep.subr.mxu0 %v342
    %3368 = vmatpush1.msra.mxu0 %v341
    %3369 = vmatprep.subr.mxu0 %v345
    %3370 = vmatpush1.msra.mxu0 %v344
    %3371 = vmatprep.subr.mxu0 %v348
    %3372 = vmatpush1.msra.mxu0 %v347
    %3373 = vmatprep.subr.mxu0 %v351
    %3374 = vmatpush1.msra.mxu0 %v350
    %3375 = vmatprep.subr.mxu0 %v354
    %3376 = vmatpush1.msra.mxu0 %v353
    %3377 = vmatprep.subr.mxu0 %v357
    %3378 = vmatpush1.msra.mxu0 %v356
    %3379 = vmatprep.subr.mxu0 %v360
    %3380 = vmatpush1.msra.mxu0 %v359
    %3381 = vmatprep.subr.mxu0 %v363
    %3382 = vmatpush1.msra.mxu0 %v362
    %3383 = vmatprep.subr.mxu0 %v366
    %3384 = vmatpush1.msra.mxu0 %v365
    %3385 = vmatprep.subr.mxu0 %v369
    %3386 = vmatpush1.msra.mxu0 %v368
    %3387 = vmatprep.subr.mxu0 %v372
    %3388 = vmatpush1.msra.mxu0 %v371
    %3389 = vmatprep.mubr.f32.mxu0 %v2577
    %3390 = vmatmul.mubr.f32.gmra.mrb[0].mxu0 %v2576
    %v3391 = vpop.f32.mrb[0].mxu0
    %v3392 = vadd.f32 0.0, %v3391
    %v3393 = vpop.f32.mrb[0].mxu0
    %v3394 = vadd.f32 0.0, %v3393
    %3395 = vmatprep.mubr.f32.mxu0 %v2580
    %3396 = vmatmul.mubr.f32.gmra.mrb[0].mxu0 %v2579
    %v3397 = vpop.f32.mrb[0].mxu0
    %v3398 = vadd.f32 0.0, %v3397
    %v3399 = vpop.f32.mrb[0].mxu0
    %v3400 = vadd.f32 0.0, %v3399
    %3401 = vmatprep.mubr.f32.mxu0 %v2583
    %3402 = vmatmul.mubr.f32.gmra.mrb[0].mxu0 %v2582
    %v3403 = vpop.f32.mrb[0].mxu0
    %v3404 = vadd.f32 0.0, %v3403
    %v3405 = vpop.f32.mrb[0].mxu0
    %v3406 = vadd.f32 0.0, %v3405
    %3407 = vdwg.mxu0
    %3408 = vmatprep.subr.mxu0 %v375
    %3409 = vmatpush1.msra.mxu0 %v374
    %3410 = vmatprep.subr.mxu0 %v378
    %3411 = vmatpush1.msra.mxu0 %v377
    %3412 = vmatprep.subr.mxu0 %v381
    %3413 = vmatpush1.msra.mxu0 %v380
    %3414 = vmatprep.subr.mxu0 %v384
    %3415 = vmatpush1.msra.mxu0 %v383
    %3416 = vmatprep.subr.mxu0 %v387
    %3417 = vmatpush1.msra.mxu0 %v386
    %3418 = vmatprep.subr.mxu0 %v390
    %3419 = vmatpush1.msra.mxu0 %v389
    %3420 = vmatprep.subr.mxu0 %v393
    %3421 = vmatpush1.msra.mxu0 %v392
    %3422 = vmatprep.subr.mxu0 %v396
    %3423 = vmatpush1.msra.mxu0 %v395
    %3424 = vmatprep.subr.mxu0 %v399
    %3425 = vmatpush1.msra.mxu0 %v398
    %3426 = vmatprep.subr.mxu0 %v402
    %3427 = vmatpush1.msra.mxu0 %v401
    %3428 = vmatprep.subr.mxu0 %v405
    %3429 = vmatpush1.msra.mxu0 %v404
    %3430 = vmatprep.subr.mxu0 %v408
    %3431 = vmatpush1.msra.mxu0 %v407
    %3432 = vmatprep.subr.mxu0 %v2229
    %3433 = vmatpush1.msra.mxu0 %v2226
    %3434 = vmatprep.subr.mxu0 0.0
    %3435 = vmatpush1.msra.mxu0 0.0
    %3436 = vmatprep.subr.mxu0 0.0
    %3437 = vmatpush1.msra.mxu0 0.0
    %3438 = vmatprep.subr.mxu0 0.0
    %3439 = vmatpush1.msra.mxu0 0.0
    %3440 = vmatprep.subr.mxu0 0.0
    %3441 = vmatpush1.msra.mxu0 0.0
    %3442 = vmatprep.subr.mxu0 0.0
    %3443 = vmatpush1.msra.mxu0 0.0
    %3444 = vmatprep.subr.mxu0 0.0
    %3445 = vmatpush1.msra.mxu0 0.0
    %3446 = vmatprep.subr.mxu0 0.0
    %3447 = vmatpush1.msra.mxu0 0.0
    %3448 = vmatprep.subr.mxu0 0.0
    %3449 = vmatpush1.msra.mxu0 0.0
    %3450 = vmatprep.subr.mxu0 0.0
    %3451 = vmatpush1.msra.mxu0 0.0
    %3452 = vmatprep.subr.mxu0 0.0
    %3453 = vmatpush1.msra.mxu0 0.0
    %3454 = vmatprep.subr.mxu0 0.0
    %3455 = vmatpush1.msra.mxu0 0.0
    %3456 = vmatprep.subr.mxu0 0.0
    %3457 = vmatpush1.msra.mxu0 0.0
    %3458 = vmatprep.subr.mxu0 0.0
    %3459 = vmatpush1.msra.mxu0 0.0
    %3460 = vmatprep.subr.mxu0 0.0
    %3461 = vmatpush1.msra.mxu0 0.0
    %3462 = vmatprep.subr.mxu0 0.0
    %3463 = vmatpush1.msra.mxu0 0.0
    %3464 = vmatprep.subr.mxu0 0.0
    %3465 = vmatpush1.msra.mxu0 0.0
    %3466 = vmatprep.subr.mxu0 0.0
    %3467 = vmatpush1.msra.mxu0 0.0
    %3468 = vmatprep.subr.mxu0 0.0
    %3469 = vmatpush1.msra.mxu0 0.0
    %3470 = vmatprep.subr.mxu0 0.0
    %3471 = vmatpush1.msra.mxu0 0.0
    %3472 = vmatprep.mubr.f32.mxu0 0.0
    %3473 = vmatmul.mubr.f32.gmra.mrb[0].mxu0 %v3317
    %v3474 = vpop.f32.mrb[0].mxu0
    %v3475 = vadd.f32 %v3392, %v3474
    %v3476 = vpop.f32.mrb[0].mxu0
    %v3477 = vadd.f32 %v3394, %v3476
    %3478 = vmatprep.mubr.f32.mxu0 0.0
    %3479 = vmatmul.mubr.f32.gmra.mrb[0].mxu0 %v3320
    %v3480 = vpop.f32.mrb[0].mxu0
    %v3481 = vadd.f32 %v3398, %v3480
    %v3482 = vpop.f32.mrb[0].mxu0
    %v3483 = vadd.f32 %v3400, %v3482
    %3484 = vmatprep.mubr.f32.mxu0 0.0
    %3485 = vmatmul.mubr.f32.gmra.mrb[0].mxu0 %v3323
    %v3486 = vpop.f32.mrb[0].mxu0
    %v3487 = vadd.f32 %v3404, %v3486
    %v3488 = vpop.f32.mrb[0].mxu0
    %v3489 = vadd.f32 %v3406, %v3488
    %3490 = vdwg.mxu0
    %3491 = vmatprep.subr.mxu0 0.0
    %3492 = vmatpush1.msra.mxu0 %v280
    %3493 = vmatprep.subr.mxu0 0.0
    %3494 = vmatpush1.msra.mxu0 %v283
    %3495 = vmatprep.subr.mxu0 0.0
    %3496 = vmatpush1.msra.mxu0 %v286
    %3497 = vmatprep.subr.mxu0 0.0
    %3498 = vmatpush1.msra.mxu0 %v289
    %3499 = vmatprep.subr.mxu0 0.0
    %3500 = vmatpush1.msra.mxu0 %v292
    %3501 = vmatprep.subr.mxu0 0.0
    %3502 = vmatpush1.msra.mxu0 %v295
    %3503 = vmatprep.subr.mxu0 0.0
    %3504 = vmatpush1.msra.mxu0 %v298
    %3505 = vmatprep.subr.mxu0 0.0
    %3506 = vmatpush1.msra.mxu0 %v301
    %3507 = vmatprep.subr.mxu0 0.0
    %3508 = vmatpush1.msra.mxu0 %v304
    %3509 = vmatprep.subr.mxu0 0.0
    %3510 = vmatpush1.msra.mxu0 %v307
    %3511 = vmatprep.subr.mxu0 0.0
    %3512 = vmatpush1.msra.mxu0 %v310
    %3513 = vmatprep.subr.mxu0 0.0
    %3514 = vmatpush1.msra.mxu0 %v313
    %3515 = vmatprep.subr.mxu0 0.0
    %3516 = vmatpush1.msra.mxu0 %v316
    %3517 = vmatprep.subr.mxu0 0.0
    %3518 = vmatpush1.msra.mxu0 %v319
    %3519 = vmatprep.subr.mxu0 0.0
    %3520 = vmatpush1.msra.mxu0 %v322
    %3521 = vmatprep.subr.mxu0 0.0
    %3522 = vmatpush1.msra.mxu0 %v325
    %3523 = vmatprep.subr.mxu0 0.0
    %3524 = vmatpush1.msra.mxu0 %v328
    %3525 = vmatprep.subr.mxu0 0.0
    %3526 = vmatpush1.msra.mxu0 %v331
    %3527 = vmatprep.subr.mxu0 0.0
    %3528 = vmatpush1.msra.mxu0 %v334
    %3529 = vmatprep.subr.mxu0 0.0
    %3530 = vmatpush1.msra.mxu0 %v337
    %3531 = vmatprep.subr.mxu0 0.0
    %3532 = vmatpush1.msra.mxu0 %v340
    %3533 = vmatprep.subr.mxu0 0.0
    %3534 = vmatpush1.msra.mxu0 %v343
    %3535 = vmatprep.subr.mxu0 0.0
    %3536 = vmatpush1.msra.mxu0 %v346
    %3537 = vmatprep.subr.mxu0 0.0
    %3538 = vmatpush1.msra.mxu0 %v349
    %3539 = vmatprep.subr.mxu0 0.0
    %3540 = vmatpush1.msra.mxu0 %v352
    %3541 = vmatprep.subr.mxu0 0.0
    %3542 = vmatpush1.msra.mxu0 %v355
    %3543 = vmatprep.subr.mxu0 0.0
    %3544 = vmatpush1.msra.mxu0 %v358
    %3545 = vmatprep.subr.mxu0 0.0
    %3546 = vmatpush1.msra.mxu0 %v361
    %3547 = vmatprep.subr.mxu0 0.0
    %3548 = vmatpush1.msra.mxu0 %v364
    %3549 = vmatprep.subr.mxu0 0.0
    %3550 = vmatpush1.msra.mxu0 %v367
    %3551 = vmatprep.subr.mxu0 0.0
    %3552 = vmatpush1.msra.mxu0 %v370
    %3553 = vmatprep.subr.mxu0 0.0
    %3554 = vmatpush1.msra.mxu0 %v373
    %3555 = vmatprep.mubr.f32.mxu0 %v2577
    %3556 = vmatmul.mubr.f32.gmra.mrb[0].mxu0 %v2576
    %v3557 = vpop.f32.mrb[0].mxu0
    %v3558 = vadd.f32 0.0, %v3557
    %v3559 = vpop.f32.mrb[0].mxu0
    %3560 = vmatprep.mubr.f32.mxu0 %v2580
    %3561 = vmatmul.mubr.f32.gmra.mrb[0].mxu0 %v2579
    %v3562 = vpop.f32.mrb[0].mxu0
    %v3563 = vadd.f32 0.0, %v3562
    %v3564 = vpop.f32.mrb[0].mxu0
    %3565 = vmatprep.mubr.f32.mxu0 %v2583
    %3566 = vmatmul.mubr.f32.gmra.mrb[0].mxu0 %v2582
    %v3567 = vpop.f32.mrb[0].mxu0
    %v3568 = vadd.f32 0.0, %v3567
    %v3569 = vpop.f32.mrb[0].mxu0
    %3570 = vdwg.mxu0
    %3571 = vmatprep.subr.mxu0 0.0
    %3572 = vmatpush1.msra.mxu0 %v376
    %3573 = vmatprep.subr.mxu0 0.0
    %3574 = vmatpush1.msra.mxu0 %v379
    %3575 = vmatprep.subr.mxu0 0.0
    %3576 = vmatpush1.msra.mxu0 %v382
    %3577 = vmatprep.subr.mxu0 0.0
    %3578 = vmatpush1.msra.mxu0 %v385
    %3579 = vmatprep.subr.mxu0 0.0
    %3580 = vmatpush1.msra.mxu0 %v388
    %3581 = vmatprep.subr.mxu0 0.0
    %3582 = vmatpush1.msra.mxu0 %v391
    %3583 = vmatprep.subr.mxu0 0.0
    %3584 = vmatpush1.msra.mxu0 %v394
    %3585 = vmatprep.subr.mxu0 0.0
    %3586 = vmatpush1.msra.mxu0 %v397
    %3587 = vmatprep.subr.mxu0 0.0
    %3588 = vmatpush1.msra.mxu0 %v400
    %3589 = vmatprep.subr.mxu0 0.0
    %3590 = vmatpush1.msra.mxu0 %v403
    %3591 = vmatprep.subr.mxu0 0.0
    %3592 = vmatpush1.msra.mxu0 %v406
    %3593 = vmatprep.subr.mxu0 0.0
    %3594 = vmatpush1.msra.mxu0 %v409
    %3595 = vmatprep.subr.mxu0 0.0
    %3596 = vmatpush1.msra.mxu0 %v2232
    %3597 = vmatprep.subr.mxu0 0.0
    %3598 = vmatpush1.msra.mxu0 0.0
    %3599 = vmatprep.subr.mxu0 0.0
    %3600 = vmatpush1.msra.mxu0 0.0
    %3601 = vmatprep.subr.mxu0 0.0
    %3602 = vmatpush1.msra.mxu0 0.0
    %3603 = vmatprep.subr.mxu0 0.0
    %3604 = vmatpush1.msra.mxu0 0.0
    %3605 = vmatprep.subr.mxu0 0.0
    %3606 = vmatpush1.msra.mxu0 0.0
    %3607 = vmatprep.subr.mxu0 0.0
    %3608 = vmatpush1.msra.mxu0 0.0
    %3609 = vmatprep.subr.mxu0 0.0
    %3610 = vmatpush1.msra.mxu0 0.0
    %3611 = vmatprep.subr.mxu0 0.0
    %3612 = vmatpush1.msra.mxu0 0.0
    %3613 = vmatprep.subr.mxu0 0.0
    %3614 = vmatpush1.msra.mxu0 0.0
    %3615 = vmatprep.subr.mxu0 0.0
    %3616 = vmatpush1.msra.mxu0 0.0
    %3617 = vmatprep.subr.mxu0 0.0
    %3618 = vmatpush1.msra.mxu0 0.0
    %3619 = vmatprep.subr.mxu0 0.0
    %3620 = vmatpush1.msra.mxu0 0.0
    %3621 = vmatprep.subr.mxu0 0.0
    %3622 = vmatpush1.msra.mxu0 0.0
    %3623 = vmatprep.subr.mxu0 0.0
    %3624 = vmatpush1.msra.mxu0 0.0
    %3625 = vmatprep.subr.mxu0 0.0
    %3626 = vmatpush1.msra.mxu0 0.0
    %3627 = vmatprep.subr.mxu0 0.0
    %3628 = vmatpush1.msra.mxu0 0.0
    %3629 = vmatprep.subr.mxu0 0.0
    %3630 = vmatpush1.msra.mxu0 0.0
    %3631 = vmatprep.subr.mxu0 0.0
    %3632 = vmatpush1.msra.mxu0 0.0
    %3633 = vmatprep.subr.mxu0 0.0
    %3634 = vmatpush1.msra.mxu0 0.0
    %3635 = vmatprep.mubr.f32.mxu0 0.0
    %3636 = vmatmul.mubr.f32.gmra.mrb[0].mxu0 %v3317
    %v3637 = vpop.f32.mrb[0].mxu0
    %v3638 = vadd.f32 %v3558, %v3637
    %v3639 = vpop.f32.mrb[0].mxu0
    %3640 = vmatprep.mubr.f32.mxu0 0.0
    %3641 = vmatmul.mubr.f32.gmra.mrb[0].mxu0 %v3320
    %v3642 = vpop.f32.mrb[0].mxu0
    %v3643 = vadd.f32 %v3563, %v3642
    %v3644 = vpop.f32.mrb[0].mxu0
    %3645 = vmatprep.mubr.f32.mxu0 0.0
    %3646 = vmatmul.mubr.f32.gmra.mrb[0].mxu0 %v3323
    %v3647 = vpop.f32.mrb[0].mxu0
    %v3648 = vadd.f32 %v3568, %v3647
    %v3649 = vpop.f32.mrb[0].mxu0
    %3650 = vdwg.mxu0
    %v3651 = vmul.f32 %v3475, %v2564
    %v3652 = vmul.f32 %v3477, %v2568
    %v3653 = vmul.f32 %v3638, %v2572
    %v3654 = vmul.f32 %v3481, %v2564
    %v3655 = vmul.f32 %v3483, %v2568
    %v3656 = vmul.f32 %v3643, %v2572
    %v3657 = vmul.f32 %v3487, %v2564
    %v3658 = vmul.f32 %v3489, %v2568
    %v3659 = vmul.f32 %v3648, %v2572
    %v3661 = vsel %vm63, %v2938, 0
    %v3664 = vsel %vm63, %v2941, 0
    %v3667 = vsel %vm63, %v2944, 0
    %3669 = vmatprep.subr.mxu0 %v144
    %3670 = vmatpush1.msra.mxu0 %v143
    %3671 = vmatprep.subr.mxu0 %v147
    %3672 = vmatpush1.msra.mxu0 %v146
    %3673 = vmatprep.subr.mxu0 %v150
    %3674 = vmatpush1.msra.mxu0 %v149
    %3675 = vmatprep.subr.mxu0 %v153
    %3676 = vmatpush1.msra.mxu0 %v152
    %3677 = vmatprep.subr.mxu0 %v156
    %3678 = vmatpush1.msra.mxu0 %v155
    %3679 = vmatprep.subr.mxu0 %v159
    %3680 = vmatpush1.msra.mxu0 %v158
    %3681 = vmatprep.subr.mxu0 %v162
    %3682 = vmatpush1.msra.mxu0 %v161
    %3683 = vmatprep.subr.mxu0 %v165
    %3684 = vmatpush1.msra.mxu0 %v164
    %3685 = vmatprep.subr.mxu0 %v168
    %3686 = vmatpush1.msra.mxu0 %v167
    %3687 = vmatprep.subr.mxu0 %v171
    %3688 = vmatpush1.msra.mxu0 %v170
    %3689 = vmatprep.subr.mxu0 %v174
    %3690 = vmatpush1.msra.mxu0 %v173
    %3691 = vmatprep.subr.mxu0 %v177
    %3692 = vmatpush1.msra.mxu0 %v176
    %3693 = vmatprep.subr.mxu0 %v180
    %3694 = vmatpush1.msra.mxu0 %v179
    %3695 = vmatprep.subr.mxu0 %v183
    %3696 = vmatpush1.msra.mxu0 %v182
    %3697 = vmatprep.subr.mxu0 %v186
    %3698 = vmatpush1.msra.mxu0 %v185
    %3699 = vmatprep.subr.mxu0 %v189
    %3700 = vmatpush1.msra.mxu0 %v188
    %3701 = vmatprep.subr.mxu0 %v192
    %3702 = vmatpush1.msra.mxu0 %v191
    %3703 = vmatprep.subr.mxu0 %v195
    %3704 = vmatpush1.msra.mxu0 %v194
    %3705 = vmatprep.subr.mxu0 %v198
    %3706 = vmatpush1.msra.mxu0 %v197
    %3707 = vmatprep.subr.mxu0 %v201
    %3708 = vmatpush1.msra.mxu0 %v200
    %3709 = vmatprep.subr.mxu0 %v204
    %3710 = vmatpush1.msra.mxu0 %v203
    %3711 = vmatprep.subr.mxu0 %v207
    %3712 = vmatpush1.msra.mxu0 %v206
    %3713 = vmatprep.subr.mxu0 %v210
    %3714 = vmatpush1.msra.mxu0 %v209
    %3715 = vmatprep.subr.mxu0 %v213
    %3716 = vmatpush1.msra.mxu0 %v212
    %3717 = vmatprep.subr.mxu0 %v216
    %3718 = vmatpush1.msra.mxu0 %v215
    %3719 = vmatprep.subr.mxu0 %v219
    %3720 = vmatpush1.msra.mxu0 %v218
    %3721 = vmatprep.subr.mxu0 %v222
    %3722 = vmatpush1.msra.mxu0 %v221
    %3723 = vmatprep.subr.mxu0 %v225
    %3724 = vmatpush1.msra.mxu0 %v224
    %3725 = vmatprep.subr.mxu0 %v228
    %3726 = vmatpush1.msra.mxu0 %v227
    %3727 = vmatprep.subr.mxu0 %v231
    %3728 = vmatpush1.msra.mxu0 %v230
    %3729 = vmatprep.subr.mxu0 %v234
    %3730 = vmatpush1.msra.mxu0 %v233
    %3731 = vmatprep.subr.mxu0 %v237
    %3732 = vmatpush1.msra.mxu0 %v236
    %3733 = vmatprep.mubr.f32.mxu0 %v2937
    %3734 = vmatmul.mubr.f32.gmra.mrb[0].mxu0 %v2936
    %v3735 = vpop.f32.mrb[0].mxu0
    %v3736 = vadd.f32 0.0, %v3735
    %v3737 = vpop.f32.mrb[0].mxu0
    %v3738 = vadd.f32 0.0, %v3737
    %3739 = vmatprep.mubr.f32.mxu0 %v2940
    %3740 = vmatmul.mubr.f32.gmra.mrb[0].mxu0 %v2939
    %v3741 = vpop.f32.mrb[0].mxu0
    %v3742 = vadd.f32 0.0, %v3741
    %v3743 = vpop.f32.mrb[0].mxu0
    %v3744 = vadd.f32 0.0, %v3743
    %3745 = vmatprep.mubr.f32.mxu0 %v2943
    %3746 = vmatmul.mubr.f32.gmra.mrb[0].mxu0 %v2942
    %v3747 = vpop.f32.mrb[0].mxu0
    %v3748 = vadd.f32 0.0, %v3747
    %v3749 = vpop.f32.mrb[0].mxu0
    %v3750 = vadd.f32 0.0, %v3749
    %3751 = vdwg.mxu0
    %3752 = vmatprep.subr.mxu0 %v240
    %3753 = vmatpush1.msra.mxu0 %v239
    %3754 = vmatprep.subr.mxu0 %v243
    %3755 = vmatpush1.msra.mxu0 %v242
    %3756 = vmatprep.subr.mxu0 %v246
    %3757 = vmatpush1.msra.mxu0 %v245
    %3758 = vmatprep.subr.mxu0 %v249
    %3759 = vmatpush1.msra.mxu0 %v248
    %3760 = vmatprep.subr.mxu0 %v252
    %3761 = vmatpush1.msra.mxu0 %v251
    %3762 = vmatprep.subr.mxu0 %v255
    %3763 = vmatpush1.msra.mxu0 %v254
    %3764 = vmatprep.subr.mxu0 %v258
    %3765 = vmatpush1.msra.mxu0 %v257
    %3766 = vmatprep.subr.mxu0 %v261
    %3767 = vmatpush1.msra.mxu0 %v260
    %3768 = vmatprep.subr.mxu0 %v264
    %3769 = vmatpush1.msra.mxu0 %v263
    %3770 = vmatprep.subr.mxu0 %v267
    %3771 = vmatpush1.msra.mxu0 %v266
    %3772 = vmatprep.subr.mxu0 %v270
    %3773 = vmatpush1.msra.mxu0 %v269
    %3774 = vmatprep.subr.mxu0 %v273
    %3775 = vmatpush1.msra.mxu0 %v272
    %3776 = vmatprep.subr.mxu0 %v2589
    %3777 = vmatpush1.msra.mxu0 %v2586
    %3778 = vmatprep.subr.mxu0 0.0
    %3779 = vmatpush1.msra.mxu0 0.0
    %3780 = vmatprep.subr.mxu0 0.0
    %3781 = vmatpush1.msra.mxu0 0.0
    %3782 = vmatprep.subr.mxu0 0.0
    %3783 = vmatpush1.msra.mxu0 0.0
    %3784 = vmatprep.subr.mxu0 0.0
    %3785 = vmatpush1.msra.mxu0 0.0
    %3786 = vmatprep.subr.mxu0 0.0
    %3787 = vmatpush1.msra.mxu0 0.0
    %3788 = vmatprep.subr.mxu0 0.0
    %3789 = vmatpush1.msra.mxu0 0.0
    %3790 = vmatprep.subr.mxu0 0.0
    %3791 = vmatpush1.msra.mxu0 0.0
    %3792 = vmatprep.subr.mxu0 0.0
    %3793 = vmatpush1.msra.mxu0 0.0
    %3794 = vmatprep.subr.mxu0 0.0
    %3795 = vmatpush1.msra.mxu0 0.0
    %3796 = vmatprep.subr.mxu0 0.0
    %3797 = vmatpush1.msra.mxu0 0.0
    %3798 = vmatprep.subr.mxu0 0.0
    %3799 = vmatpush1.msra.mxu0 0.0
    %3800 = vmatprep.subr.mxu0 0.0
    %3801 = vmatpush1.msra.mxu0 0.0
    %3802 = vmatprep.subr.mxu0 0.0
    %3803 = vmatpush1.msra.mxu0 0.0
    %3804 = vmatprep.subr.mxu0 0.0
    %3805 = vmatpush1.msra.mxu0 0.0
    %3806 = vmatprep.subr.mxu0 0.0
    %3807 = vmatpush1.msra.mxu0 0.0
    %3808 = vmatprep.subr.mxu0 0.0
    %3809 = vmatpush1.msra.mxu0 0.0
    %3810 = vmatprep.subr.mxu0 0.0
    %3811 = vmatpush1.msra.mxu0 0.0
    %3812 = vmatprep.subr.mxu0 0.0
    %3813 = vmatpush1.msra.mxu0 0.0
    %3814 = vmatprep.subr.mxu0 0.0
    %3815 = vmatpush1.msra.mxu0 0.0
    %3816 = vmatprep.mubr.f32.mxu0 0.0
    %3817 = vmatmul.mubr.f32.gmra.mrb[0].mxu0 %v3661
    %v3818 = vpop.f32.mrb[0].mxu0
    %v3819 = vadd.f32 %v3736, %v3818
    %v3820 = vpop.f32.mrb[0].mxu0
    %v3821 = vadd.f32 %v3738, %v3820
    %3822 = vmatprep.mubr.f32.mxu0 0.0
    %3823 = vmatmul.mubr.f32.gmra.mrb[0].mxu0 %v3664
    %v3824 = vpop.f32.mrb[0].mxu0
    %v3825 = vadd.f32 %v3742, %v3824
    %v3826 = vpop.f32.mrb[0].mxu0
    %v3827 = vadd.f32 %v3744, %v3826
    %3828 = vmatprep.mubr.f32.mxu0 0.0
    %3829 = vmatmul.mubr.f32.gmra.mrb[0].mxu0 %v3667
    %v3830 = vpop.f32.mrb[0].mxu0
    %v3831 = vadd.f32 %v3748, %v3830
    %v3832 = vpop.f32.mrb[0].mxu0
    %v3833 = vadd.f32 %v3750, %v3832
    %3834 = vdwg.mxu0
    %3835 = vmatprep.subr.mxu0 0.0
    %3836 = vmatpush1.msra.mxu0 %v145
    %3837 = vmatprep.subr.mxu0 0.0
    %3838 = vmatpush1.msra.mxu0 %v148
    %3839 = vmatprep.subr.mxu0 0.0
    %3840 = vmatpush1.msra.mxu0 %v151
    %3841 = vmatprep.subr.mxu0 0.0
    %3842 = vmatpush1.msra.mxu0 %v154
    %3843 = vmatprep.subr.mxu0 0.0
    %3844 = vmatpush1.msra.mxu0 %v157
    %3845 = vmatprep.subr.mxu0 0.0
    %3846 = vmatpush1.msra.mxu0 %v160
    %3847 = vmatprep.subr.mxu0 0.0
    %3848 = vmatpush1.msra.mxu0 %v163
    %3849 = vmatprep.subr.mxu0 0.0
    %3850 = vmatpush1.msra.mxu0 %v166
    %3851 = vmatprep.subr.mxu0 0.0
    %3852 = vmatpush1.msra.mxu0 %v169
    %3853 = vmatprep.subr.mxu0 0.0
    %3854 = vmatpush1.msra.mxu0 %v172
    %3855 = vmatprep.subr.mxu0 0.0
    %3856 = vmatpush1.msra.mxu0 %v175
    %3857 = vmatprep.subr.mxu0 0.0
    %3858 = vmatpush1.msra.mxu0 %v178
    %3859 = vmatprep.subr.mxu0 0.0
    %3860 = vmatpush1.msra.mxu0 %v181
    %3861 = vmatprep.subr.mxu0 0.0
    %3862 = vmatpush1.msra.mxu0 %v184
    %3863 = vmatprep.subr.mxu0 0.0
    %3864 = vmatpush1.msra.mxu0 %v187
    %3865 = vmatprep.subr.mxu0 0.0
    %3866 = vmatpush1.msra.mxu0 %v190
    %3867 = vmatprep.subr.mxu0 0.0
    %3868 = vmatpush1.msra.mxu0 %v193
    %3869 = vmatprep.subr.mxu0 0.0
    %3870 = vmatpush1.msra.mxu0 %v196
    %3871 = vmatprep.subr.mxu0 0.0
    %3872 = vmatpush1.msra.mxu0 %v199
    %3873 = vmatprep.subr.mxu0 0.0
    %3874 = vmatpush1.msra.mxu0 %v202
    %3875 = vmatprep.subr.mxu0 0.0
    %3876 = vmatpush1.msra.mxu0 %v205
    %3877 = vmatprep.subr.mxu0 0.0
    %3878 = vmatpush1.msra.mxu0 %v208
    %3879 = vmatprep.subr.mxu0 0.0
    %3880 = vmatpush1.msra.mxu0 %v211
    %3881 = vmatprep.subr.mxu0 0.0
    %3882 = vmatpush1.msra.mxu0 %v214
    %3883 = vmatprep.subr.mxu0 0.0
    %3884 = vmatpush1.msra.mxu0 %v217
    %3885 = vmatprep.subr.mxu0 0.0
    %3886 = vmatpush1.msra.mxu0 %v220
    %3887 = vmatprep.subr.mxu0 0.0
    %3888 = vmatpush1.msra.mxu0 %v223
    %3889 = vmatprep.subr.mxu0 0.0
    %3890 = vmatpush1.msra.mxu0 %v226
    %3891 = vmatprep.subr.mxu0 0.0
    %3892 = vmatpush1.msra.mxu0 %v229
    %3893 = vmatprep.subr.mxu0 0.0
    %3894 = vmatpush1.msra.mxu0 %v232
    %3895 = vmatprep.subr.mxu0 0.0
    %3896 = vmatpush1.msra.mxu0 %v235
    %3897 = vmatprep.subr.mxu0 0.0
    %3898 = vmatpush1.msra.mxu0 %v238
    %3899 = vmatprep.mubr.f32.mxu0 %v2937
    %3900 = vmatmul.mubr.f32.gmra.mrb[0].mxu0 %v2936
    %v3901 = vpop.f32.mrb[0].mxu0
    %v3902 = vadd.f32 0.0, %v3901
    %v3903 = vpop.f32.mrb[0].mxu0
    %3904 = vmatprep.mubr.f32.mxu0 %v2940
    %3905 = vmatmul.mubr.f32.gmra.mrb[0].mxu0 %v2939
    %v3906 = vpop.f32.mrb[0].mxu0
    %v3907 = vadd.f32 0.0, %v3906
    %v3908 = vpop.f32.mrb[0].mxu0
    %3909 = vmatprep.mubr.f32.mxu0 %v2943
    %3910 = vmatmul.mubr.f32.gmra.mrb[0].mxu0 %v2942
    %v3911 = vpop.f32.mrb[0].mxu0
    %v3912 = vadd.f32 0.0, %v3911
    %v3913 = vpop.f32.mrb[0].mxu0
    %3914 = vdwg.mxu0
    %3915 = vmatprep.subr.mxu0 0.0
    %3916 = vmatpush1.msra.mxu0 %v241
    %3917 = vmatprep.subr.mxu0 0.0
    %3918 = vmatpush1.msra.mxu0 %v244
    %3919 = vmatprep.subr.mxu0 0.0
    %3920 = vmatpush1.msra.mxu0 %v247
    %3921 = vmatprep.subr.mxu0 0.0
    %3922 = vmatpush1.msra.mxu0 %v250
    %3923 = vmatprep.subr.mxu0 0.0
    %3924 = vmatpush1.msra.mxu0 %v253
    %3925 = vmatprep.subr.mxu0 0.0
    %3926 = vmatpush1.msra.mxu0 %v256
    %3927 = vmatprep.subr.mxu0 0.0
    %3928 = vmatpush1.msra.mxu0 %v259
    %3929 = vmatprep.subr.mxu0 0.0
    %3930 = vmatpush1.msra.mxu0 %v262
    %3931 = vmatprep.subr.mxu0 0.0
    %3932 = vmatpush1.msra.mxu0 %v265
    %3933 = vmatprep.subr.mxu0 0.0
    %3934 = vmatpush1.msra.mxu0 %v268
    %3935 = vmatprep.subr.mxu0 0.0
    %3936 = vmatpush1.msra.mxu0 %v271
    %3937 = vmatprep.subr.mxu0 0.0
    %3938 = vmatpush1.msra.mxu0 %v274
    %3939 = vmatprep.subr.mxu0 0.0
    %3940 = vmatpush1.msra.mxu0 %v2592
    %3941 = vmatprep.subr.mxu0 0.0
    %3942 = vmatpush1.msra.mxu0 0.0
    %3943 = vmatprep.subr.mxu0 0.0
    %3944 = vmatpush1.msra.mxu0 0.0
    %3945 = vmatprep.subr.mxu0 0.0
    %3946 = vmatpush1.msra.mxu0 0.0
    %3947 = vmatprep.subr.mxu0 0.0
    %3948 = vmatpush1.msra.mxu0 0.0
    %3949 = vmatprep.subr.mxu0 0.0
    %3950 = vmatpush1.msra.mxu0 0.0
    %3951 = vmatprep.subr.mxu0 0.0
    %3952 = vmatpush1.msra.mxu0 0.0
    %3953 = vmatprep.subr.mxu0 0.0
    %3954 = vmatpush1.msra.mxu0 0.0
    %3955 = vmatprep.subr.mxu0 0.0
    %3956 = vmatpush1.msra.mxu0 0.0
    %3957 = vmatprep.subr.mxu0 0.0
    %3958 = vmatpush1.msra.mxu0 0.0
    %3959 = vmatprep.subr.mxu0 0.0
    %3960 = vmatpush1.msra.mxu0 0.0
    %3961 = vmatprep.subr.mxu0 0.0
    %3962 = vmatpush1.msra.mxu0 0.0
    %3963 = vmatprep.subr.mxu0 0.0
    %3964 = vmatpush1.msra.mxu0 0.0
    %3965 = vmatprep.subr.mxu0 0.0
    %3966 = vmatpush1.msra.mxu0 0.0
    %3967 = vmatprep.subr.mxu0 0.0
    %3968 = vmatpush1.msra.mxu0 0.0
    %3969 = vmatprep.subr.mxu0 0.0
    %3970 = vmatpush1.msra.mxu0 0.0
    %3971 = vmatprep.subr.mxu0 0.0
    %3972 = vmatpush1.msra.mxu0 0.0
    %3973 = vmatprep.subr.mxu0 0.0
    %3974 = vmatpush1.msra.mxu0 0.0
    %3975 = vmatprep.subr.mxu0 0.0
    %3976 = vmatpush1.msra.mxu0 0.0
    %3977 = vmatprep.subr.mxu0 0.0
    %3978 = vmatpush1.msra.mxu0 0.0
    %3979 = vmatprep.mubr.f32.mxu0 0.0
    %3980 = vmatmul.mubr.f32.gmra.mrb[0].mxu0 %v3661
    %v3981 = vpop.f32.mrb[0].mxu0
    %v3982 = vadd.f32 %v3902, %v3981
    %v3983 = vpop.f32.mrb[0].mxu0
    %3984 = vmatprep.mubr.f32.mxu0 0.0
    %3985 = vmatmul.mubr.f32.gmra.mrb[0].mxu0 %v3664
    %v3986 = vpop.f32.mrb[0].mxu0
    %v3987 = vadd.f32 %v3907, %v3986
    %v3988 = vpop.f32.mrb[0].mxu0
    %3989 = vmatprep.mubr.f32.mxu0 0.0
    %3990 = vmatmul.mubr.f32.gmra.mrb[0].mxu0 %v3667
    %v3991 = vpop.f32.mrb[0].mxu0
    %v3992 = vadd.f32 %v3912, %v3991
    %v3993 = vpop.f32.mrb[0].mxu0
    %3994 = vdwg.mxu0
    %v3995 = vmul.f32 %v3819, %v2924
    %v3996 = vmul.f32 %v3821, %v2928
    %v3997 = vmul.f32 %v3982, %v2932
    %v3998 = vmul.f32 %v3825, %v2924
    %v3999 = vmul.f32 %v3827, %v2928
    %v4000 = vmul.f32 %v3987, %v2932
    %v4001 = vmul.f32 %v3831, %v2924
    %v4002 = vmul.f32 %v3833, %v2928
    %v4003 = vmul.f32 %v3992, %v2932
    %v4005 = vsel %vm63, %v3282, 0
    %v4008 = vsel %vm63, %v3285, 0
    %v4011 = vsel %vm63, %v3288, 0
    %4013 = vmatprep.subr.mxu0 %v1709
    %4014 = vmatpush1.msra.mxu0 %v1707
    %4015 = vmatprep.subr.mxu0 %v1715
    %4016 = vmatpush1.msra.mxu0 %v1713
    %4017 = vmatprep.subr.mxu0 %v1721
    %4018 = vmatpush1.msra.mxu0 %v1719
    %4019 = vmatprep.subr.mxu0 %v1727
    %4020 = vmatpush1.msra.mxu0 %v1725
    %4021 = vmatprep.subr.mxu0 %v1733
    %4022 = vmatpush1.msra.mxu0 %v1731
    %4023 = vmatprep.subr.mxu0 %v1739
    %4024 = vmatpush1.msra.mxu0 %v1737
    %4025 = vmatprep.subr.mxu0 %v1745
    %4026 = vmatpush1.msra.mxu0 %v1743
    %4027 = vmatprep.subr.mxu0 %v1751
    %4028 = vmatpush1.msra.mxu0 %v1749
    %4029 = vmatprep.subr.mxu0 %v1757
    %4030 = vmatpush1.msra.mxu0 %v1755
    %4031 = vmatprep.subr.mxu0 %v1763
    %4032 = vmatpush1.msra.mxu0 %v1761
    %4033 = vmatprep.subr.mxu0 %v1769
    %4034 = vmatpush1.msra.mxu0 %v1767
    %4035 = vmatprep.subr.mxu0 %v1775
    %4036 = vmatpush1.msra.mxu0 %v1773
    %4037 = vmatprep.subr.mxu0 %v1781
    %4038 = vmatpush1.msra.mxu0 %v1779
    %4039 = vmatprep.subr.mxu0 %v1787
    %4040 = vmatpush1.msra.mxu0 %v1785
    %4041 = vmatprep.subr.mxu0 %v1793
    %4042 = vmatpush1.msra.mxu0 %v1791
    %4043 = vmatprep.subr.mxu0 %v1799
    %4044 = vmatpush1.msra.mxu0 %v1797
    %4045 = vmatprep.subr.mxu0 %v1805
    %4046 = vmatpush1.msra.mxu0 %v1803
    %4047 = vmatprep.subr.mxu0 %v1811
    %4048 = vmatpush1.msra.mxu0 %v1809
    %4049 = vmatprep.subr.mxu0 %v1817
    %4050 = vmatpush1.msra.mxu0 %v1815
    %4051 = vmatprep.subr.mxu0 %v1823
    %4052 = vmatpush1.msra.mxu0 %v1821
    %4053 = vmatprep.subr.mxu0 %v1829
    %4054 = vmatpush1.msra.mxu0 %v1827
    %4055 = vmatprep.subr.mxu0 %v1835
    %4056 = vmatpush1.msra.mxu0 %v1833
    %4057 = vmatprep.subr.mxu0 %v1841
    %4058 = vmatpush1.msra.mxu0 %v1839
    %4059 = vmatprep.subr.mxu0 %v1847
    %4060 = vmatpush1.msra.mxu0 %v1845
    %4061 = vmatprep.subr.mxu0 %v1853
    %4062 = vmatpush1.msra.mxu0 %v1851
    %4063 = vmatprep.subr.mxu0 %v1859
    %4064 = vmatpush1.msra.mxu0 %v1857
    %4065 = vmatprep.subr.mxu0 %v1865
    %4066 = vmatpush1.msra.mxu0 %v1863
    %4067 = vmatprep.subr.mxu0 %v1871
    %4068 = vmatpush1.msra.mxu0 %v1869
    %4069 = vmatprep.subr.mxu0 %v1877
    %4070 = vmatpush1.msra.mxu0 %v1875
    %4071 = vmatprep.subr.mxu0 %v1883
    %4072 = vmatpush1.msra.mxu0 %v1881
    %4073 = vmatprep.subr.mxu0 %v1889
    %4074 = vmatpush1.msra.mxu0 %v1887
    %4075 = vmatprep.subr.mxu0 %v1895
    %4076 = vmatpush1.msra.mxu0 %v1893
    %4077 = vmatprep.mubr.f32.mxu0 %v3281
    %4078 = vmatmul.mubr.f32.gmra.mrb[0].mxu0 %v3280
    %v4079 = vpop.f32.mrb[0].mxu0
    %v4080 = vadd.f32 0.0, %v4079
    %v4081 = vpop.f32.mrb[0].mxu0
    %v4082 = vadd.f32 0.0, %v4081
    %4083 = vmatprep.mubr.f32.mxu0 %v3284
    %4084 = vmatmul.mubr.f32.gmra.mrb[0].mxu0 %v3283
    %v4085 = vpop.f32.mrb[0].mxu0
    %v4086 = vadd.f32 0.0, %v4085
    %v4087 = vpop.f32.mrb[0].mxu0
    %v4088 = vadd.f32 0.0, %v4087
    %4089 = vmatprep.mubr.f32.mxu0 %v3287
    %4090 = vmatmul.mubr.f32.gmra.mrb[0].mxu0 %v3286
    %v4091 = vpop.f32.mrb[0].mxu0
    %v4092 = vadd.f32 0.0, %v4091
    %v4093 = vpop.f32.mrb[0].mxu0
    %v4094 = vadd.f32 0.0, %v4093
    %4095 = vdwg.mxu0
    %4096 = vmatprep.subr.mxu0 %v1901
    %4097 = vmatpush1.msra.mxu0 %v1899
    %4098 = vmatprep.subr.mxu0 %v1907
    %4099 = vmatpush1.msra.mxu0 %v1905
    %4100 = vmatprep.subr.mxu0 %v1913
    %4101 = vmatpush1.msra.mxu0 %v1911
    %4102 = vmatprep.subr.mxu0 %v1919
    %4103 = vmatpush1.msra.mxu0 %v1917
    %4104 = vmatprep.subr.mxu0 %v1925
    %4105 = vmatpush1.msra.mxu0 %v1923
    %4106 = vmatprep.subr.mxu0 %v1931
    %4107 = vmatpush1.msra.mxu0 %v1929
    %4108 = vmatprep.subr.mxu0 %v1937
    %4109 = vmatpush1.msra.mxu0 %v1935
    %4110 = vmatprep.subr.mxu0 %v1943
    %4111 = vmatpush1.msra.mxu0 %v1941
    %4112 = vmatprep.subr.mxu0 %v1949
    %4113 = vmatpush1.msra.mxu0 %v1947
    %4114 = vmatprep.subr.mxu0 %v1955
    %4115 = vmatpush1.msra.mxu0 %v1953
    %4116 = vmatprep.subr.mxu0 %v1961
    %4117 = vmatpush1.msra.mxu0 %v1959
    %4118 = vmatprep.subr.mxu0 %v1967
    %4119 = vmatpush1.msra.mxu0 %v1965
    %4120 = vmatprep.subr.mxu0 %v2949
    %4121 = vmatpush1.msra.mxu0 %v2946
    %4122 = vmatprep.subr.mxu0 0.0
    %4123 = vmatpush1.msra.mxu0 0.0
    %4124 = vmatprep.subr.mxu0 0.0
    %4125 = vmatpush1.msra.mxu0 0.0
    %4126 = vmatprep.subr.mxu0 0.0
    %4127 = vmatpush1.msra.mxu0 0.0
    %4128 = vmatprep.subr.mxu0 0.0
    %4129 = vmatpush1.msra.mxu0 0.0
    %4130 = vmatprep.subr.mxu0 0.0
    %4131 = vmatpush1.msra.mxu0 0.0
    %4132 = vmatprep.subr.mxu0 0.0
    %4133 = vmatpush1.msra.mxu0 0.0
    %4134 = vmatprep.subr.mxu0 0.0
    %4135 = vmatpush1.msra.mxu0 0.0
    %4136 = vmatprep.subr.mxu0 0.0
    %4137 = vmatpush1.msra.mxu0 0.0
    %4138 = vmatprep.subr.mxu0 0.0
    %4139 = vmatpush1.msra.mxu0 0.0
    %4140 = vmatprep.subr.mxu0 0.0
    %4141 = vmatpush1.msra.mxu0 0.0
    %4142 = vmatprep.subr.mxu0 0.0
    %4143 = vmatpush1.msra.mxu0 0.0
    %4144 = vmatprep.subr.mxu0 0.0
    %4145 = vmatpush1.msra.mxu0 0.0
    %4146 = vmatprep.subr.mxu0 0.0
    %4147 = vmatpush1.msra.mxu0 0.0
    %4148 = vmatprep.subr.mxu0 0.0
    %4149 = vmatpush1.msra.mxu0 0.0
    %4150 = vmatprep.subr.mxu0 0.0
    %4151 = vmatpush1.msra.mxu0 0.0
    %4152 = vmatprep.subr.mxu0 0.0
    %4153 = vmatpush1.msra.mxu0 0.0
    %4154 = vmatprep.subr.mxu0 0.0
    %4155 = vmatpush1.msra.mxu0 0.0
    %4156 = vmatprep.subr.mxu0 0.0
    %4157 = vmatpush1.msra.mxu0 0.0
    %4158 = vmatprep.subr.mxu0 0.0
    %4159 = vmatpush1.msra.mxu0 0.0
    %4160 = vmatprep.mubr.f32.mxu0 0.0
    %4161 = vmatmul.mubr.f32.gmra.mrb[0].mxu0 %v4005
    %v4162 = vpop.f32.mrb[0].mxu0
    %v4163 = vadd.f32 %v4080, %v4162
    %v4164 = vpop.f32.mrb[0].mxu0
    %v4165 = vadd.f32 %v4082, %v4164
    %4166 = vmatprep.mubr.f32.mxu0 0.0
    %4167 = vmatmul.mubr.f32.gmra.mrb[0].mxu0 %v4008
    %v4168 = vpop.f32.mrb[0].mxu0
    %v4169 = vadd.f32 %v4086, %v4168
    %v4170 = vpop.f32.mrb[0].mxu0
    %v4171 = vadd.f32 %v4088, %v4170
    %4172 = vmatprep.mubr.f32.mxu0 0.0
    %4173 = vmatmul.mubr.f32.gmra.mrb[0].mxu0 %v4011
    %v4174 = vpop.f32.mrb[0].mxu0
    %v4175 = vadd.f32 %v4092, %v4174
    %v4176 = vpop.f32.mrb[0].mxu0
    %v4177 = vadd.f32 %v4094, %v4176
    %4178 = vdwg.mxu0
    %4179 = vmatprep.subr.mxu0 0.0
    %4180 = vmatpush1.msra.mxu0 %v1711
    %4181 = vmatprep.subr.mxu0 0.0
    %4182 = vmatpush1.msra.mxu0 %v1717
    %4183 = vmatprep.subr.mxu0 0.0
    %4184 = vmatpush1.msra.mxu0 %v1723
    %4185 = vmatprep.subr.mxu0 0.0
    %4186 = vmatpush1.msra.mxu0 %v1729
    %4187 = vmatprep.subr.mxu0 0.0
    %4188 = vmatpush1.msra.mxu0 %v1735
    %4189 = vmatprep.subr.mxu0 0.0
    %4190 = vmatpush1.msra.mxu0 %v1741
    %4191 = vmatprep.subr.mxu0 0.0
    %4192 = vmatpush1.msra.mxu0 %v1747
    %4193 = vmatprep.subr.mxu0 0.0
    %4194 = vmatpush1.msra.mxu0 %v1753
    %4195 = vmatprep.subr.mxu0 0.0
    %4196 = vmatpush1.msra.mxu0 %v1759
    %4197 = vmatprep.subr.mxu0 0.0
    %4198 = vmatpush1.msra.mxu0 %v1765
    %4199 = vmatprep.subr.mxu0 0.0
    %4200 = vmatpush1.msra.mxu0 %v1771
    %4201 = vmatprep.subr.mxu0 0.0
    %4202 = vmatpush1.msra.mxu0 %v1777
    %4203 = vmatprep.subr.mxu0 0.0
    %4204 = vmatpush1.msra.mxu0 %v1783
    %4205 = vmatprep.subr.mxu0 0.0
    %4206 = vmatpush1.msra.mxu0 %v1789
    %4207 = vmatprep.subr.mxu0 0.0
    %4208 = vmatpush1.msra.mxu0 %v1795
    %4209 = vmatprep.subr.mxu0 0.0
    %4210 = vmatpush1.msra.mxu0 %v1801
    %4211 = vmatprep.subr.mxu0 0.0
    %4212 = vmatpush1.msra.mxu0 %v1807
    %4213 = vmatprep.subr.mxu0 0.0
    %4214 = vmatpush1.msra.mxu0 %v1813
    %4215 = vmatprep.subr.mxu0 0.0
    %4216 = vmatpush1.msra.mxu0 %v1819
    %4217 = vmatprep.subr.mxu0 0.0
    %4218 = vmatpush1.msra.mxu0 %v1825
    %4219 = vmatprep.subr.mxu0 0.0
    %4220 = vmatpush1.msra.mxu0 %v1831
    %4221 = vmatprep.subr.mxu0 0.0
    %4222 = vmatpush1.msra.mxu0 %v1837
    %4223 = vmatprep.subr.mxu0 0.0
    %4224 = vmatpush1.msra.mxu0 %v1843
    %4225 = vmatprep.subr.mxu0 0.0
    %4226 = vmatpush1.msra.mxu0 %v1849
    %4227 = vmatprep.subr.mxu0 0.0
    %4228 = vmatpush1.msra.mxu0 %v1855
    %4229 = vmatprep.subr.mxu0 0.0
    %4230 = vmatpush1.msra.mxu0 %v1861
    %4231 = vmatprep.subr.mxu0 0.0
    %4232 = vmatpush1.msra.mxu0 %v1867
    %4233 = vmatprep.subr.mxu0 0.0
    %4234 = vmatpush1.msra.mxu0 %v1873
    %4235 = vmatprep.subr.mxu0 0.0
    %4236 = vmatpush1.msra.mxu0 %v1879
    %4237 = vmatprep.subr.mxu0 0.0
    %4238 = vmatpush1.msra.mxu0 %v1885
    %4239 = vmatprep.subr.mxu0 0.0
    %4240 = vmatpush1.msra.mxu0 %v1891
    %4241 = vmatprep.subr.mxu0 0.0
    %4242 = vmatpush1.msra.mxu0 %v1897
    %4243 = vmatprep.mubr.f32.mxu0 %v3281
    %4244 = vmatmul.mubr.f32.gmra.mrb[0].mxu0 %v3280
    %v4245 = vpop.f32.mrb[0].mxu0
    %v4246 = vadd.f32 0.0, %v4245
    %v4247 = vpop.f32.mrb[0].mxu0
    %4248 = vmatprep.mubr.f32.mxu0 %v3284
    %4249 = vmatmul.mubr.f32.gmra.mrb[0].mxu0 %v3283
    %v4250 = vpop.f32.mrb[0].mxu0
    %v4251 = vadd.f32 0.0, %v4250
    %v4252 = vpop.f32.mrb[0].mxu0
    %4253 = vmatprep.mubr.f32.mxu0 %v3287
    %4254 = vmatmul.mubr.f32.gmra.mrb[0].mxu0 %v3286
    %v4255 = vpop.f32.mrb[0].mxu0
    %v4256 = vadd.f32 0.0, %v4255
    %v4257 = vpop.f32.mrb[0].mxu0
    %4258 = vdwg.mxu0
    %4259 = vmatprep.subr.mxu0 0.0
    %4260 = vmatpush1.msra.mxu0 %v1903
    %4261 = vmatprep.subr.mxu0 0.0
    %4262 = vmatpush1.msra.mxu0 %v1909
    %4263 = vmatprep.subr.mxu0 0.0
    %4264 = vmatpush1.msra.mxu0 %v1915
    %4265 = vmatprep.subr.mxu0 0.0
    %4266 = vmatpush1.msra.mxu0 %v1921
    %4267 = vmatprep.subr.mxu0 0.0
    %4268 = vmatpush1.msra.mxu0 %v1927
    %4269 = vmatprep.subr.mxu0 0.0
    %4270 = vmatpush1.msra.mxu0 %v1933
    %4271 = vmatprep.subr.mxu0 0.0
    %4272 = vmatpush1.msra.mxu0 %v1939
    %4273 = vmatprep.subr.mxu0 0.0
    %4274 = vmatpush1.msra.mxu0 %v1945
    %4275 = vmatprep.subr.mxu0 0.0
    %4276 = vmatpush1.msra.mxu0 %v1951
    %4277 = vmatprep.subr.mxu0 0.0
    %4278 = vmatpush1.msra.mxu0 %v1957
    %4279 = vmatprep.subr.mxu0 0.0
    %4280 = vmatpush1.msra.mxu0 %v1963
    %4281 = vmatprep.subr.mxu0 0.0
    %4282 = vmatpush1.msra.mxu0 %v1969
    %4283 = vmatprep.subr.mxu0 0.0
    %4284 = vmatpush1.msra.mxu0 %v2952
    %4285 = vmatprep.subr.mxu0 0.0
    %4286 = vmatpush1.msra.mxu0 0.0
    %4287 = vmatprep.subr.mxu0 0.0
    %4288 = vmatpush1.msra.mxu0 0.0
    %4289 = vmatprep.subr.mxu0 0.0
    %4290 = vmatpush1.msra.mxu0 0.0
    %4291 = vmatprep.subr.mxu0 0.0
    %4292 = vmatpush1.msra.mxu0 0.0
    %4293 = vmatprep.subr.mxu0 0.0
    %4294 = vmatpush1.msra.mxu0 0.0
    %4295 = vmatprep.subr.mxu0 0.0
    %4296 = vmatpush1.msra.mxu0 0.0
    %4297 = vmatprep.subr.mxu0 0.0
    %4298 = vmatpush1.msra.mxu0 0.0
    %4299 = vmatprep.subr.mxu0 0.0
    %4300 = vmatpush1.msra.mxu0 0.0
    %4301 = vmatprep.subr.mxu0 0.0
    %4302 = vmatpush1.msra.mxu0 0.0
    %4303 = vmatprep.subr.mxu0 0.0
    %4304 = vmatpush1.msra.mxu0 0.0
    %4305 = vmatprep.subr.mxu0 0.0
    %4306 = vmatpush1.msra.mxu0 0.0
    %4307 = vmatprep.subr.mxu0 0.0
    %4308 = vmatpush1.msra.mxu0 0.0
    %4309 = vmatprep.subr.mxu0 0.0
    %4310 = vmatpush1.msra.mxu0 0.0
    %4311 = vmatprep.subr.mxu0 0.0
    %4312 = vmatpush1.msra.mxu0 0.0
    %4313 = vmatprep.subr.mxu0 0.0
    %4314 = vmatpush1.msra.mxu0 0.0
    %4315 = vmatprep.subr.mxu0 0.0
    %4316 = vmatpush1.msra.mxu0 0.0
    %4317 = vmatprep.subr.mxu0 0.0
    %4318 = vmatpush1.msra.mxu0 0.0
    %4319 = vmatprep.subr.mxu0 0.0
    %4320 = vmatpush1.msra.mxu0 0.0
    %4321 = vmatprep.subr.mxu0 0.0
    %4322 = vmatpush1.msra.mxu0 0.0
    %4323 = vmatprep.mubr.f32.mxu0 0.0
    %4324 = vmatmul.mubr.f32.gmra.mrb[0].mxu0 %v4005
    %v4325 = vpop.f32.mrb[0].mxu0
    %v4326 = vadd.f32 %v4246, %v4325
    %v4327 = vpop.f32.mrb[0].mxu0
    %4328 = vmatprep.mubr.f32.mxu0 0.0
    %4329 = vmatmul.mubr.f32.gmra.mrb[0].mxu0 %v4008
    %v4330 = vpop.f32.mrb[0].mxu0
    %v4331 = vadd.f32 %v4251, %v4330
    %v4332 = vpop.f32.mrb[0].mxu0
    %4333 = vmatprep.mubr.f32.mxu0 0.0
    %4334 = vmatmul.mubr.f32.gmra.mrb[0].mxu0 %v4011
    %v4335 = vpop.f32.mrb[0].mxu0
    %v4336 = vadd.f32 %v4256, %v4335
    %v4337 = vpop.f32.mrb[0].mxu0
    %4338 = vdwg.mxu0
    %v4339 = vmul.f32 %v4163, %v2174
    %v4340 = vmul.f32 %v4165, %v2176
    %v4341 = vmul.f32 %v4326, %v2178
    %v4342 = vmul.f32 %v4169, %v2174
    %v4343 = vmul.f32 %v4171, %v2176
    %v4344 = vmul.f32 %v4331, %v2178
    %v4345 = vmul.f32 %v4175, %v2174
    %v4346 = vmul.f32 %v4177, %v2176
    %v4347 = vmul.f32 %v4336, %v2178
    %4348 = vst [vmem:[#allocation2 + $0x1b0] sm:$0xff] %v3651
    %4349 = vst [vmem:[#allocation2 + $0x1b8] sm:$0xff] %v3652
    %4350 = vst.msk [vmem:[#allocation2 + $0x1c0] sm:$0xff] %vm63, %v3653
    %4351 = vst [vmem:[#allocation2 + $0x1c8] sm:$0xff] %v3654
    %4352 = vst [vmem:[#allocation2 + $0x1d0] sm:$0xff] %v3655
    %4353 = vst.msk [vmem:[#allocation2 + $0x1d8] sm:$0xff] %vm63, %v3656
    %4354 = vst [vmem:[#allocation2 + $0x1e0] sm:$0x3] %v3657
    %4355 = vst [vmem:[#allocation2 + $0x1e8] sm:$0x3] %v3658
    %4356 = vst.msk [vmem:[#allocation2 + $0x1f0] sm:$0x3] %vm2196, %v3659
    %4357 = vst [vmem:[#allocation2 + $0x1f8] sm:$0xff] %v3995
    %4358 = vst [vmem:[#allocation2 + $0x200] sm:$0xff] %v3996
    %4359 = vst.msk [vmem:[#allocation2 + $0x208] sm:$0xff] %vm63, %v3997
    %4360 = vst [vmem:[#allocation2 + $0x210] sm:$0xff] %v3998
    %4361 = vst [vmem:[#allocation2 + $0x218] sm:$0xff] %v3999
    %4362 = vst.msk [vmem:[#allocation2 + $0x220] sm:$0xff] %vm63, %v4000
    %4363 = vst [vmem:[#allocation2 + $0x228] sm:$0x3] %v4001
    %4364 = vst [vmem:[#allocation2 + $0x230] sm:$0x3] %v4002
    %4365 = vst.msk [vmem:[#allocation2 + $0x238] sm:$0x3] %vm2196, %v4003
    %4366 = vst [vmem:[#allocation2 + $0x240] sm:$0xff] %v4339
    %4367 = vst [vmem:[#allocation2 + $0x248] sm:$0xff] %v4340
    %4368 = vst.msk [vmem:[#allocation2 + $0x250] sm:$0xff] %vm63, %v4341
    %4369 = vst [vmem:[#allocation2 + $0x258] sm:$0xff] %v4342
    %4370 = vst [vmem:[#allocation2 + $0x260] sm:$0xff] %v4343
    %4371 = vst.msk [vmem:[#allocation2 + $0x268] sm:$0xff] %vm63, %v4344
    %4372 = vst [vmem:[#allocation2 + $0x270] sm:$0x3] %v4345
    %4373 = vst [vmem:[#allocation2 + $0x278] sm:$0x3] %v4346
    %4374 = vst.msk [vmem:[#allocation2 + $0x280] sm:$0x3] %vm2196, %v4347
    %v4375 = vld [vmem:[%s7] sm:$0xff]
    %v4376 = vld [vmem:[%s7 + $0x8] sm:$0xff]
    %v4377 = vld [vmem:[#allocation2] sm:$0xff]
    %v4378 = vld [vmem:[#allocation2 + $0x8] sm:$0xff]
    %v4379 = vld [vmem:[#allocation2 + $0x10] sm:$0xff]
    %v4380 = vld [vmem:[#allocation2 + $0x18] sm:$0xff]
    %v4381 = vld [vmem:[#allocation2 + $0x20] sm:$0xff]
    %v4382 = vld [vmem:[#allocation2 + $0x28] sm:$0xff]
    %v4383 = vld [vmem:[#allocation2 + $0x30] sm:$0xff]
    %v4384 = vld [vmem:[#allocation2 + $0x38] sm:$0xff]
    %v4385 = vld [vmem:[#allocation2 + $0x40] sm:$0xff]
    %v4386 = vld [vmem:[#allocation2 + $0x48] sm:$0xff]
    %v4387 = vld [vmem:[#allocation2 + $0x50] sm:$0xff]
    %v4388 = vld [vmem:[#allocation2 + $0x58] sm:$0xff]
    %v4389 = vld [vmem:[#allocation2 + $0x60] sm:$0xff]
    %v4390 = vld [vmem:[#allocation2 + $0x68] sm:$0xff]
    %v4391 = vld [vmem:[#allocation2 + $0x70] sm:$0xff]
    %v4392 = vld [vmem:[#allocation2 + $0x78] sm:$0xff]
    %v4393 = vld [vmem:[#allocation2 + $0x80] sm:$0xff]
    %v4394 = vld [vmem:[#allocation2 + $0x88] sm:$0xff]
    %v4395 = vld [vmem:[#allocation2 + $0x90] sm:$0xff]
    %v4396 = vld [vmem:[#allocation2 + $0x98] sm:$0xff]
    %v4397 = vld [vmem:[#allocation2 + $0xa0] sm:$0xff]
    %v4398 = vld [vmem:[#allocation2 + $0xa8] sm:$0xff]
    %v4399 = vld [vmem:[#allocation2 + $0xb0] sm:$0xff]
    %v4400 = vld [vmem:[#allocation2 + $0xb8] sm:$0xff]
    %v4401 = vld [vmem:[#allocation2 + $0xc0] sm:$0xff]
    %v4402 = vld [vmem:[#allocation2 + $0xc8] sm:$0xff]
    %v4403 = vld [vmem:[#allocation2 + $0xd0] sm:$0xff]
    %v4404 = vld [vmem:[#allocation2 + $0xd8] sm:$0xff]
    %v4405 = vld [vmem:[#allocation2 + $0xe0] sm:$0xff]
    %v4406 = vld [vmem:[#allocation2 + $0xe8] sm:$0xff]
    %v4407 = vld [vmem:[#allocation2 + $0xf0] sm:$0xff]
    %v4408 = vld [vmem:[#allocation2 + $0xf8] sm:$0xff]
    %v4409 = vld [vmem:[#allocation2 + $0x100] sm:$0xff]
    %v4410 = vld [vmem:[#allocation2 + $0x108] sm:$0xff]
    %v4411 = vld [vmem:[#allocation2 + $0x110] sm:$0xff]
    %v4412 = vld [vmem:[#allocation2 + $0x118] sm:$0xff]
    %v4413 = vld [vmem:[#allocation2 + $0x120] sm:$0xff]
    %v4414 = vld [vmem:[#allocation2 + $0x128] sm:$0xff]
    %v4415 = vld [vmem:[#allocation2 + $0x130] sm:$0xff]
    %v4416 = vld [vmem:[#allocation2 + $0x138] sm:$0xff]
    %v4417 = vld [vmem:[#allocation2 + $0x140] sm:$0xff]
    %v4418 = vld [vmem:[#allocation2 + $0x148] sm:$0xff]
    %v4419 = vld [vmem:[#allocation2 + $0x150] sm:$0xff]
    %v4420 = vld [vmem:[#allocation2 + $0x158] sm:$0xff]
    %v4421 = vld [vmem:[#allocation2 + $0x160] sm:$0xff]
    %v4422 = vld [vmem:[#allocation2 + $0x168] sm:$0xff]
    %v4423 = vld [vmem:[#allocation2 + $0x170] sm:$0xff]
    %v4424 = vld [vmem:[#allocation2 + $0x178] sm:$0xff]
    %v4425 = vld [vmem:[#allocation2 + $0x180] sm:$0xff]
    %v4426 = vld [vmem:[#allocation2 + $0x188] sm:$0xff]
    %v4427 = vld [vmem:[#allocation2 + $0x190] sm:$0xff]
    %v4428 = vld [vmem:[#allocation2 + $0x198] sm:$0xff]
    %v4429 = vld [vmem:[#allocation2 + $0x1a0] sm:$0xff]
    %v4430 = vld [vmem:[#allocation2 + $0x1a8] sm:$0xff]
    %v4431 = vld [vmem:[#allocation2 + $0x1b0] sm:$0xff]
    %v4432 = vld [vmem:[#allocation2 + $0x1b8] sm:$0xff]
    %v4433 = vld [vmem:[#allocation2 + $0x1c0] sm:$0xff]
    %v4434 = vld [vmem:[#allocation2 + $0x1c8] sm:$0xff]
    %v4435 = vld [vmem:[#allocation2 + $0x1d0] sm:$0xff]
    %v4436 = vld [vmem:[#allocation2 + $0x1d8] sm:$0xff]
    %v4437 = vld [vmem:[#allocation2 + $0x1e0] sm:$0xff]
    %v4438 = vld [vmem:[#allocation2 + $0x1e8] sm:$0xff]
    %v4439 = vld [vmem:[#allocation2 + $0x1f0] sm:$0xff]
    %v4440 = vld [vmem:[#allocation2 + $0x1f8] sm:$0xff]
    %v4441 = vld [vmem:[#allocation2 + $0x200] sm:$0xff]
    %v4442 = vld [vmem:[#allocation2 + $0x208] sm:$0xff]
    %v4443 = vld [vmem:[#allocation2 + $0x210] sm:$0xff]
    %v4444 = vld [vmem:[#allocation2 + $0x218] sm:$0xff]
    %v4445 = vld [vmem:[#allocation2 + $0x220] sm:$0xff]
    %v4446 = vld [vmem:[#allocation2 + $0x228] sm:$0xff]
    %v4447 = vld [vmem:[#allocation2 + $0x230] sm:$0xff]
    %v4448 = vld [vmem:[#allocation2 + $0x238] sm:$0xff]
    %v4449 = vld [vmem:[#allocation2 + $0x240] sm:$0xff]
    %v4450 = vld [vmem:[#allocation2 + $0x248] sm:$0xff]
    %v4451 = vld [vmem:[#allocation2 + $0x250] sm:$0xff]
    %v4452 = vld [vmem:[#allocation2 + $0x258] sm:$0xff]
    %v4453 = vld [vmem:[#allocation2 + $0x260] sm:$0xff]
    %v4454 = vld [vmem:[#allocation2 + $0x268] sm:$0xff]
    %v4455 = vld [vmem:[#allocation2 + $0x270] sm:$0xff]
    %v4456 = vld [vmem:[#allocation2 + $0x278] sm:$0xff]
    %v4457 = vld [vmem:[#allocation2 + $0x280] sm:$0xff]
    %v4458 = vld [vmem:[%s8] sm:$0xff]
    %4460 = vset.pattern.permute.xlu0 0
    %4461 = vperm.xlu0 %4460, %v4458
    %v4462 = vpop.permute.xlu0 %4461
    %vm4464 = vcmask 719872
    %v4466 = vsel %vm4464, %v4376, 0
    %4468 = vmatprep.subr.mxu0 %v4378
    %4469 = vmatpush1.msra.mxu0 %v4377
    %4470 = vmatprep.subr.mxu0 %v4381
    %4471 = vmatpush1.msra.mxu0 %v4380
    %4472 = vmatprep.subr.mxu0 %v4384
    %4473 = vmatpush1.msra.mxu0 %v4383
    %4474 = vmatprep.subr.mxu0 %v4387
    %4475 = vmatpush1.msra.mxu0 %v4386
    %4476 = vmatprep.subr.mxu0 %v4390
    %4477 = vmatpush1.msra.mxu0 %v4389
    %4478 = vmatprep.subr.mxu0 %v4393
    %4479 = vmatpush1.msra.mxu0 %v4392
    %4480 = vmatprep.subr.mxu0 %v4396
    %4481 = vmatpush1.msra.mxu0 %v4395
    %4482 = vmatprep.subr.mxu0 %v4399
    %4483 = vmatpush1.msra.mxu0 %v4398
    %4484 = vmatprep.subr.mxu0 %v4402
    %4485 = vmatpush1.msra.mxu0 %v4401
    %4486 = vmatprep.subr.mxu0 %v4405
    %4487 = vmatpush1.msra.mxu0 %v4404
    %4488 = vmatprep.subr.mxu0 %v4408
    %4489 = vmatpush1.msra.mxu0 %v4407
    %4490 = vmatprep.subr.mxu0 %v4411
    %4491 = vmatpush1.msra.mxu0 %v4410
    %4492 = vmatprep.subr.mxu0 %v4414
    %4493 = vmatpush1.msra.mxu0 %v4413
    %4494 = vmatprep.subr.mxu0 %v4417
    %4495 = vmatpush1.msra.mxu0 %v4416
    %4496 = vmatprep.subr.mxu0 %v4420
    %4497 = vmatpush1.msra.mxu0 %v4419
    %4498 = vmatprep.subr.mxu0 %v4423
    %4499 = vmatpush1.msra.mxu0 %v4422
    %4500 = vmatprep.subr.mxu0 %v4426
    %4501 = vmatpush1.msra.mxu0 %v4425
    %4502 = vmatprep.subr.mxu0 %v4429
    %4503 = vmatpush1.msra.mxu0 %v4428
    %4504 = vmatprep.subr.mxu0 %v4432
    %4505 = vmatpush1.msra.mxu0 %v4431
    %4506 = vmatprep.subr.mxu0 %v4435
    %4507 = vmatpush1.msra.mxu0 %v4434
    %4508 = vmatprep.subr.mxu0 %v4438
    %4509 = vmatpush1.msra.mxu0 %v4437
    %4510 = vmatprep.subr.mxu0 %v4441
    %4511 = vmatpush1.msra.mxu0 %v4440
    %4512 = vmatprep.subr.mxu0 %v4444
    %4513 = vmatpush1.msra.mxu0 %v4443
    %4514 = vmatprep.subr.mxu0 %v4447
    %4515 = vmatpush1.msra.mxu0 %v4446
    %4516 = vmatprep.subr.mxu0 %v4450
    %4517 = vmatpush1.msra.mxu0 %v4449
    %4518 = vmatprep.subr.mxu0 %v4453
    %4519 = vmatpush1.msra.mxu0 %v4452
    %4520 = vmatprep.subr.mxu0 %v4456
    %4521 = vmatpush1.msra.mxu0 %v4455
    %4522 = vmatprep.subr.mxu0 0.0
    %4523 = vmatpush1.msra.mxu0 0.0
    %4524 = vmatprep.subr.mxu0 0.0
    %4525 = vmatpush1.msra.mxu0 0.0
    %4526 = vmatprep.subr.mxu0 0.0
    %4527 = vmatpush1.msra.mxu0 0.0
    %4528 = vmatprep.subr.mxu0 0.0
    %4529 = vmatpush1.msra.mxu0 0.0
    %4530 = vmatprep.subr.mxu0 0.0
    %4531 = vmatpush1.msra.mxu0 0.0
    %4532 = vmatprep.mubr.f32.mxu0 %v4466
    %4533 = vmatmul.mubr.f32.gmra.mrb[0].mxu0 %v4375
    %v4534 = vpop.f32.mrb[0].mxu0
    %v4535 = vadd.f32 %v4462, %v4534
    %v4536 = vpop.f32.mrb[0].mxu0
    %v4537 = vadd.f32 %v4462, %v4536
    %4538 = vdwg.mxu0
    %4539 = vmatprep.subr.mxu0 0.0
    %4540 = vmatpush1.msra.mxu0 %v4379
    %4541 = vmatprep.subr.mxu0 0.0
    %4542 = vmatpush1.msra.mxu0 %v4382
    %4543 = vmatprep.subr.mxu0 0.0
    %4544 = vmatpush1.msra.mxu0 %v4385
    %4545 = vmatprep.subr.mxu0 0.0
    %4546 = vmatpush1.msra.mxu0 %v4388
    %4547 = vmatprep.subr.mxu0 0.0
    %4548 = vmatpush1.msra.mxu0 %v4391
    %4549 = vmatprep.subr.mxu0 0.0
    %4550 = vmatpush1.msra.mxu0 %v4394
    %4551 = vmatprep.subr.mxu0 0.0
    %4552 = vmatpush1.msra.mxu0 %v4397
    %4553 = vmatprep.subr.mxu0 0.0
    %4554 = vmatpush1.msra.mxu0 %v4400
    %4555 = vmatprep.subr.mxu0 0.0
    %4556 = vmatpush1.msra.mxu0 %v4403
    %4557 = vmatprep.subr.mxu0 0.0
    %4558 = vmatpush1.msra.mxu0 %v4406
    %4559 = vmatprep.subr.mxu0 0.0
    %4560 = vmatpush1.msra.mxu0 %v4409
    %4561 = vmatprep.subr.mxu0 0.0
    %4562 = vmatpush1.msra.mxu0 %v4412
    %4563 = vmatprep.subr.mxu0 0.0
    %4564 = vmatpush1.msra.mxu0 %v4415
    %4565 = vmatprep.subr.mxu0 0.0
    %4566 = vmatpush1.msra.mxu0 %v4418
    %4567 = vmatprep.subr.mxu0 0.0
    %4568 = vmatpush1.msra.mxu0 %v4421
    %4569 = vmatprep.subr.mxu0 0.0
    %4570 = vmatpush1.msra.mxu0 %v4424
    %4571 = vmatprep.subr.mxu0 0.0
    %4572 = vmatpush1.msra.mxu0 %v4427
    %4573 = vmatprep.subr.mxu0 0.0
    %4574 = vmatpush1.msra.mxu0 %v4430
    %4575 = vmatprep.subr.mxu0 0.0
    %4576 = vmatpush1.msra.mxu0 %v4433
    %4577 = vmatprep.subr.mxu0 0.0
    %4578 = vmatpush1.msra.mxu0 %v4436
    %4579 = vmatprep.subr.mxu0 0.0
    %4580 = vmatpush1.msra.mxu0 %v4439
    %4581 = vmatprep.subr.mxu0 0.0
    %4582 = vmatpush1.msra.mxu0 %v4442
    %4583 = vmatprep.subr.mxu0 0.0
    %4584 = vmatpush1.msra.mxu0 %v4445
    %4585 = vmatprep.subr.mxu0 0.0
    %4586 = vmatpush1.msra.mxu0 %v4448
    %4587 = vmatprep.subr.mxu0 0.0
    %4588 = vmatpush1.msra.mxu0 %v4451
    %4589 = vmatprep.subr.mxu0 0.0
    %4590 = vmatpush1.msra.mxu0 %v4454
    %4591 = vmatprep.subr.mxu0 0.0
    %4592 = vmatpush1.msra.mxu0 %v4457
    %4593 = vmatprep.subr.mxu0 0.0
    %4594 = vmatpush1.msra.mxu0 0.0
    %4595 = vmatprep.subr.mxu0 0.0
    %4596 = vmatpush1.msra.mxu0 0.0
    %4597 = vmatprep.subr.mxu0 0.0
    %4598 = vmatpush1.msra.mxu0 0.0
    %4599 = vmatprep.subr.mxu0 0.0
    %4600 = vmatpush1.msra.mxu0 0.0
    %4601 = vmatprep.subr.mxu0 0.0
    %4602 = vmatpush1.msra.mxu0 0.0
    %4603 = vmatprep.mubr.f32.mxu0 %v4466
    %4604 = vmatmul.mubr.f32.gmra.mrb[0].mxu0 %v4375
    %v4605 = vpop.f32.mrb[0].mxu0
    %v4606 = vadd.f32 %v4462, %v4605
    %v4607 = vpop.f32.mrb[0].mxu0
    %4608 = vdwg.mxu0
    %v4609 = vmax.f32 %v4535, 0.0
    %v4610 = vmax.f32 %v4537, 0.0
    %v4611 = vmax.f32 %v4606, 0.0
    %4612 = vst [vmem:[#allocation8] sm:$0xff] %v4609
    %4613 = vst [vmem:[#allocation8 + $0x8] sm:$0xff] %v4610
    %4614 = vst.msk [vmem:[#allocation8 + $0x10] sm:$0xff] %vm63, %v4611
    // Predicated region
    $region46: #{tpu_custom_call.1} parent=1 // pred_check
      _
    $region47: #{tpu_custom_call.1} parent=1 // pred_check_branch
      %4616 = sbr.rel (0) target = $region49
    $region48: #{tpu_custom_call.1} parent=1 // pred_region
      %s4618 = ssub.s32 384, 384
      %4619 = vsyncadd [#allocation5], %s4618
      %s4621 = sshll.u32 [#allocation8], 4
      %s4622 = int_to_ptr.vmem [resolvable:$true] %s4621
      %4624 = dma.vmem_to_hbm [thread:$0]  %s4622, 384, %s9, [#allocation5]
    $region49: #{tpu_custom_call.1} parent=1 // pred_fallthru
      _
    // Predicated region
    $region50: #{tpu_custom_call.1} parent=1 // pred_check
      _
    $region51: #{tpu_custom_call.1} parent=1 // pred_check_branch
      %4626 = sbr.rel (0) target = $region53
    $region52: #{tpu_custom_call.1} parent=1 // pred_region
      %4627 = dma.done [#allocation5], 384
    $region53: #{tpu_custom_call.1} parent=1 // pred_fallthru
      _
    %4628 = vsyncpa [#allocation4], 1
    %4629 = vsyncpa [#allocation7], 1
    %4630 = vsyncpa [#allocation5], 1

</llo_original>
